<compile_context>
chip_gen: v7x
topology: tpu7x:2x2x1
jax: 0.10.0
libtpu: 0.0.40
codegen_flags: <defaults>
</compile_context>

<pallas_src>
import functools
import math

import jax
import jax.numpy as jnp
from jax import lax
from jax.experimental import pallas as pl
from jax.experimental.pallas import tpu as pltpu

_MASK_VALUE = -1e30


def _flash_attn_kernel(q_ref, k_ref, v_ref, o_ref,
                       qs_ref, m_ref, l_ref, acc_ref, *,
                       q_scale, t_valid, tk, mask_keys, precision,
                       exp_in_bf16):
    """One (head-block, q-tile, kv-tile) step of flash attention.

    Block shapes:
      q_ref:        (hb, ch, tq)   input dtype
      k_ref/v_ref:  (hb, ch, tk)   input dtype
      o_ref:        (hb, ch, tq)   input dtype
      qs_ref:       (hb, ch, tq)   input dtype scratch (pre-scaled q)
      m_ref/l_ref:  (hb, 1,  tq)   f32 scratch (running max / running sum)
      acc_ref:      (hb, ch, tq)   f32 scratch (output accumulator)
    """
    ki = pl.program_id(2)

    @pl.when(ki == 0)
    def _():
        # The q block is resident across the KV loop; scale it once here
        # instead of re-running the VPU multiply on every KV step.
        qs_ref[...] = (q_ref[...] * q_scale).astype(qs_ref.dtype)
        m_ref[...] = jnp.full(m_ref.shape, -jnp.inf, dtype=jnp.float32)
        l_ref[...] = jnp.zeros(l_ref.shape, dtype=jnp.float32)
        acc_ref[...] = jnp.zeros(acc_ref.shape, dtype=jnp.float32)

    q = qs_ref[...]                               # (hb, ch, tq)
    k = k_ref[...]                                # (hb, ch, tk)
    v = v_ref[...]                                # (hb, ch, tk)

    # Transposed logits: s[b,s,t] = sum_c k[b,c,s] * q[b,c,t] -> (hb, tk, tq).
    # Contracting over channels directly keeps the MXU fed without any XLU
    # transpose; accumulation in f32.
    s = lax.dot_general(k, q, (((1,), (1,)), ((0,), (0,))),
                        preferred_element_type=jnp.float32,
                        precision=precision)

    if mask_keys:
        # Mask padded key positions (time axis was padded to a 128 multiple).
        key_idx = ki * tk + lax.broadcasted_iota(jnp.int32, s.shape, 1)
        s = jnp.where(key_idx < t_valid, s, _MASK_VALUE)

    # Online softmax over the KV axis (axis 1); statistics in f32.
    m_prev = m_ref[...]                                        # (hb, 1, tq)
    m_new = jnp.maximum(m_prev, jnp.max(s, axis=1, keepdims=True))
    alpha = jnp.exp(m_prev - m_new)                            # (hb, 1, tq)

    if exp_in_bf16:
        # v6e/v7x have a bf16 EUP: roughly doubles exp throughput for the
        # small-head-dim regime where the EUP (not the MXU) is the bottleneck.
        p = jnp.exp((s - m_new).astype(jnp.bfloat16))
        p_sum = jnp.sum(p.astype(jnp.float32), axis=1, keepdims=True)
    else:
        p = jnp.exp(s - m_new)                                 # (hb, tk, tq)
        p_sum = jnp.sum(p, axis=1, keepdims=True)

    l_ref[...] = alpha * l_ref[...] + p_sum
    m_ref[...] = m_new

    # acc[b,c,t] += sum_s v[b,c,s] * p[b,s,t]; probabilities go to the MXU in
    # the input dtype (matches PyTorch's .type(weight.dtype) cast).
    pv = lax.dot_general(v, p.astype(v.dtype), (((2,), (1,)), ((0,), (0,))),
                         preferred_element_type=jnp.float32,
                         precision=precision)                  # (hb, ch, tq)
    acc_ref[...] = alpha * acc_ref[...] + pv

    @pl.when(ki == pl.num_programs(2) - 1)
    def _():
        # Exact division for the final normalization: the approximate
        # reciprocal costs ~1e-3 relative error, visible at f32 tolerances.
        o_ref[...] = (acc_ref[...] / l_ref[...]).astype(o_ref.dtype)


def _pick_seq_tile(T, target):
    """Largest multiple of 128 dividing T that is <= target (T 128-aligned)."""
    if T % 128 != 0:
        return T
    t = max(128, (min(target, T) // 128) * 128)
    while T % t != 0:
        t -= 128
    return t


def _pick_head_block(B, n_q_tiles, max_hb):
    hb = min(max_hb, B)
    while hb > 1 and B % hb != 0:
        hb -= 1
    # v7x megacore: keep at least 2 steps on the 'parallel' grid axes when the
    # query-tile axis alone cannot provide them.
    if n_q_tiles < 2:
        while hb > 1 and B // hb < 2:
            hb -= 1
            while hb > 1 and B % hb != 0:
                hb -= 1
    return max(hb, 1)


def _vmem_bytes(hb, ch, tq, tk, itemsize):
    in_blk = (hb * ch * tq + 2 * hb * ch * tk) * itemsize        # q, k, v blocks
    out_blk = hb * ch * tq * itemsize
    dbuf = 2 * (in_blk + out_blk)                                # double-buffered
    scratch = hb * ch * tq * (4 + itemsize) + 2 * hb * tq * 4    # acc, qs, m, l
    interm = 3 * hb * tk * tq * 4                                # s / p / temps
    return dbuf + scratch + interm


def _fit_vmem(B, ch, T_pad, hb, tq, tk, itemsize, budget):
    """Shrink tk -> tq -> hb until the estimated VMEM footprint fits budget."""
    while _vmem_bytes(hb, ch, tq, tk, itemsize) > budget:
        if tk > 128:
            tk = _pick_seq_tile(T_pad, tk - 128)
        elif tq > 128:
            tq = _pick_seq_tile(T_pad, tq - 128)
        elif hb > 1:
            hb -= 1
            while hb > 1 and B % hb != 0:
                hb -= 1
        else:
            break
    return hb, tq, tk


def _q_map(slab):
    return lambda b, qi, ki: (b, slab, qi)


def _kv_map(slab):
    return lambda b, qi, ki: (b, slab, ki)


def qkv_attention_legacy(qkv, n_heads, *, q_tile=256, kv_tile=512,
                         max_head_block=4, exp_in_bf16=False):
    """
    :param qkv: [N, H*3*C, T] array of Qs, Ks, Vs.
    :return:    [N, H*C, T] array after attention.
    """
    bs, width, length = qkv.shape
    assert width % (3 * n_heads) == 0
    ch = width // (3 * n_heads)
    B = bs * n_heads
    dtype = qkv.dtype
    itemsize = jnp.dtype(dtype).itemsize

    # Free (contiguous) reshape; Q/K/V slabs are addressed inside pallas_call
    # via BlockSpec block index 0/1/2 along the 3*ch axis (no HBM slicing).
    qkv_r = qkv.reshape(B, 3 * ch, length)

    # Pad the time axis to a multiple of 128 so every tile is lane-dense;
    # padded keys are masked in-kernel and padded query columns are dropped.
    T_pad = ((length + 127) // 128) * 128
    pad = T_pad - length
    if pad:
        qkv_r = jnp.pad(qkv_r, ((0, 0), (0, 0), (0, pad)))

    tq = _pick_seq_tile(T_pad, q_tile)
    tk = _pick_seq_tile(T_pad, kv_tile)
    hb = _pick_head_block(B, T_pad // tq, max_head_block)
    hb, tq, tk = _fit_vmem(B, ch, T_pad, hb, tq, tk, itemsize,
                           budget=32 * 1024 * 1024)
    vmem_limit = int(min(48 * 1024 * 1024,
                         max(32 * 1024 * 1024,
                             2 * _vmem_bytes(hb, ch, tq, tk, itemsize))))

    # Sublane alignment needed to carve a ch-sized block out of the 3*ch axis.
    sublane = {4: 8, 2: 16, 1: 32}.get(itemsize, 8)
    if ch % sublane == 0:
        q_in = k_in = v_in = qkv_r
        q_blk, k_blk, v_blk = 0, 1, 2
    else:
        # TODO(synk): unaligned-ch fallback materializes q/k/v HBM copies; the
        # aligned (common) path stays copy-free.
        q_in = qkv_r[:, 0 * ch:1 * ch, :]
        k_in = qkv_r[:, 1 * ch:2 * ch, :]
        v_in = qkv_r[:, 2 * ch:3 * ch, :]
        q_blk = k_blk = v_blk = 0

    q_spec = pl.BlockSpec((hb, ch, tq), _q_map(q_blk))
    # TODO(synk): on v5e consider pipeline_mode=pl.Buffered(3) for k/v specs.
    k_spec = pl.BlockSpec((hb, ch, tk), _kv_map(k_blk))
    v_spec = pl.BlockSpec((hb, ch, tk), _kv_map(v_blk))
    o_spec = pl.BlockSpec((hb, ch, tq), lambda b, qi, ki: (b, 0, qi))

    precision = (lax.Precision.HIGHEST if dtype == jnp.float32
                 else lax.Precision.DEFAULT)

    kernel = functools.partial(
        _flash_attn_kernel,
        q_scale=1.0 / math.sqrt(ch),   # equivalent to scaling q and k by ch**-0.25
        t_valid=length, tk=tk, mask_keys=bool(pad),
        precision=precision, exp_in_bf16=bool(exp_in_bf16))

    cost = pl.CostEstimate(
        flops=int(4 * B * length * length * ch),
        transcendentals=int(B * length * length),
        bytes_accessed=int((qkv.size + B * ch * length) * itemsize))

    out = pl.pallas_call(
        kernel,
        out_shape=jax.ShapeDtypeStruct((B, ch, T_pad), dtype),
        grid=(B // hb, T_pad // tq, T_pad // tk),
        in_specs=[q_spec, k_spec, v_spec],
        out_specs=o_spec,
        scratch_shapes=[
            pltpu.VMEM((hb, ch, tq), dtype),         # pre-scaled q
            pltpu.VMEM((hb, 1, tq), jnp.float32),    # running max  m
            pltpu.VMEM((hb, 1, tq), jnp.float32),    # running sum  l
            pltpu.VMEM((hb, ch, tq), jnp.float32),   # output accumulator
        ],
        compiler_params=pltpu.CompilerParams(
            # KV (reduction) axis last and 'arbitrary'; head / query-tile axes
            # 'parallel' so the v7x megacore can shard them.
            dimension_semantics=("parallel", "parallel", "arbitrary"),
            vmem_limit_bytes=vmem_limit),
        cost_estimate=cost,
    )(q_in, k_in, v_in)

    if pad:
        out = out[:, :, :length]
    return out.reshape(bs, n_heads * ch, length)


def _reference(qkv, n_heads):
    bs, width, length = qkv.shape
    ch = width // (3 * n_heads)
    qkv_r = qkv.reshape(bs * n_heads, 3 * ch, length)
    q, k, v = qkv_r[:, :ch], qkv_r[:, ch:2 * ch], qkv_r[:, 2 * ch:]
    scale = 1.0 / math.sqrt(math.sqrt(ch))
    w = jnp.einsum('bct,bcs->bts',
                   (q * scale).astype(jnp.float32),
                   (k * scale).astype(jnp.float32),
                   precision=lax.Precision.HIGHEST)
    w = jax.nn.softmax(w, axis=-1).astype(qkv.dtype)
    a = jnp.einsum('bts,bcs->bct',
                   w.astype(jnp.float32), v.astype(jnp.float32),
                   precision=lax.Precision.HIGHEST).astype(qkv.dtype)
    return a.reshape(bs, -1, length)


if __name__ == "__main__":
    # Small config matching the module: bs=2, n_heads=2, ch=8, T=16.
    # T=16 also exercises the pad-to-128 + key-masking path.
    n_heads = 2
    bs, ch, T = 2, 8, 16
    width = n_heads * 3 * ch  # 48

    key = jax.random.PRNGKey(0)
    qkv = jax.random.normal(key, (bs, width, T), dtype=jnp.float32)

    out = jax.block_until_ready(qkv_attention_legacy(qkv, n_heads))
    ref = _reference(qkv, n_heads)
    assert out.shape == (bs, n_heads * ch, T)
    err = float(jnp.max(jnp.abs(out - ref)))
    assert jnp.allclose(out, ref, rtol=2e-3, atol=2e-3), err

    # Second (still small) shape exercising multiple query tiles and multiple
    # KV steps of the online-softmax accumulation path.
    n_heads2, bs2, ch2, T2 = 2, 1, 16, 512
    qkv2 = jax.random.normal(jax.random.PRNGKey(1),
                             (bs2, n_heads2 * 3 * ch2, T2), dtype=jnp.float32)
    out2 = jax.block_until_ready(
        qkv_attention_legacy(qkv2, n_heads2, q_tile=128, kv_tile=256))
    ref2 = _reference(qkv2, n_heads2)
    assert out2.shape == (bs2, n_heads2 * ch2, T2)
    err2 = float(jnp.max(jnp.abs(out2 - ref2)))
    assert jnp.allclose(out2, ref2, rtol=2e-3, atol=2e-3), err2

    print("KERNEL_OK")
</pallas_src>

<mosaic_0001>
module attributes {stable_mosaic.version = 11 : i64} {
  func.func @_flash_attn_kernel(%arg0: i32, %arg1: i32, %arg2: i32, %arg3: memref<2x8x128xf32, #tpu.memory_space<vmem>>, %arg4: memref<2x8x128xf32, #tpu.memory_space<vmem>>, %arg5: memref<2x8x128xf32, #tpu.memory_space<vmem>>, %arg6: memref<2x8x128xf32, #tpu.memory_space<vmem>>, %arg7: memref<2x8x128xf32, #tpu.memory_space<vmem>>, %arg8: memref<2x1x128xf32, #tpu.memory_space<vmem>>, %arg9: memref<2x1x128xf32, #tpu.memory_space<vmem>>, %arg10: memref<2x8x128xf32, #tpu.memory_space<vmem>>) attributes {dimension_semantics = [#tpu.dimension_semantics<parallel>, #tpu.dimension_semantics<parallel>, #tpu.dimension_semantics<arbitrary>], iteration_bounds = array<i64: 2, 1, 1>, scalar_prefetch = 0 : i64, scratch_operands = 4 : i64, tpu.core_type = #tpu.core_type<tc>, window_params = [{transform_indices = @transform_0, window_bounds = array<i64: 2, 8, 128>}, {transform_indices = @transform_1, window_bounds = array<i64: 2, 8, 128>}, {transform_indices = @transform_2, window_bounds = array<i64: 2, 8, 128>}, {transform_indices = @transform_3, window_bounds = array<i64: 2, 8, 128>}]} {
    %c0_i32 = arith.constant 0 : i32
    %0 = arith.cmpi eq, %arg2, %c0_i32 : i32
    %1 = arith.extui %0 : i1 to i32
    %c0_i32_0 = arith.constant 0 : i32
    %2 = arith.cmpi ne, %1, %c0_i32_0 : i32
    scf.if %2 {
      %c0_33 = arith.constant 0 : index
      %c0_34 = arith.constant 0 : index
      %c0_35 = arith.constant 0 : index
      %40 = vector.load %arg3[%c0_33, %c0_34, %c0_35] : memref<2x8x128xf32, #tpu.memory_space<vmem>>, vector<2x8x128xf32>
      %cst_36 = arith.constant 0.353553385 : f32
      %41 = vector.broadcast %cst_36 : f32 to vector<2x8x128xf32>
      %42 = arith.mulf %40, %41 : vector<2x8x128xf32>
      %c0_37 = arith.constant 0 : index
      %c0_38 = arith.constant 0 : index
      %c0_39 = arith.constant 0 : index
      %43 = vector.load %arg7[%c0_37, %c0_38, %c0_39] : memref<2x8x128xf32, #tpu.memory_space<vmem>>, vector<2x8x128xf32>
      tpu.vector_store %arg7[%c0_37, %c0_38, %c0_39], %42 {strides = array<i32>} : memref<2x8x128xf32, #tpu.memory_space<vmem>>, vector<2x8x128xf32>,
      %cst_40 = arith.constant 0xFF800000 : f32
      %44 = vector.broadcast %cst_40 : f32 to vector<2x1x128xf32>
      %c0_41 = arith.constant 0 : index
      %c0_42 = arith.constant 0 : index
      %c0_43 = arith.constant 0 : index
      %45 = vector.load %arg8[%c0_41, %c0_42, %c0_43] : memref<2x1x128xf32, #tpu.memory_space<vmem>>, vector<2x1x128xf32>
      tpu.vector_store %arg8[%c0_41, %c0_42, %c0_43], %44 {strides = array<i32>} : memref<2x1x128xf32, #tpu.memory_space<vmem>>, vector<2x1x128xf32>,
      %cst_44 = arith.constant 0.000000e+00 : f32
      %46 = vector.broadcast %cst_44 : f32 to vector<2x1x128xf32>
      %c0_45 = arith.constant 0 : index
      %c0_46 = arith.constant 0 : index
      %c0_47 = arith.constant 0 : index
      %47 = vector.load %arg9[%c0_45, %c0_46, %c0_47] : memref<2x1x128xf32, #tpu.memory_space<vmem>>, vector<2x1x128xf32>
      tpu.vector_store %arg9[%c0_45, %c0_46, %c0_47], %46 {strides = array<i32>} : memref<2x1x128xf32, #tpu.memory_space<vmem>>, vector<2x1x128xf32>,
      %cst_48 = arith.constant 0.000000e+00 : f32
      %48 = vector.broadcast %cst_48 : f32 to vector<2x8x128xf32>
      %c0_49 = arith.constant 0 : index
      %c0_50 = arith.constant 0 : index
      %c0_51 = arith.constant 0 : index
      %49 = vector.load %arg10[%c0_49, %c0_50, %c0_51] : memref<2x8x128xf32, #tpu.memory_space<vmem>>, vector<2x8x128xf32>
      tpu.vector_store %arg10[%c0_49, %c0_50, %c0_51], %48 {strides = array<i32>} : memref<2x8x128xf32, #tpu.memory_space<vmem>>, vector<2x8x128xf32>,
    } else {
    }
    %c0 = arith.constant 0 : index
    %c0_1 = arith.constant 0 : index
    %c0_2 = arith.constant 0 : index
    %3 = vector.load %arg7[%c0, %c0_1, %c0_2] : memref<2x8x128xf32, #tpu.memory_space<vmem>>, vector<2x8x128xf32>
    %c0_3 = arith.constant 0 : index
    %c0_4 = arith.constant 0 : index
    %c0_5 = arith.constant 0 : index
    %4 = vector.load %arg4[%c0_3, %c0_4, %c0_5] : memref<2x8x128xf32, #tpu.memory_space<vmem>>, vector<2x8x128xf32>
    %c0_6 = arith.constant 0 : index
    %c0_7 = arith.constant 0 : index
    %c0_8 = arith.constant 0 : index
    %5 = vector.load %arg5[%c0_6, %c0_7, %c0_8] : memref<2x8x128xf32, #tpu.memory_space<vmem>>, vector<2x8x128xf32>
    %cst = arith.constant dense<0.000000e+00> : vector<2x128x128xf32>
    %6 = tpu.matmul %4, %3, %cst {dimension_numbers = #tpu.dot_dimension_numbers<[1], [1], [2], [2], [0, 0, 0, 2, 1, 2], [0], [0]>, precision = #tpu.contract_precision<fp32>} : vector<2x8x128xf32>, vector<2x8x128xf32>, vector<2x128x128xf32> -> vector<2x128x128xf32>
    %c128_i32 = arith.constant 128 : i32
    %7 = arith.muli %arg2, %c128_i32 : i32
    %8 = tpu.iota {dimensions = array<i32: 1>} : vector<2x128x128xi32>
    %9 = vector.broadcast %7 : i32 to vector<2x128x128xi32>
    %10 = arith.addi %9, %8 : vector<2x128x128xi32>
    %c16_i32 = arith.constant 16 : i32
    %11 = vector.broadcast %c16_i32 : i32 to vector<2x128x128xi32>
    %12 = arith.cmpi slt, %10, %11 : vector<2x128x128xi32>
    %cst_9 = arith.constant -1.000000e+30 : f32
    %13 = vector.broadcast %cst_9 : f32 to vector<2x128x128xf32>
    %14 = arith.select %12, %6, %13 : vector<2x128x128xi1>, vector<2x128x128xf32>
    %c0_10 = arith.constant 0 : index
    %c0_11 = arith.constant 0 : index
    %c0_12 = arith.constant 0 : index
    %15 = vector.load %arg8[%c0_10, %c0_11, %c0_12] : memref<2x1x128xf32, #tpu.memory_space<vmem>>, vector<2x1x128xf32>
    %cst_13 = arith.constant dense<0xFF800000> : vector<2x128xf32>
    %16 = vector.multi_reduction <maximumf>, %14, %cst_13 [1] : vector<2x128x128xf32> to vector<2x128xf32>
    %17 = vector.shape_cast %16 : vector<2x128xf32> to vector<2x1x128xf32>
    %18 = arith.maximumf %15, %17 : vector<2x1x128xf32>
    %19 = arith.subf %15, %18 : vector<2x1x128xf32>
    %20 = math.exp %19 : vector<2x1x128xf32>
    %21 = vector.broadcast %18 : vector<2x1x128xf32> to vector<2x128x128xf32>
    %22 = arith.subf %14, %21 : vector<2x128x128xf32>
    %23 = math.exp %22 : vector<2x128x128xf32>
    %cst_14 = arith.constant dense<0.000000e+00> : vector<2x128xf32>
    %24 = vector.multi_reduction <add>, %23, %cst_14 [1] : vector<2x128x128xf32> to vector<2x128xf32>
    %25 = vector.shape_cast %24 : vector<2x128xf32> to vector<2x1x128xf32>
    %c0_15 = arith.constant 0 : index
    %c0_16 = arith.constant 0 : index
    %c0_17 = arith.constant 0 : index
    %26 = vector.load %arg9[%c0_15, %c0_16, %c0_17] : memref<2x1x128xf32, #tpu.memory_space<vmem>>, vector<2x1x128xf32>
    %27 = arith.mulf %20, %26 : vector<2x1x128xf32>
    %28 = arith.addf %27, %25 : vector<2x1x128xf32>
    %c0_18 = arith.constant 0 : index
    %c0_19 = arith.constant 0 : index
    %c0_20 = arith.constant 0 : index
    %29 = vector.load %arg9[%c0_18, %c0_19, %c0_20] : memref<2x1x128xf32, #tpu.memory_space<vmem>>, vector<2x1x128xf32>
    tpu.vector_store %arg9[%c0_18, %c0_19, %c0_20], %28 {strides = array<i32>} : memref<2x1x128xf32, #tpu.memory_space<vmem>>, vector<2x1x128xf32>,
    %c0_21 = arith.constant 0 : index
    %c0_22 = arith.constant 0 : index
    %c0_23 = arith.constant 0 : index
    %30 = vector.load %arg8[%c0_21, %c0_22, %c0_23] : memref<2x1x128xf32, #tpu.memory_space<vmem>>, vector<2x1x128xf32>
    tpu.vector_store %arg8[%c0_21, %c0_22, %c0_23], %18 {strides = array<i32>} : memref<2x1x128xf32, #tpu.memory_space<vmem>>, vector<2x1x128xf32>,
    %cst_24 = arith.constant dense<0.000000e+00> : vector<2x8x128xf32>
    %31 = tpu.matmul %5, %23, %cst_24 {dimension_numbers = #tpu.dot_dimension_numbers<[2], [1], [1], [2], [0, 0, 0, 1, 1, 2], [0], [0]>, precision = #tpu.contract_precision<fp32>} : vector<2x8x128xf32>, vector<2x128x128xf32>, vector<2x8x128xf32> -> vector<2x8x128xf32>
    %c0_25 = arith.constant 0 : index
    %c0_26 = arith.constant 0 : index
    %c0_27 = arith.constant 0 : index
    %32 = vector.load %arg10[%c0_25, %c0_26, %c0_27] : memref<2x8x128xf32, #tpu.memory_space<vmem>>, vector<2x8x128xf32>
    %33 = vector.broadcast %20 : vector<2x1x128xf32> to vector<2x8x128xf32>
    %34 = arith.mulf %33, %32 : vector<2x8x128xf32>
    %35 = arith.addf %34, %31 : vector<2x8x128xf32>
    %c0_28 = arith.constant 0 : index
    %c0_29 = arith.constant 0 : index
    %c0_30 = arith.constant 0 : index
    %36 = vector.load %arg10[%c0_28, %c0_29, %c0_30] : memref<2x8x128xf32, #tpu.memory_space<vmem>>, vector<2x8x128xf32>
    tpu.vector_store %arg10[%c0_28, %c0_29, %c0_30], %35 {strides = array<i32>} : memref<2x8x128xf32, #tpu.memory_space<vmem>>, vector<2x8x128xf32>,
    %c0_i32_31 = arith.constant 0 : i32
    %37 = arith.cmpi eq, %arg2, %c0_i32_31 : i32
    %38 = arith.extui %37 : i1 to i32
    %c0_i32_32 = arith.constant 0 : i32
    %39 = arith.cmpi ne, %38, %c0_i32_32 : i32
    scf.if %39 {
      %c0_33 = arith.constant 0 : index
      %c0_34 = arith.constant 0 : index
      %c0_35 = arith.constant 0 : index
      %40 = vector.load %arg10[%c0_33, %c0_34, %c0_35] : memref<2x8x128xf32, #tpu.memory_space<vmem>>, vector<2x8x128xf32>
      %c0_36 = arith.constant 0 : index
      %c0_37 = arith.constant 0 : index
      %c0_38 = arith.constant 0 : index
      %41 = vector.load %arg9[%c0_36, %c0_37, %c0_38] : memref<2x1x128xf32, #tpu.memory_space<vmem>>, vector<2x1x128xf32>
      %42 = vector.broadcast %41 : vector<2x1x128xf32> to vector<2x8x128xf32>
      %43 = arith.divf %40, %42 : vector<2x8x128xf32>
      %c0_39 = arith.constant 0 : index
      %c0_40 = arith.constant 0 : index
      %c0_41 = arith.constant 0 : index
      %44 = vector.load %arg6[%c0_39, %c0_40, %c0_41] : memref<2x8x128xf32, #tpu.memory_space<vmem>>, vector<2x8x128xf32>
      tpu.vector_store %arg6[%c0_39, %c0_40, %c0_41], %43 {strides = array<i32>} : memref<2x8x128xf32, #tpu.memory_space<vmem>>, vector<2x8x128xf32>,
    } else {
    }
    return
  }
  func.func @transform_0(%arg0: i32, %arg1: i32, %arg2: i32) -> (i32, i32, i32) {
    %c0_i32 = arith.constant 0 : i32
    %c0_i32_0 = arith.constant 0 : i32
    return %arg0, %c0_i32, %arg1 : i32, i32, i32
  }
  func.func @transform_1(%arg0: i32, %arg1: i32, %arg2: i32) -> (i32, i32, i32) {
    %c1_i32 = arith.constant 1 : i32
    %c0_i32 = arith.constant 0 : i32
    return %arg0, %c1_i32, %arg2 : i32, i32, i32
  }
  func.func @transform_2(%arg0: i32, %arg1: i32, %arg2: i32) -> (i32, i32, i32) {
    %c2_i32 = arith.constant 2 : i32
    %c0_i32 = arith.constant 0 : i32
    return %arg0, %c2_i32, %arg2 : i32, i32, i32
  }
  func.func @transform_3(%arg0: i32, %arg1: i32, %arg2: i32) -> (i32, i32, i32) {
    %c0_i32 = arith.constant 0 : i32
    %c0_i32_0 = arith.constant 0 : i32
    return %arg0, %c0_i32, %arg1 : i32, i32, i32
  }
}

</mosaic_0001>

<llo_original>
// kernel: tpu_custom_call.1
$region0: #{tpu_custom_call.1}
  #allocation0 [shape = 'u32[]', space=smem, size = 0x4, offset = 0x4, fixed_abs, tag = 'smem constant byte address 0x4 - core index']
  #allocation1 [shape = 'u32[144,128]{1,0:T(1,128)}', space=vmem, size = 0x12000, scoped, tag = 'internal scratch']
  #allocation2 [shape = 'f32[2,8,128]{2,1,0:T(8,128)}', space=vmem, size = 0x2000, scoped, tag = 'scratch operand']
  #allocation3 [shape = 'f32[2,1,128]{2,1,0:T(1,128)}', space=vmem, size = 0x400, scoped, tag = 'scratch operand']
  #allocation4 [shape = 'f32[2,1,128]{2,1,0:T(1,128)}', space=vmem, size = 0x400, scoped, tag = 'scratch operand']
  #allocation5 [shape = 'f32[2,8,128]{2,1,0:T(8,128)}', space=vmem, size = 0x2000, scoped, tag = 'scratch operand']
  %s0 = inlined_call_operand.hbm [shape: f32[4,24,128], index: 0, kind: input, shape index: {}]
  %s1 = inlined_call_operand.hbm [shape: f32[4,24,128], index: 1, kind: input, shape index: {}]
  %s2 = inlined_call_operand.hbm [shape: f32[4,24,128], index: 2, kind: input, shape index: {}]
  %s3 = inlined_call_operand.hbm [shape: f32[4,8,128], index: 3, kind: output, shape index: {}]
  %s4 = sld [smem:[#allocation0]]
  $region65: #{tpu_custom_call.1} parent=0
    _
  %s6 = ssub.s32 1, %s4
  %s7 = scalar_select 0, %s6, %s4
  $region1: #{tpu_custom_call.1} parent=0
    #allocation6 [shape = 'u8[16384]{0}', space=vmem, size = 0x4000, scoped, tag = 'input window, operand 0']
    #allocation7 [shape = 's32[2]{0}', space=sflag, size = 0x8, scoped, tag = 'scoped memory for tpu_custom_call.1']
    #allocation8 [shape = 's32[2]{0}', space=sflag, size = 0x8, scoped, tag = 'scoped memory for tpu_custom_call.1']
    #allocation9 [shape = 'u8[16384]{0}', space=vmem, size = 0x4000, scoped, tag = 'input window, operand 1']
    #allocation10 [shape = 's32[2]{0}', space=sflag, size = 0x8, scoped, tag = 'scoped memory for tpu_custom_call.1']
    #allocation11 [shape = 'u8[16384]{0}', space=vmem, size = 0x4000, scoped, tag = 'input window, operand 2']
    #allocation12 [shape = 'u8[16384]{0}', space=vmem, size = 0x4000, scoped, tag = 'output window, operand 0']
    %8 = vsyncpa [#allocation7], 0
    %s9 = scalar_lea.sflag [#allocation7], 1
    %10 = vsyncpa %s9, 0
    %11 = vsyncpa [#allocation10], 0
    %s12 = scalar_lea.sflag [#allocation10], 1
    %13 = vsyncpa %s12, 0
    %14 = vsyncpa [#allocation8], 0
    %s15 = scalar_lea.sflag [#allocation8], 1
    %16 = vsyncpa %s15, 0
    loop: start=0, step=1, limit=4
    $region2: #{tpu_custom_call.1} parent=1 // loop_pre_header
      _
    $region3: #{tpu_custom_call.1} parent=1 // loop_header
      %s18 = sphi 0, %s22
      %p19 = scmp.ge.s32.totalorder %s18, 4
      %s25 = sphi 0, %s44
      %s26 = sphi 0, %s40
      %s27 = sphi 0, %s36
      %s28 = sphi 0, %s25
      %s29 = sphi 0, %s26
      %s30 = sphi 0, %s27
      %s31 = sphi 0, %s28
      %s32 = sphi 0, %s29
      %s33 = sphi 0, %s30
      %s49 = sphi 0, %s51
      %s52 = sphi 0, %s49
      %s53 = sphi 0, %s52
      %s69 = sphi 0, %s53
      %s77 = sphi 0, %s79
      %s80 = sphi 0, %s77
      %s81 = sphi 0, %s80
      %s97 = sphi 0, %s81
      %s105 = sphi 0, %s107
      %s108 = sphi 0, %s105
      %s109 = sphi 0, %s108
      %s125 = sphi 0, %s109
      %s133 = sphi 0, %s135
      %s136 = sphi 0, %s133
      %s137 = sphi 0, %s136
      %s153 = sphi 0, %s137
    $region4: #{tpu_custom_call.1} parent=1 // loop_header_branch
      %21 = sbr.rel (%p19) target = $region8
    $region5: #{tpu_custom_call.1} parent=1 // loop_body
      %s23 = ssub.s32 %s18, 1
      %s24 = ssub.s32 %s18, 2
      %s34 = sadd.s32 1, %s27
      %p35 = scmp.ge.s32.totalorder %s34, 1
      %s36 = scalar_select %p35, 0, %s34
      %s37 = sadd.s32 1, %s26
      %s38 = scalar_select %p35, %s37, %s26
      %p39 = scmp.ge.s32.totalorder %s38, 1
      %s40 = scalar_select %p39, 0, %s38
      %s41 = sadd.s32 1, %s25
      %s42 = scalar_select %p39, %s41, %s25
      %p43 = scmp.ge.s32.totalorder %s42, 2
      %s44 = scalar_select %p43, 0, %s42
      %s45 = ssub.s32 %s25, %s44
      %s46 = ssub.s32 %s26, %s40
      %s47 = sor.u32 %s45, %s46
      %p48 = scmp.eq.s32.totalorder %s47, 0
      %s50 = sadd.s32 %s49, 1
      %s51 = scalar_select %p48, %s49, %s50
      %p54 = pneg %p48
      %p55 = scmp.eq.s32.totalorder %s18, 1
      %p56 = por %p54, %p55
      %p57 = scmp.ne.s32.totalorder %s49, %s52
      %p58 = scmp.eq.s32.totalorder %s18, 0
      %p59 = por %p57, %p58
      %p60 = scmp.ne.s32.totalorder %s49, %s52
      %p61 = scmp.eq.s32.totalorder %s23, 1
      %p62 = por %p60, %p61
      %p63 = scmp.ne.s32.totalorder %s52, %s53
      %p64 = scmp.eq.s32.totalorder %s23, 0
      %p65 = por %p63, %p64
      %p66 = scmp.ne.s32.totalorder %s52, %s53
      %p67 = scmp.eq.s32.totalorder %s24, 1
      %p68 = por %p66, %p67
      %p70 = scmp.ne.s32.totalorder %s53, %s69
      %p71 = scmp.eq.s32.totalorder %s24, 0
      %p72 = por %p70, %p71
      %s73 = ssub.s32 %s25, %s44
      %s74 = ssub.s32 %s27, %s36
      %s75 = sor.u32 %s73, %s74
      %p76 = scmp.eq.s32.totalorder %s75, 0
      %s78 = sadd.s32 %s77, 1
      %s79 = scalar_select %p76, %s77, %s78
      %p82 = pneg %p76
      %p83 = scmp.eq.s32.totalorder %s18, 1
      %p84 = por %p82, %p83
      %p85 = scmp.ne.s32.totalorder %s77, %s80
      %p86 = scmp.eq.s32.totalorder %s18, 0
      %p87 = por %p85, %p86
      %p88 = scmp.ne.s32.totalorder %s77, %s80
      %p89 = scmp.eq.s32.totalorder %s23, 1
      %p90 = por %p88, %p89
      %p91 = scmp.ne.s32.totalorder %s80, %s81
      %p92 = scmp.eq.s32.totalorder %s23, 0
      %p93 = por %p91, %p92
      %p94 = scmp.ne.s32.totalorder %s80, %s81
      %p95 = scmp.eq.s32.totalorder %s24, 1
      %p96 = por %p94, %p95
      %p98 = scmp.ne.s32.totalorder %s81, %s97
      %p99 = scmp.eq.s32.totalorder %s24, 0
      %p100 = por %p98, %p99
      %s101 = ssub.s32 %s25, %s44
      %s102 = ssub.s32 %s27, %s36
      %s103 = sor.u32 %s101, %s102
      %p104 = scmp.eq.s32.totalorder %s103, 0
      %s106 = sadd.s32 %s105, 1
      %s107 = scalar_select %p104, %s105, %s106
      %p110 = pneg %p104
      %p111 = scmp.eq.s32.totalorder %s18, 1
      %p112 = por %p110, %p111
      %p113 = scmp.ne.s32.totalorder %s105, %s108
      %p114 = scmp.eq.s32.totalorder %s18, 0
      %p115 = por %p113, %p114
      %p116 = scmp.ne.s32.totalorder %s105, %s108
      %p117 = scmp.eq.s32.totalorder %s23, 1
      %p118 = por %p116, %p117
      %p119 = scmp.ne.s32.totalorder %s108, %s109
      %p120 = scmp.eq.s32.totalorder %s23, 0
      %p121 = por %p119, %p120
      %p122 = scmp.ne.s32.totalorder %s108, %s109
      %p123 = scmp.eq.s32.totalorder %s24, 1
      %p124 = por %p122, %p123
      %p126 = scmp.ne.s32.totalorder %s109, %s125
      %p127 = scmp.eq.s32.totalorder %s24, 0
      %p128 = por %p126, %p127
      %s129 = ssub.s32 %s25, %s44
      %s130 = ssub.s32 %s26, %s40
      %s131 = sor.u32 %s129, %s130
      %p132 = scmp.eq.s32.totalorder %s131, 0
      %s134 = sadd.s32 %s133, 1
      %s135 = scalar_select %p132, %s133, %s134
      %p138 = pneg %p132
      %p139 = scmp.eq.s32.totalorder %s18, 1
      %p140 = por %p138, %p139
      %p141 = scmp.ne.s32.totalorder %s133, %s136
      %p142 = scmp.eq.s32.totalorder %s18, 0
      %p143 = por %p141, %p142
      %p144 = scmp.ne.s32.totalorder %s133, %s136
      %p145 = scmp.eq.s32.totalorder %s23, 1
      %p146 = por %p144, %p145
      %p147 = scmp.ne.s32.totalorder %s136, %s137
      %p148 = scmp.eq.s32.totalorder %s23, 0
      %p149 = por %p147, %p148
      %p150 = scmp.ne.s32.totalorder %s136, %s137
      %p151 = scmp.eq.s32.totalorder %s24, 1
      %p152 = por %p150, %p151
      %p154 = scmp.ne.s32.totalorder %s137, %s153
      %p155 = scmp.eq.s32.totalorder %s24, 0
      %p156 = por %p154, %p155
      %p157 = scmp.le.s32.totalorder 1, %s18
      %p158 = scmp.lt.s32.totalorder %s18, 3
      %p159 = pnand %p157, %p158
      %p160 = pneg %p159
      // Predicated region
      $region9: #{tpu_custom_call.1} parent=5 // pred_check
        _
      $region10: #{tpu_custom_call.1} parent=5 // pred_check_branch
        %162 = sbr.rel (%p159) target = $region12
      $region11: #{tpu_custom_call.1} parent=5 // pred_region
        %s163 = ssub.s32 %s18, 1
      $region12: #{tpu_custom_call.1} parent=5 // pred_fallthru
        _
      %p164 = scmp.lt.s32.totalorder %s18, 2
      // Predicated region
      $region13: #{tpu_custom_call.1} parent=5 // pred_check
        %p165 = pneg %p164
      $region14: #{tpu_custom_call.1} parent=5 // pred_check_branch
        %167 = sbr.rel (%p165) target = $region16
      $region15: #{tpu_custom_call.1} parent=5 // pred_region
        // Predicated region
        $region17: #{tpu_custom_call.1} parent=15 // pred_check
          %p168 = pneg %p59
        $region18: #{tpu_custom_call.1} parent=15 // pred_check_branch
          %170 = sbr.rel (%p168) target = $region20
        $region19: #{tpu_custom_call.1} parent=15 // pred_region
          %s171 = sand.u32 %s49, 1
          %s172 = scalar_lea.sflag [#allocation7], %s171
          %s173 = sand.u32 %s49, 1
          %s174 = smul.addr %s173, 16
          %s175 = scalar_lea.vmem [#allocation6], %s174
          %s176 = smul.u32 2, %s25
          %s178 = ssub.s32 256, 256
          %179 = vsyncadd %s172, %s178
          %s180 = smul.addr %s176, 3
          %s181 = sadd.s32 %s26, %s180
          %s182 = smul.addr %s181, 128
          %s183 = scalar_lea.hbm %s0, %s182
          %s184 = sshll.u32 %s175, 4
          %s185 = int_to_ptr.vmem [resolvable:$true] %s184
          %190 = dma.hbm_to_vmem [thread:$0]  %s183, 256, %s185, %s172, 384, 128, 8
        $region20: #{tpu_custom_call.1} parent=15 // pred_fallthru
          _
        // Predicated region
        $region21: #{tpu_custom_call.1} parent=15 // pred_check
          %p191 = pneg %p87
        $region22: #{tpu_custom_call.1} parent=15 // pred_check_branch
          %193 = sbr.rel (%p191) target = $region24
        $region23: #{tpu_custom_call.1} parent=15 // pred_region
          %s194 = sand.u32 %s18, 1
          %s195 = scalar_lea.sflag [#allocation10], %s194
          %s196 = sand.u32 %s77, 1
          %s197 = smul.addr %s196, 16
          %s198 = scalar_lea.vmem [#allocation9], %s197
          %s199 = smul.u32 2, %s25
          %s201 = ssub.s32 256, 256
          %202 = vsyncadd %s195, %s201
          %s203 = sadd.s32 %s27, 1
          %s204 = smul.addr %s199, 3
          %s205 = sadd.s32 %s203, %s204
          %s206 = smul.addr %s205, 128
          %s207 = scalar_lea.hbm %s1, %s206
          %s208 = sshll.u32 %s198, 4
          %s209 = int_to_ptr.vmem [resolvable:$true] %s208
          %214 = dma.hbm_to_vmem [thread:$0]  %s207, 256, %s209, %s195, 384, 128, 8
        $region24: #{tpu_custom_call.1} parent=15 // pred_fallthru
          _
        // Predicated region
        $region25: #{tpu_custom_call.1} parent=15 // pred_check
          %p215 = pneg %p115
        $region26: #{tpu_custom_call.1} parent=15 // pred_check_branch
          %217 = sbr.rel (%p215) target = $region28
        $region27: #{tpu_custom_call.1} parent=15 // pred_region
          %s218 = sand.u32 %s18, 1
          %s219 = scalar_lea.sflag [#allocation10], %s218
          %s220 = sand.u32 %s105, 1
          %s221 = smul.addr %s220, 16
          %s222 = scalar_lea.vmem [#allocation11], %s221
          %s223 = smul.u32 2, %s25
          %s225 = ssub.s32 256, 256
          %226 = vsyncadd %s219, %s225
          %s227 = sadd.s32 %s27, 2
          %s228 = smul.addr %s223, 3
          %s229 = sadd.s32 %s227, %s228
          %s230 = smul.addr %s229, 128
          %s231 = scalar_lea.hbm %s2, %s230
          %s232 = sshll.u32 %s222, 4
          %s233 = int_to_ptr.vmem [resolvable:$true] %s232
          %238 = dma.hbm_to_vmem [thread:$0]  %s231, 256, %s233, %s219, 384, 128, 8
        $region28: #{tpu_custom_call.1} parent=15 // pred_fallthru
          _
      $region16: #{tpu_custom_call.1} parent=5 // pred_fallthru
        _
      %p239 = scmp.le.s32.totalorder 1, %s18
      %p240 = scmp.lt.s32.totalorder %s18, 3
      %p241 = pnand %p239, %p240
      %p242 = pneg %p241
      // Predicated region
      $region29: #{tpu_custom_call.1} parent=5 // pred_check
        _
      $region30: #{tpu_custom_call.1} parent=5 // pred_check_branch
        %244 = sbr.rel (%p241) target = $region32
      $region31: #{tpu_custom_call.1} parent=5 // pred_region
        %s245 = ssub.s32 %s18, 1
        %s246 = sand.u32 %s52, 1
        %s247 = scalar_lea.sflag [#allocation7], %s246
        %s248 = sand.u32 %s52, 1
        %s249 = smul.addr %s248, 16
        %s250 = scalar_lea.vmem [#allocation6], %s249
        // Predicated region
        $region33: #{tpu_custom_call.1} parent=31 // pred_check
          %p251 = pneg %p65
        $region34: #{tpu_custom_call.1} parent=31 // pred_check_branch
          %253 = sbr.rel (%p251) target = $region36
        $region35: #{tpu_custom_call.1} parent=31 // pred_region
          %254 = dma.done %s247, 256
        $region36: #{tpu_custom_call.1} parent=31 // pred_fallthru
          _
        %s255 = sand.u32 %s23, 1
        %s256 = scalar_lea.sflag [#allocation10], %s255
        %s257 = sand.u32 %s80, 1
        %s258 = smul.addr %s257, 16
        %s259 = scalar_lea.vmem [#allocation9], %s258
        // Predicated region
        $region37: #{tpu_custom_call.1} parent=31 // pred_check
          %p260 = pneg %p93
        $region38: #{tpu_custom_call.1} parent=31 // pred_check_branch
          %262 = sbr.rel (%p260) target = $region40
        $region39: #{tpu_custom_call.1} parent=31 // pred_region
          %263 = dma.done %s256, 256
        $region40: #{tpu_custom_call.1} parent=31 // pred_fallthru
          _
        %s264 = sand.u32 %s23, 1
        %s265 = scalar_lea.sflag [#allocation10], %s264
        %s266 = sand.u32 %s108, 1
        %s267 = smul.addr %s266, 16
        %s268 = scalar_lea.vmem [#allocation11], %s267
        // Predicated region
        $region41: #{tpu_custom_call.1} parent=31 // pred_check
          %p269 = pneg %p121
        $region42: #{tpu_custom_call.1} parent=31 // pred_check_branch
          %271 = sbr.rel (%p269) target = $region44
        $region43: #{tpu_custom_call.1} parent=31 // pred_region
          %272 = dma.done %s265, 256
        $region44: #{tpu_custom_call.1} parent=31 // pred_fallthru
          _
        %s273 = sand.u32 %s52, 1
        %s274 = scalar_lea.sflag [#allocation7], %s273
        %s275 = sand.u32 %s52, 1
        %s276 = smul.addr %s275, 16
        %s277 = scalar_lea.vmem [#allocation6], %s276
        %p278 = pneg %p65
        %p279 = pneg %p62
        %s280 = sand.u32 %s23, 1
        %s281 = scalar_lea.sflag [#allocation10], %s280
        %s282 = sand.u32 %s80, 1
        %s283 = smul.addr %s282, 16
        %s284 = scalar_lea.vmem [#allocation9], %s283
        %p285 = pneg %p93
        %p286 = pneg %p90
        %s287 = sand.u32 %s23, 1
        %s288 = scalar_lea.sflag [#allocation10], %s287
        %s289 = sand.u32 %s108, 1
        %s290 = smul.addr %s289, 16
        %s291 = scalar_lea.vmem [#allocation11], %s290
        %p292 = pneg %p121
        %p293 = pneg %p118
        %p294 = pneg %p149
        %p295 = pneg %p146
        %s296 = sand.u32 %s136, 1
        %s297 = scalar_lea.sflag [#allocation8], %s296
        %s298 = sand.u32 %s136, 1
        %s299 = smul.addr %s298, 16
        %s300 = scalar_lea.vmem [#allocation12], %s299
        %s301 = smul.u32 2, %s28
        %s302 = smul.u32 2, %s28
        %s303 = smul.u32 2, %s28
        %s304 = smul.u32 2, %s28
        %p305 = scmp.eq.s32.totalorder %s30, 0
        // Predicated region
        $region45: #{tpu_custom_call.1} parent=31 // pred_check
          %p306 = pneg %p305
        $region46: #{tpu_custom_call.1} parent=31 // pred_check_branch
          %308 = sbr.rel (%p306) target = $region48
        $region47: #{tpu_custom_call.1} parent=31 // pred_region
          %v309 = vld [vmem:[%s250] sm:$0xff]
          %v310 = vld [vmem:[%s250 + $0x8] sm:$0xff]
          %v311 = vmul.f32 %v309, 0.35355338
          %v312 = vmul.f32 %v310, 0.35355338
          %313 = vst [vmem:[#allocation2] sm:$0xff] %v311
          %314 = vst [vmem:[#allocation2 + $0x8] sm:$0xff] %v312
          %315 = vst [vmem:[#allocation3] sm:$0x1] -inf
          %316 = vst [vmem:[#allocation3 + $0x1] sm:$0x1] -inf
          %317 = vst [vmem:[#allocation4] sm:$0x1] 0.0
          %318 = vst [vmem:[#allocation4 + $0x1] sm:$0x1] 0.0
          %319 = vst [vmem:[#allocation5] sm:$0xff] 0.0
          %320 = vst [vmem:[#allocation5 + $0x8] sm:$0xff] 0.0
        $region48: #{tpu_custom_call.1} parent=31 // pred_fallthru
          _
        %v321 = vld [vmem:[#allocation2] sm:$0xff]
        %v322 = vld [vmem:[#allocation2 + $0x8] sm:$0xff]
        %v323 = vld [vmem:[%s259] sm:$0xff]
        %v324 = vld [vmem:[%s259 + $0x8] sm:$0xff]
        %v325 = vld [vmem:[%s268] sm:$0xff]
        %v326 = vld [vmem:[%s268 + $0x8] sm:$0xff]
        %327 = vxpose.xlu0.b32.start [1/16] %v323, 128
        %328 = vxpose.xlu0.b32.cont [2/16] 0.0, 128
        %329 = vxpose.xlu0.b32.cont [3/16] 0.0, 128
        %330 = vxpose.xlu0.b32.cont [4/16] 0.0, 128
        %331 = vxpose.xlu0.b32.cont [5/16] 0.0, 128
        %332 = vxpose.xlu0.b32.cont [6/16] 0.0, 128
        %333 = vxpose.xlu0.b32.cont [7/16] 0.0, 128
        %334 = vxpose.xlu0.b32.cont [8/16] 0.0, 128
        %335 = vxpose.xlu0.b32.cont [9/16] 0.0, 128
        %336 = vxpose.xlu0.b32.cont [10/16] 0.0, 128
        %337 = vxpose.xlu0.b32.cont [11/16] 0.0, 128
        %338 = vxpose.xlu0.b32.cont [12/16] 0.0, 128
        %339 = vxpose.xlu0.b32.cont [13/16] 0.0, 128
        %340 = vxpose.xlu0.b32.cont [14/16] 0.0, 128
        %341 = vxpose.xlu0.b32.cont [15/16] 0.0, 128
        %342 = vxpose.xlu0.b32.end [16/16] 0.0, 128
        %v343 = vpop.trf.xlu0
        %v344 = vpop.trf.xlu0
        %v345 = vpop.trf.xlu0
        %v346 = vpop.trf.xlu0
        %v347 = vpop.trf.xlu0
        %v348 = vpop.trf.xlu0
        %v349 = vpop.trf.xlu0
        %v350 = vpop.trf.xlu0
        %v351 = vpop.trf.xlu0
        %v352 = vpop.trf.xlu0
        %v353 = vpop.trf.xlu0
        %v354 = vpop.trf.xlu0
        %v355 = vpop.trf.xlu0
        %v356 = vpop.trf.xlu0
        %v357 = vpop.trf.xlu0
        %v358 = vpop.trf.xlu0
        %vm359 = vcmask 64512
        %v361 = vsel %vm359, %v343, 0
        %v364 = vsel %vm359, %v344, 0
        %v367 = vsel %vm359, %v345, 0
        %v370 = vsel %vm359, %v346, 0
        %v373 = vsel %vm359, %v347, 0
        %v376 = vsel %vm359, %v348, 0
        %v379 = vsel %vm359, %v349, 0
        %v382 = vsel %vm359, %v350, 0
        %v385 = vsel %vm359, %v351, 0
        %v388 = vsel %vm359, %v352, 0
        %v391 = vsel %vm359, %v353, 0
        %v394 = vsel %vm359, %v354, 0
        %v397 = vsel %vm359, %v355, 0
        %v400 = vsel %vm359, %v356, 0
        %v403 = vsel %vm359, %v357, 0
        %v406 = vsel %vm359, %v358, 0
        %408 = vmatprep.subr.mxu0 0.0
        %v409 = vand.u32 %v321, 4294901760
        %410 = vmatpush1.msra.mxu0 %v409
        %411 = vmatprep.subr.mxu0 0.0
        %412 = vmatpush1.msra.mxu0 0.0
        %413 = vmatprep.subr.mxu0 0.0
        %414 = vmatpush1.msra.mxu0 0.0
        %415 = vmatprep.subr.mxu0 0.0
        %416 = vmatpush1.msra.mxu0 0.0
        %417 = vmatprep.subr.mxu0 0.0
        %418 = vmatpush1.msra.mxu0 0.0
        %419 = vmatprep.subr.mxu0 0.0
        %420 = vmatpush1.msra.mxu0 0.0
        %421 = vmatprep.subr.mxu0 0.0
        %422 = vmatpush1.msra.mxu0 0.0
        %423 = vmatprep.subr.mxu0 0.0
        %424 = vmatpush1.msra.mxu0 0.0
        %425 = vmatprep.subr.mxu0 0.0
        %426 = vmatpush1.msra.mxu0 0.0
        %427 = vmatprep.subr.mxu0 0.0
        %428 = vmatpush1.msra.mxu0 0.0
        %429 = vmatprep.subr.mxu0 0.0
        %430 = vmatpush1.msra.mxu0 0.0
        %431 = vmatprep.subr.mxu0 0.0
        %432 = vmatpush1.msra.mxu0 0.0
        %433 = vmatprep.subr.mxu0 0.0
        %434 = vmatpush1.msra.mxu0 0.0
        %435 = vmatprep.subr.mxu0 0.0
        %436 = vmatpush1.msra.mxu0 0.0
        %437 = vmatprep.subr.mxu0 0.0
        %438 = vmatpush1.msra.mxu0 0.0
        %439 = vmatprep.subr.mxu0 0.0
        %440 = vmatpush1.msra.mxu0 0.0
        %441 = vmatprep.subr.mxu0 0.0
        %442 = vmatpush1.msra.mxu0 0.0
        %443 = vmatprep.subr.mxu0 0.0
        %444 = vmatpush1.msra.mxu0 0.0
        %445 = vmatprep.subr.mxu0 0.0
        %446 = vmatpush1.msra.mxu0 0.0
        %447 = vmatprep.subr.mxu0 0.0
        %448 = vmatpush1.msra.mxu0 0.0
        %449 = vmatprep.subr.mxu0 0.0
        %450 = vmatpush1.msra.mxu0 0.0
        %451 = vmatprep.subr.mxu0 0.0
        %452 = vmatpush1.msra.mxu0 0.0
        %453 = vmatprep.subr.mxu0 0.0
        %454 = vmatpush1.msra.mxu0 0.0
        %455 = vmatprep.subr.mxu0 0.0
        %456 = vmatpush1.msra.mxu0 0.0
        %457 = vmatprep.subr.mxu0 0.0
        %458 = vmatpush1.msra.mxu0 0.0
        %459 = vmatprep.subr.mxu0 0.0
        %460 = vmatpush1.msra.mxu0 0.0
        %461 = vmatprep.subr.mxu0 0.0
        %462 = vmatpush1.msra.mxu0 0.0
        %463 = vmatprep.subr.mxu0 0.0
        %464 = vmatpush1.msra.mxu0 0.0
        %465 = vmatprep.subr.mxu0 0.0
        %466 = vmatpush1.msra.mxu0 0.0
        %467 = vmatprep.subr.mxu0 0.0
        %468 = vmatpush1.msra.mxu0 0.0
        %469 = vmatprep.subr.mxu0 0.0
        %470 = vmatpush1.msra.mxu0 0.0
        %471 = vmatprep.subr.mxu0 0.0
        %472 = vmatpush1.msra.mxu0 0.0
        %473 = vmatprep.mubr.f32.mxu0 0.0
        %v474 = vand.u32 %v361, 4294901760
        %v475 = vsub.f32 %v361, %v474
        %v476 = vand.u32 %v475, 4294901760
        %v477 = vsub.f32 %v475, %v476
        %v478 = vand.u32 %v477, 4294901760
        %479 = vmatmul.mubr.f32.gmra.mrb[0].mxu0 %v478
        %v480 = vpop.f32.mrb[0].mxu0
        %v481 = vadd.f32 0.0, %v480
        %v482 = vpop.f32.mrb[0].mxu0
        %483 = vmatprep.mubr.f32.mxu0 0.0
        %v484 = vand.u32 %v364, 4294901760
        %v485 = vsub.f32 %v364, %v484
        %v486 = vand.u32 %v485, 4294901760
        %v487 = vsub.f32 %v485, %v486
        %v488 = vand.u32 %v487, 4294901760
        %489 = vmatmul.mubr.f32.gmra.mrb[0].mxu0 %v488
        %v490 = vpop.f32.mrb[0].mxu0
        %v491 = vadd.f32 0.0, %v490
        %v492 = vpop.f32.mrb[0].mxu0
        %493 = vmatprep.mubr.f32.mxu0 0.0
        %v494 = vand.u32 %v367, 4294901760
        %v495 = vsub.f32 %v367, %v494
        %v496 = vand.u32 %v495, 4294901760
        %v497 = vsub.f32 %v495, %v496
        %v498 = vand.u32 %v497, 4294901760
        %499 = vmatmul.mubr.f32.gmra.mrb[0].mxu0 %v498
        %v500 = vpop.f32.mrb[0].mxu0
        %v501 = vadd.f32 0.0, %v500
        %v502 = vpop.f32.mrb[0].mxu0
        %503 = vmatprep.mubr.f32.mxu0 0.0
        %v504 = vand.u32 %v370, 4294901760
        %v505 = vsub.f32 %v370, %v504
        %v506 = vand.u32 %v505, 4294901760
        %v507 = vsub.f32 %v505, %v506
        %v508 = vand.u32 %v507, 4294901760
        %509 = vmatmul.mubr.f32.gmra.mrb[0].mxu0 %v508
        %v510 = vpop.f32.mrb[0].mxu0
        %v511 = vadd.f32 0.0, %v510
        %v512 = vpop.f32.mrb[0].mxu0
        %513 = vmatprep.mubr.f32.mxu0 0.0
        %v514 = vand.u32 %v373, 4294901760
        %v515 = vsub.f32 %v373, %v514
        %v516 = vand.u32 %v515, 4294901760
        %v517 = vsub.f32 %v515, %v516
        %v518 = vand.u32 %v517, 4294901760
        %519 = vmatmul.mubr.f32.gmra.mrb[0].mxu0 %v518
        %v520 = vpop.f32.mrb[0].mxu0
        %v521 = vadd.f32 0.0, %v520
        %v522 = vpop.f32.mrb[0].mxu0
        %523 = vmatprep.mubr.f32.mxu0 0.0
        %v524 = vand.u32 %v376, 4294901760
        %v525 = vsub.f32 %v376, %v524
        %v526 = vand.u32 %v525, 4294901760
        %v527 = vsub.f32 %v525, %v526
        %v528 = vand.u32 %v527, 4294901760
        %529 = vmatmul.mubr.f32.gmra.mrb[0].mxu0 %v528
        %v530 = vpop.f32.mrb[0].mxu0
        %v531 = vadd.f32 0.0, %v530
        %v532 = vpop.f32.mrb[0].mxu0
        %533 = vmatprep.mubr.f32.mxu0 0.0
        %v534 = vand.u32 %v379, 4294901760
        %v535 = vsub.f32 %v379, %v534
        %v536 = vand.u32 %v535, 4294901760
        %v537 = vsub.f32 %v535, %v536
        %v538 = vand.u32 %v537, 4294901760
        %539 = vmatmul.mubr.f32.gmra.mrb[0].mxu0 %v538
        %v540 = vpop.f32.mrb[0].mxu0
        %v541 = vadd.f32 0.0, %v540
        %v542 = vpop.f32.mrb[0].mxu0
        %543 = vmatprep.mubr.f32.mxu0 0.0
        %v544 = vand.u32 %v382, 4294901760
        %v545 = vsub.f32 %v382, %v544
        %v546 = vand.u32 %v545, 4294901760
        %v547 = vsub.f32 %v545, %v546
        %v548 = vand.u32 %v547, 4294901760
        %549 = vmatmul.mubr.f32.gmra.mrb[0].mxu0 %v548
        %v550 = vpop.f32.mrb[0].mxu0
        %v551 = vadd.f32 0.0, %v550
        %v552 = vpop.f32.mrb[0].mxu0
        %553 = vmatprep.mubr.f32.mxu0 0.0
        %v554 = vand.u32 %v385, 4294901760
        %v555 = vsub.f32 %v385, %v554
        %v556 = vand.u32 %v555, 4294901760
        %v557 = vsub.f32 %v555, %v556
        %v558 = vand.u32 %v557, 4294901760
        %559 = vmatmul.mubr.f32.gmra.mrb[0].mxu0 %v558
        %v560 = vpop.f32.mrb[0].mxu0
        %v561 = vadd.f32 0.0, %v560
        %v562 = vpop.f32.mrb[0].mxu0
        %563 = vmatprep.mubr.f32.mxu0 0.0
        %v564 = vand.u32 %v388, 4294901760
        %v565 = vsub.f32 %v388, %v564
        %v566 = vand.u32 %v565, 4294901760
        %v567 = vsub.f32 %v565, %v566
        %v568 = vand.u32 %v567, 4294901760
        %569 = vmatmul.mubr.f32.gmra.mrb[0].mxu0 %v568
        %v570 = vpop.f32.mrb[0].mxu0
        %v571 = vadd.f32 0.0, %v570
        %v572 = vpop.f32.mrb[0].mxu0
        %573 = vmatprep.mubr.f32.mxu0 0.0
        %v574 = vand.u32 %v391, 4294901760
        %v575 = vsub.f32 %v391, %v574
        %v576 = vand.u32 %v575, 4294901760
        %v577 = vsub.f32 %v575, %v576
        %v578 = vand.u32 %v577, 4294901760
        %579 = vmatmul.mubr.f32.gmra.mrb[0].mxu0 %v578
        %v580 = vpop.f32.mrb[0].mxu0
        %v581 = vadd.f32 0.0, %v580
        %v582 = vpop.f32.mrb[0].mxu0
        %583 = vmatprep.mubr.f32.mxu0 0.0
        %v584 = vand.u32 %v394, 4294901760
        %v585 = vsub.f32 %v394, %v584
        %v586 = vand.u32 %v585, 4294901760
        %v587 = vsub.f32 %v585, %v586
        %v588 = vand.u32 %v587, 4294901760
        %589 = vmatmul.mubr.f32.gmra.mrb[0].mxu0 %v588
        %v590 = vpop.f32.mrb[0].mxu0
        %v591 = vadd.f32 0.0, %v590
        %v592 = vpop.f32.mrb[0].mxu0
        %593 = vmatprep.mubr.f32.mxu0 0.0
        %v594 = vand.u32 %v397, 4294901760
        %v595 = vsub.f32 %v397, %v594
        %v596 = vand.u32 %v595, 4294901760
        %v597 = vsub.f32 %v595, %v596
        %v598 = vand.u32 %v597, 4294901760
        %599 = vmatmul.mubr.f32.gmra.mrb[0].mxu0 %v598
        %v600 = vpop.f32.mrb[0].mxu0
        %v601 = vadd.f32 0.0, %v600
        %v602 = vpop.f32.mrb[0].mxu0
        %603 = vmatprep.mubr.f32.mxu0 0.0
        %v604 = vand.u32 %v400, 4294901760
        %v605 = vsub.f32 %v400, %v604
        %v606 = vand.u32 %v605, 4294901760
        %v607 = vsub.f32 %v605, %v606
        %v608 = vand.u32 %v607, 4294901760
        %609 = vmatmul.mubr.f32.gmra.mrb[0].mxu0 %v608
        %v610 = vpop.f32.mrb[0].mxu0
        %v611 = vadd.f32 0.0, %v610
        %v612 = vpop.f32.mrb[0].mxu0
        %613 = vmatprep.mubr.f32.mxu0 0.0
        %v614 = vand.u32 %v403, 4294901760
        %v615 = vsub.f32 %v403, %v614
        %v616 = vand.u32 %v615, 4294901760
        %v617 = vsub.f32 %v615, %v616
        %v618 = vand.u32 %v617, 4294901760
        %619 = vmatmul.mubr.f32.gmra.mrb[0].mxu0 %v618
        %v620 = vpop.f32.mrb[0].mxu0
        %v621 = vadd.f32 0.0, %v620
        %v622 = vpop.f32.mrb[0].mxu0
        %623 = vmatprep.mubr.f32.mxu0 0.0
        %v624 = vand.u32 %v406, 4294901760
        %v625 = vsub.f32 %v406, %v624
        %v626 = vand.u32 %v625, 4294901760
        %v627 = vsub.f32 %v625, %v626
        %v628 = vand.u32 %v627, 4294901760
        %629 = vmatmul.mubr.f32.gmra.mrb[0].mxu0 %v628
        %v630 = vpop.f32.mrb[0].mxu0
        %v631 = vadd.f32 0.0, %v630
        %v632 = vpop.f32.mrb[0].mxu0
        %633 = vdwg.mxu0
        %634 = vmatprep.subr.mxu0 0.0
        %v635 = vand.u32 %v321, 4294901760
        %v636 = vsub.f32 %v321, %v635
        %v637 = vand.u32 %v636, 4294901760
        %v638 = vsub.f32 %v636, %v637
        %v639 = vand.u32 %v638, 4294901760
        %640 = vmatpush1.msra.mxu0 %v639
        %641 = vmatprep.subr.mxu0 0.0
        %642 = vmatpush1.msra.mxu0 0.0
        %643 = vmatprep.subr.mxu0 0.0
        %644 = vmatpush1.msra.mxu0 0.0
        %645 = vmatprep.subr.mxu0 0.0
        %646 = vmatpush1.msra.mxu0 0.0
        %647 = vmatprep.subr.mxu0 0.0
        %648 = vmatpush1.msra.mxu0 0.0
        %649 = vmatprep.subr.mxu0 0.0
        %650 = vmatpush1.msra.mxu0 0.0
        %651 = vmatprep.subr.mxu0 0.0
        %652 = vmatpush1.msra.mxu0 0.0
        %653 = vmatprep.subr.mxu0 0.0
        %654 = vmatpush1.msra.mxu0 0.0
        %655 = vmatprep.subr.mxu0 0.0
        %656 = vmatpush1.msra.mxu0 0.0
        %657 = vmatprep.subr.mxu0 0.0
        %658 = vmatpush1.msra.mxu0 0.0
        %659 = vmatprep.subr.mxu0 0.0
        %660 = vmatpush1.msra.mxu0 0.0
        %661 = vmatprep.subr.mxu0 0.0
        %662 = vmatpush1.msra.mxu0 0.0
        %663 = vmatprep.subr.mxu0 0.0
        %664 = vmatpush1.msra.mxu0 0.0
        %665 = vmatprep.subr.mxu0 0.0
        %666 = vmatpush1.msra.mxu0 0.0
        %667 = vmatprep.subr.mxu0 0.0
        %668 = vmatpush1.msra.mxu0 0.0
        %669 = vmatprep.subr.mxu0 0.0
        %670 = vmatpush1.msra.mxu0 0.0
        %671 = vmatprep.subr.mxu0 0.0
        %672 = vmatpush1.msra.mxu0 0.0
        %673 = vmatprep.subr.mxu0 0.0
        %674 = vmatpush1.msra.mxu0 0.0
        %675 = vmatprep.subr.mxu0 0.0
        %676 = vmatpush1.msra.mxu0 0.0
        %677 = vmatprep.subr.mxu0 0.0
        %678 = vmatpush1.msra.mxu0 0.0
        %679 = vmatprep.subr.mxu0 0.0
        %680 = vmatpush1.msra.mxu0 0.0
        %681 = vmatprep.subr.mxu0 0.0
        %682 = vmatpush1.msra.mxu0 0.0
        %683 = vmatprep.subr.mxu0 0.0
        %684 = vmatpush1.msra.mxu0 0.0
        %685 = vmatprep.subr.mxu0 0.0
        %686 = vmatpush1.msra.mxu0 0.0
        %687 = vmatprep.subr.mxu0 0.0
        %688 = vmatpush1.msra.mxu0 0.0
        %689 = vmatprep.subr.mxu0 0.0
        %690 = vmatpush1.msra.mxu0 0.0
        %691 = vmatprep.subr.mxu0 0.0
        %692 = vmatpush1.msra.mxu0 0.0
        %693 = vmatprep.subr.mxu0 0.0
        %694 = vmatpush1.msra.mxu0 0.0
        %695 = vmatprep.subr.mxu0 0.0
        %696 = vmatpush1.msra.mxu0 0.0
        %697 = vmatprep.subr.mxu0 0.0
        %698 = vmatpush1.msra.mxu0 0.0
        %699 = vmatprep.subr.mxu0 0.0
        %700 = vmatpush1.msra.mxu0 0.0
        %701 = vmatprep.subr.mxu0 0.0
        %702 = vmatpush1.msra.mxu0 0.0
        %703 = vmatprep.mubr.f32.mxu0 0.0
        %v704 = vand.u32 %v361, 4294901760
        %705 = vmatmul.mubr.f32.gmra.mrb[0].mxu0 %v704
        %v706 = vpop.f32.mrb[0].mxu0
        %v707 = vadd.f32 %v481, %v706
        %v708 = vpop.f32.mrb[0].mxu0
        %709 = vmatprep.mubr.f32.mxu0 0.0
        %v710 = vand.u32 %v364, 4294901760
        %711 = vmatmul.mubr.f32.gmra.mrb[0].mxu0 %v710
        %v712 = vpop.f32.mrb[0].mxu0
        %v713 = vadd.f32 %v491, %v712
        %v714 = vpop.f32.mrb[0].mxu0
        %715 = vmatprep.mubr.f32.mxu0 0.0
        %v716 = vand.u32 %v367, 4294901760
        %717 = vmatmul.mubr.f32.gmra.mrb[0].mxu0 %v716
        %v718 = vpop.f32.mrb[0].mxu0
        %v719 = vadd.f32 %v501, %v718
        %v720 = vpop.f32.mrb[0].mxu0
        %721 = vmatprep.mubr.f32.mxu0 0.0
        %v722 = vand.u32 %v370, 4294901760
        %723 = vmatmul.mubr.f32.gmra.mrb[0].mxu0 %v722
        %v724 = vpop.f32.mrb[0].mxu0
        %v725 = vadd.f32 %v511, %v724
        %v726 = vpop.f32.mrb[0].mxu0
        %727 = vmatprep.mubr.f32.mxu0 0.0
        %v728 = vand.u32 %v373, 4294901760
        %729 = vmatmul.mubr.f32.gmra.mrb[0].mxu0 %v728
        %v730 = vpop.f32.mrb[0].mxu0
        %v731 = vadd.f32 %v521, %v730
        %v732 = vpop.f32.mrb[0].mxu0
        %733 = vmatprep.mubr.f32.mxu0 0.0
        %v734 = vand.u32 %v376, 4294901760
        %735 = vmatmul.mubr.f32.gmra.mrb[0].mxu0 %v734
        %v736 = vpop.f32.mrb[0].mxu0
        %v737 = vadd.f32 %v531, %v736
        %v738 = vpop.f32.mrb[0].mxu0
        %739 = vmatprep.mubr.f32.mxu0 0.0
        %v740 = vand.u32 %v379, 4294901760
        %741 = vmatmul.mubr.f32.gmra.mrb[0].mxu0 %v740
        %v742 = vpop.f32.mrb[0].mxu0
        %v743 = vadd.f32 %v541, %v742
        %v744 = vpop.f32.mrb[0].mxu0
        %745 = vmatprep.mubr.f32.mxu0 0.0
        %v746 = vand.u32 %v382, 4294901760
        %747 = vmatmul.mubr.f32.gmra.mrb[0].mxu0 %v746
        %v748 = vpop.f32.mrb[0].mxu0
        %v749 = vadd.f32 %v551, %v748
        %v750 = vpop.f32.mrb[0].mxu0
        %751 = vmatprep.mubr.f32.mxu0 0.0
        %v752 = vand.u32 %v385, 4294901760
        %753 = vmatmul.mubr.f32.gmra.mrb[0].mxu0 %v752
        %v754 = vpop.f32.mrb[0].mxu0
        %v755 = vadd.f32 %v561, %v754
        %v756 = vpop.f32.mrb[0].mxu0
        %757 = vmatprep.mubr.f32.mxu0 0.0
        %v758 = vand.u32 %v388, 4294901760
        %759 = vmatmul.mubr.f32.gmra.mrb[0].mxu0 %v758
        %v760 = vpop.f32.mrb[0].mxu0
        %v761 = vadd.f32 %v571, %v760
        %v762 = vpop.f32.mrb[0].mxu0
        %763 = vmatprep.mubr.f32.mxu0 0.0
        %v764 = vand.u32 %v391, 4294901760
        %765 = vmatmul.mubr.f32.gmra.mrb[0].mxu0 %v764
        %v766 = vpop.f32.mrb[0].mxu0
        %v767 = vadd.f32 %v581, %v766
        %v768 = vpop.f32.mrb[0].mxu0
        %769 = vmatprep.mubr.f32.mxu0 0.0
        %v770 = vand.u32 %v394, 4294901760
        %771 = vmatmul.mubr.f32.gmra.mrb[0].mxu0 %v770
        %v772 = vpop.f32.mrb[0].mxu0
        %v773 = vadd.f32 %v591, %v772
        %v774 = vpop.f32.mrb[0].mxu0
        %775 = vmatprep.mubr.f32.mxu0 0.0
        %v776 = vand.u32 %v397, 4294901760
        %777 = vmatmul.mubr.f32.gmra.mrb[0].mxu0 %v776
        %v778 = vpop.f32.mrb[0].mxu0
        %v779 = vadd.f32 %v601, %v778
        %v780 = vpop.f32.mrb[0].mxu0
        %781 = vmatprep.mubr.f32.mxu0 0.0
        %v782 = vand.u32 %v400, 4294901760
        %783 = vmatmul.mubr.f32.gmra.mrb[0].mxu0 %v782
        %v784 = vpop.f32.mrb[0].mxu0
        %v785 = vadd.f32 %v611, %v784
        %v786 = vpop.f32.mrb[0].mxu0
        %787 = vmatprep.mubr.f32.mxu0 0.0
        %v788 = vand.u32 %v403, 4294901760
        %789 = vmatmul.mubr.f32.gmra.mrb[0].mxu0 %v788
        %v790 = vpop.f32.mrb[0].mxu0
        %v791 = vadd.f32 %v621, %v790
        %v792 = vpop.f32.mrb[0].mxu0
        %793 = vmatprep.mubr.f32.mxu0 0.0
        %v794 = vand.u32 %v406, 4294901760
        %795 = vmatmul.mubr.f32.gmra.mrb[0].mxu0 %v794
        %v796 = vpop.f32.mrb[0].mxu0
        %v797 = vadd.f32 %v631, %v796
        %v798 = vpop.f32.mrb[0].mxu0
        %799 = vdwg.mxu0
        %800 = vmatprep.subr.mxu0 0.0
        %v801 = vand.u32 %v321, 4294901760
        %v802 = vsub.f32 %v321, %v801
        %803 = vmatpush1.msra.mxu0 %v802
        %804 = vmatprep.subr.mxu0 0.0
        %805 = vmatpush1.msra.mxu0 0.0
        %806 = vmatprep.subr.mxu0 0.0
        %807 = vmatpush1.msra.mxu0 0.0
        %808 = vmatprep.subr.mxu0 0.0
        %809 = vmatpush1.msra.mxu0 0.0
        %810 = vmatprep.subr.mxu0 0.0
        %811 = vmatpush1.msra.mxu0 0.0
        %812 = vmatprep.subr.mxu0 0.0
        %813 = vmatpush1.msra.mxu0 0.0
        %814 = vmatprep.subr.mxu0 0.0
        %815 = vmatpush1.msra.mxu0 0.0
        %816 = vmatprep.subr.mxu0 0.0
        %817 = vmatpush1.msra.mxu0 0.0
        %818 = vmatprep.subr.mxu0 0.0
        %819 = vmatpush1.msra.mxu0 0.0
        %820 = vmatprep.subr.mxu0 0.0
        %821 = vmatpush1.msra.mxu0 0.0
        %822 = vmatprep.subr.mxu0 0.0
        %823 = vmatpush1.msra.mxu0 0.0
        %824 = vmatprep.subr.mxu0 0.0
        %825 = vmatpush1.msra.mxu0 0.0
        %826 = vmatprep.subr.mxu0 0.0
        %827 = vmatpush1.msra.mxu0 0.0
        %828 = vmatprep.subr.mxu0 0.0
        %829 = vmatpush1.msra.mxu0 0.0
        %830 = vmatprep.subr.mxu0 0.0
        %831 = vmatpush1.msra.mxu0 0.0
        %832 = vmatprep.subr.mxu0 0.0
        %833 = vmatpush1.msra.mxu0 0.0
        %834 = vmatprep.subr.mxu0 0.0
        %835 = vmatpush1.msra.mxu0 0.0
        %836 = vmatprep.subr.mxu0 0.0
        %837 = vmatpush1.msra.mxu0 0.0
        %838 = vmatprep.subr.mxu0 0.0
        %839 = vmatpush1.msra.mxu0 0.0
        %840 = vmatprep.subr.mxu0 0.0
        %841 = vmatpush1.msra.mxu0 0.0
        %842 = vmatprep.subr.mxu0 0.0
        %843 = vmatpush1.msra.mxu0 0.0
        %844 = vmatprep.subr.mxu0 0.0
        %845 = vmatpush1.msra.mxu0 0.0
        %846 = vmatprep.subr.mxu0 0.0
        %847 = vmatpush1.msra.mxu0 0.0
        %848 = vmatprep.subr.mxu0 0.0
        %849 = vmatpush1.msra.mxu0 0.0
        %850 = vmatprep.subr.mxu0 0.0
        %851 = vmatpush1.msra.mxu0 0.0
        %852 = vmatprep.subr.mxu0 0.0
        %853 = vmatpush1.msra.mxu0 0.0
        %854 = vmatprep.subr.mxu0 0.0
        %855 = vmatpush1.msra.mxu0 0.0
        %856 = vmatprep.subr.mxu0 0.0
        %857 = vmatpush1.msra.mxu0 0.0
        %858 = vmatprep.subr.mxu0 0.0
        %859 = vmatpush1.msra.mxu0 0.0
        %860 = vmatprep.subr.mxu0 0.0
        %861 = vmatpush1.msra.mxu0 0.0
        %862 = vmatprep.subr.mxu0 0.0
        %863 = vmatpush1.msra.mxu0 0.0
        %864 = vmatprep.subr.mxu0 0.0
        %865 = vmatpush1.msra.mxu0 0.0
        %866 = vmatprep.mubr.f32.mxu0 0.0
        %v867 = vand.u32 %v361, 4294901760
        %v868 = vsub.f32 %v361, %v867
        %869 = vmatmul.mubr.f32.gmra.mrb[0].mxu0 %v868
        %v870 = vpop.f32.mrb[0].mxu0
        %v871 = vadd.f32 %v707, %v870
        %v872 = vpop.f32.mrb[0].mxu0
        %873 = vmatprep.mubr.f32.mxu0 0.0
        %v874 = vand.u32 %v364, 4294901760
        %v875 = vsub.f32 %v364, %v874
        %876 = vmatmul.mubr.f32.gmra.mrb[0].mxu0 %v875
        %v877 = vpop.f32.mrb[0].mxu0
        %v878 = vadd.f32 %v713, %v877
        %v879 = vpop.f32.mrb[0].mxu0
        %880 = vmatprep.mubr.f32.mxu0 0.0
        %v881 = vand.u32 %v367, 4294901760
        %v882 = vsub.f32 %v367, %v881
        %883 = vmatmul.mubr.f32.gmra.mrb[0].mxu0 %v882
        %v884 = vpop.f32.mrb[0].mxu0
        %v885 = vadd.f32 %v719, %v884
        %v886 = vpop.f32.mrb[0].mxu0
        %887 = vmatprep.mubr.f32.mxu0 0.0
        %v888 = vand.u32 %v370, 4294901760
        %v889 = vsub.f32 %v370, %v888
        %890 = vmatmul.mubr.f32.gmra.mrb[0].mxu0 %v889
        %v891 = vpop.f32.mrb[0].mxu0
        %v892 = vadd.f32 %v725, %v891
        %v893 = vpop.f32.mrb[0].mxu0
        %894 = vmatprep.mubr.f32.mxu0 0.0
        %v895 = vand.u32 %v373, 4294901760
        %v896 = vsub.f32 %v373, %v895
        %897 = vmatmul.mubr.f32.gmra.mrb[0].mxu0 %v896
        %v898 = vpop.f32.mrb[0].mxu0
        %v899 = vadd.f32 %v731, %v898
        %v900 = vpop.f32.mrb[0].mxu0
        %901 = vmatprep.mubr.f32.mxu0 0.0
        %v902 = vand.u32 %v376, 4294901760
        %v903 = vsub.f32 %v376, %v902
        %904 = vmatmul.mubr.f32.gmra.mrb[0].mxu0 %v903
        %v905 = vpop.f32.mrb[0].mxu0
        %v906 = vadd.f32 %v737, %v905
        %v907 = vpop.f32.mrb[0].mxu0
        %908 = vmatprep.mubr.f32.mxu0 0.0
        %v909 = vand.u32 %v379, 4294901760
        %v910 = vsub.f32 %v379, %v909
        %911 = vmatmul.mubr.f32.gmra.mrb[0].mxu0 %v910
        %v912 = vpop.f32.mrb[0].mxu0
        %v913 = vadd.f32 %v743, %v912
        %v914 = vpop.f32.mrb[0].mxu0
        %915 = vmatprep.mubr.f32.mxu0 0.0
        %v916 = vand.u32 %v382, 4294901760
        %v917 = vsub.f32 %v382, %v916
        %918 = vmatmul.mubr.f32.gmra.mrb[0].mxu0 %v917
        %v919 = vpop.f32.mrb[0].mxu0
        %v920 = vadd.f32 %v749, %v919
        %v921 = vpop.f32.mrb[0].mxu0
        %922 = vmatprep.mubr.f32.mxu0 0.0
        %v923 = vand.u32 %v385, 4294901760
        %v924 = vsub.f32 %v385, %v923
        %925 = vmatmul.mubr.f32.gmra.mrb[0].mxu0 %v924
        %v926 = vpop.f32.mrb[0].mxu0
        %v927 = vadd.f32 %v755, %v926
        %v928 = vpop.f32.mrb[0].mxu0
        %929 = vmatprep.mubr.f32.mxu0 0.0
        %v930 = vand.u32 %v388, 4294901760
        %v931 = vsub.f32 %v388, %v930
        %932 = vmatmul.mubr.f32.gmra.mrb[0].mxu0 %v931
        %v933 = vpop.f32.mrb[0].mxu0
        %v934 = vadd.f32 %v761, %v933
        %v935 = vpop.f32.mrb[0].mxu0
        %936 = vmatprep.mubr.f32.mxu0 0.0
        %v937 = vand.u32 %v391, 4294901760
        %v938 = vsub.f32 %v391, %v937
        %939 = vmatmul.mubr.f32.gmra.mrb[0].mxu0 %v938
        %v940 = vpop.f32.mrb[0].mxu0
        %v941 = vadd.f32 %v767, %v940
        %v942 = vpop.f32.mrb[0].mxu0
        %943 = vmatprep.mubr.f32.mxu0 0.0
        %v944 = vand.u32 %v394, 4294901760
        %v945 = vsub.f32 %v394, %v944
        %946 = vmatmul.mubr.f32.gmra.mrb[0].mxu0 %v945
        %v947 = vpop.f32.mrb[0].mxu0
        %v948 = vadd.f32 %v773, %v947
        %v949 = vpop.f32.mrb[0].mxu0
        %950 = vmatprep.mubr.f32.mxu0 0.0
        %v951 = vand.u32 %v397, 4294901760
        %v952 = vsub.f32 %v397, %v951
        %953 = vmatmul.mubr.f32.gmra.mrb[0].mxu0 %v952
        %v954 = vpop.f32.mrb[0].mxu0
        %v955 = vadd.f32 %v779, %v954
        %v956 = vpop.f32.mrb[0].mxu0
        %957 = vmatprep.mubr.f32.mxu0 0.0
        %v958 = vand.u32 %v400, 4294901760
        %v959 = vsub.f32 %v400, %v958
        %960 = vmatmul.mubr.f32.gmra.mrb[0].mxu0 %v959
        %v961 = vpop.f32.mrb[0].mxu0
        %v962 = vadd.f32 %v785, %v961
        %v963 = vpop.f32.mrb[0].mxu0
        %964 = vmatprep.mubr.f32.mxu0 0.0
        %v965 = vand.u32 %v403, 4294901760
        %v966 = vsub.f32 %v403, %v965
        %967 = vmatmul.mubr.f32.gmra.mrb[0].mxu0 %v966
        %v968 = vpop.f32.mrb[0].mxu0
        %v969 = vadd.f32 %v791, %v968
        %v970 = vpop.f32.mrb[0].mxu0
        %971 = vmatprep.mubr.f32.mxu0 0.0
        %v972 = vand.u32 %v406, 4294901760
        %v973 = vsub.f32 %v406, %v972
        %974 = vmatmul.mubr.f32.gmra.mrb[0].mxu0 %v973
        %v975 = vpop.f32.mrb[0].mxu0
        %v976 = vadd.f32 %v797, %v975
        %v977 = vpop.f32.mrb[0].mxu0
        %978 = vdwg.mxu0
        %979 = vmatprep.subr.mxu0 0.0
        %v980 = vand.u32 %v321, 4294901760
        %981 = vmatpush1.msra.mxu0 %v980
        %982 = vmatprep.subr.mxu0 0.0
        %983 = vmatpush1.msra.mxu0 0.0
        %984 = vmatprep.subr.mxu0 0.0
        %985 = vmatpush1.msra.mxu0 0.0
        %986 = vmatprep.subr.mxu0 0.0
        %987 = vmatpush1.msra.mxu0 0.0
        %988 = vmatprep.subr.mxu0 0.0
        %989 = vmatpush1.msra.mxu0 0.0
        %990 = vmatprep.subr.mxu0 0.0
        %991 = vmatpush1.msra.mxu0 0.0
        %992 = vmatprep.subr.mxu0 0.0
        %993 = vmatpush1.msra.mxu0 0.0
        %994 = vmatprep.subr.mxu0 0.0
        %995 = vmatpush1.msra.mxu0 0.0
        %996 = vmatprep.subr.mxu0 0.0
        %997 = vmatpush1.msra.mxu0 0.0
        %998 = vmatprep.subr.mxu0 0.0
        %999 = vmatpush1.msra.mxu0 0.0
        %1000 = vmatprep.subr.mxu0 0.0
        %1001 = vmatpush1.msra.mxu0 0.0
        %1002 = vmatprep.subr.mxu0 0.0
        %1003 = vmatpush1.msra.mxu0 0.0
        %1004 = vmatprep.subr.mxu0 0.0
        %1005 = vmatpush1.msra.mxu0 0.0
        %1006 = vmatprep.subr.mxu0 0.0
        %1007 = vmatpush1.msra.mxu0 0.0
        %1008 = vmatprep.subr.mxu0 0.0
        %1009 = vmatpush1.msra.mxu0 0.0
        %1010 = vmatprep.subr.mxu0 0.0
        %1011 = vmatpush1.msra.mxu0 0.0
        %1012 = vmatprep.subr.mxu0 0.0
        %1013 = vmatpush1.msra.mxu0 0.0
        %1014 = vmatprep.subr.mxu0 0.0
        %1015 = vmatpush1.msra.mxu0 0.0
        %1016 = vmatprep.subr.mxu0 0.0
        %1017 = vmatpush1.msra.mxu0 0.0
        %1018 = vmatprep.subr.mxu0 0.0
        %1019 = vmatpush1.msra.mxu0 0.0
        %1020 = vmatprep.subr.mxu0 0.0
        %1021 = vmatpush1.msra.mxu0 0.0
        %1022 = vmatprep.subr.mxu0 0.0
        %1023 = vmatpush1.msra.mxu0 0.0
        %1024 = vmatprep.subr.mxu0 0.0
        %1025 = vmatpush1.msra.mxu0 0.0
        %1026 = vmatprep.subr.mxu0 0.0
        %1027 = vmatpush1.msra.mxu0 0.0
        %1028 = vmatprep.subr.mxu0 0.0
        %1029 = vmatpush1.msra.mxu0 0.0
        %1030 = vmatprep.subr.mxu0 0.0
        %1031 = vmatpush1.msra.mxu0 0.0
        %1032 = vmatprep.subr.mxu0 0.0
        %1033 = vmatpush1.msra.mxu0 0.0
        %1034 = vmatprep.subr.mxu0 0.0
        %1035 = vmatpush1.msra.mxu0 0.0
        %1036 = vmatprep.subr.mxu0 0.0
        %1037 = vmatpush1.msra.mxu0 0.0
        %1038 = vmatprep.subr.mxu0 0.0
        %1039 = vmatpush1.msra.mxu0 0.0
        %1040 = vmatprep.subr.mxu0 0.0
        %1041 = vmatpush1.msra.mxu0 0.0
        %1042 = vmatprep.subr.mxu0 0.0
        %1043 = vmatpush1.msra.mxu0 0.0
        %1044 = vmatprep.mubr.f32.mxu0 0.0
        %v1045 = vand.u32 %v361, 4294901760
        %v1046 = vsub.f32 %v361, %v1045
        %v1047 = vand.u32 %v1046, 4294901760
        %1048 = vmatmul.mubr.f32.gmra.mrb[0].mxu0 %v1047
        %v1049 = vpop.f32.mrb[0].mxu0
        %v1050 = vadd.f32 %v871, %v1049
        %v1051 = vpop.f32.mrb[0].mxu0
        %1052 = vmatprep.mubr.f32.mxu0 0.0
        %v1053 = vand.u32 %v364, 4294901760
        %v1054 = vsub.f32 %v364, %v1053
        %v1055 = vand.u32 %v1054, 4294901760
        %1056 = vmatmul.mubr.f32.gmra.mrb[0].mxu0 %v1055
        %v1057 = vpop.f32.mrb[0].mxu0
        %v1058 = vadd.f32 %v878, %v1057
        %v1059 = vpop.f32.mrb[0].mxu0
        %1060 = vmatprep.mubr.f32.mxu0 0.0
        %v1061 = vand.u32 %v367, 4294901760
        %v1062 = vsub.f32 %v367, %v1061
        %v1063 = vand.u32 %v1062, 4294901760
        %1064 = vmatmul.mubr.f32.gmra.mrb[0].mxu0 %v1063
        %v1065 = vpop.f32.mrb[0].mxu0
        %v1066 = vadd.f32 %v885, %v1065
        %v1067 = vpop.f32.mrb[0].mxu0
        %1068 = vmatprep.mubr.f32.mxu0 0.0
        %v1069 = vand.u32 %v370, 4294901760
        %v1070 = vsub.f32 %v370, %v1069
        %v1071 = vand.u32 %v1070, 4294901760
        %1072 = vmatmul.mubr.f32.gmra.mrb[0].mxu0 %v1071
        %v1073 = vpop.f32.mrb[0].mxu0
        %v1074 = vadd.f32 %v892, %v1073
        %v1075 = vpop.f32.mrb[0].mxu0
        %1076 = vmatprep.mubr.f32.mxu0 0.0
        %v1077 = vand.u32 %v373, 4294901760
        %v1078 = vsub.f32 %v373, %v1077
        %v1079 = vand.u32 %v1078, 4294901760
        %1080 = vmatmul.mubr.f32.gmra.mrb[0].mxu0 %v1079
        %v1081 = vpop.f32.mrb[0].mxu0
        %v1082 = vadd.f32 %v899, %v1081
        %v1083 = vpop.f32.mrb[0].mxu0
        %1084 = vmatprep.mubr.f32.mxu0 0.0
        %v1085 = vand.u32 %v376, 4294901760
        %v1086 = vsub.f32 %v376, %v1085
        %v1087 = vand.u32 %v1086, 4294901760
        %1088 = vmatmul.mubr.f32.gmra.mrb[0].mxu0 %v1087
        %v1089 = vpop.f32.mrb[0].mxu0
        %v1090 = vadd.f32 %v906, %v1089
        %v1091 = vpop.f32.mrb[0].mxu0
        %1092 = vmatprep.mubr.f32.mxu0 0.0
        %v1093 = vand.u32 %v379, 4294901760
        %v1094 = vsub.f32 %v379, %v1093
        %v1095 = vand.u32 %v1094, 4294901760
        %1096 = vmatmul.mubr.f32.gmra.mrb[0].mxu0 %v1095
        %v1097 = vpop.f32.mrb[0].mxu0
        %v1098 = vadd.f32 %v913, %v1097
        %v1099 = vpop.f32.mrb[0].mxu0
        %1100 = vmatprep.mubr.f32.mxu0 0.0
        %v1101 = vand.u32 %v382, 4294901760
        %v1102 = vsub.f32 %v382, %v1101
        %v1103 = vand.u32 %v1102, 4294901760
        %1104 = vmatmul.mubr.f32.gmra.mrb[0].mxu0 %v1103
        %v1105 = vpop.f32.mrb[0].mxu0
        %v1106 = vadd.f32 %v920, %v1105
        %v1107 = vpop.f32.mrb[0].mxu0
        %1108 = vmatprep.mubr.f32.mxu0 0.0
        %v1109 = vand.u32 %v385, 4294901760
        %v1110 = vsub.f32 %v385, %v1109
        %v1111 = vand.u32 %v1110, 4294901760
        %1112 = vmatmul.mubr.f32.gmra.mrb[0].mxu0 %v1111
        %v1113 = vpop.f32.mrb[0].mxu0
        %v1114 = vadd.f32 %v927, %v1113
        %v1115 = vpop.f32.mrb[0].mxu0
        %1116 = vmatprep.mubr.f32.mxu0 0.0
        %v1117 = vand.u32 %v388, 4294901760
        %v1118 = vsub.f32 %v388, %v1117
        %v1119 = vand.u32 %v1118, 4294901760
        %1120 = vmatmul.mubr.f32.gmra.mrb[0].mxu0 %v1119
        %v1121 = vpop.f32.mrb[0].mxu0
        %v1122 = vadd.f32 %v934, %v1121
        %v1123 = vpop.f32.mrb[0].mxu0
        %1124 = vmatprep.mubr.f32.mxu0 0.0
        %v1125 = vand.u32 %v391, 4294901760
        %v1126 = vsub.f32 %v391, %v1125
        %v1127 = vand.u32 %v1126, 4294901760
        %1128 = vmatmul.mubr.f32.gmra.mrb[0].mxu0 %v1127
        %v1129 = vpop.f32.mrb[0].mxu0
        %v1130 = vadd.f32 %v941, %v1129
        %v1131 = vpop.f32.mrb[0].mxu0
        %1132 = vmatprep.mubr.f32.mxu0 0.0
        %v1133 = vand.u32 %v394, 4294901760
        %v1134 = vsub.f32 %v394, %v1133
        %v1135 = vand.u32 %v1134, 4294901760
        %1136 = vmatmul.mubr.f32.gmra.mrb[0].mxu0 %v1135
        %v1137 = vpop.f32.mrb[0].mxu0
        %v1138 = vadd.f32 %v948, %v1137
        %v1139 = vpop.f32.mrb[0].mxu0
        %1140 = vmatprep.mubr.f32.mxu0 0.0
        %v1141 = vand.u32 %v397, 4294901760
        %v1142 = vsub.f32 %v397, %v1141
        %v1143 = vand.u32 %v1142, 4294901760
        %1144 = vmatmul.mubr.f32.gmra.mrb[0].mxu0 %v1143
        %v1145 = vpop.f32.mrb[0].mxu0
        %v1146 = vadd.f32 %v955, %v1145
        %v1147 = vpop.f32.mrb[0].mxu0
        %1148 = vmatprep.mubr.f32.mxu0 0.0
        %v1149 = vand.u32 %v400, 4294901760
        %v1150 = vsub.f32 %v400, %v1149
        %v1151 = vand.u32 %v1150, 4294901760
        %1152 = vmatmul.mubr.f32.gmra.mrb[0].mxu0 %v1151
        %v1153 = vpop.f32.mrb[0].mxu0
        %v1154 = vadd.f32 %v962, %v1153
        %v1155 = vpop.f32.mrb[0].mxu0
        %1156 = vmatprep.mubr.f32.mxu0 0.0
        %v1157 = vand.u32 %v403, 4294901760
        %v1158 = vsub.f32 %v403, %v1157
        %v1159 = vand.u32 %v1158, 4294901760
        %1160 = vmatmul.mubr.f32.gmra.mrb[0].mxu0 %v1159
        %v1161 = vpop.f32.mrb[0].mxu0
        %v1162 = vadd.f32 %v969, %v1161
        %v1163 = vpop.f32.mrb[0].mxu0
        %1164 = vmatprep.mubr.f32.mxu0 0.0
        %v1165 = vand.u32 %v406, 4294901760
        %v1166 = vsub.f32 %v406, %v1165
        %v1167 = vand.u32 %v1166, 4294901760
        %1168 = vmatmul.mubr.f32.gmra.mrb[0].mxu0 %v1167
        %v1169 = vpop.f32.mrb[0].mxu0
        %v1170 = vadd.f32 %v976, %v1169
        %v1171 = vpop.f32.mrb[0].mxu0
        %1172 = vdwg.mxu0
        %1173 = vmatprep.subr.mxu0 0.0
        %v1174 = vand.u32 %v321, 4294901760
        %v1175 = vsub.f32 %v321, %v1174
        %v1176 = vand.u32 %v1175, 4294901760
        %1177 = vmatpush1.msra.mxu0 %v1176
        %1178 = vmatprep.subr.mxu0 0.0
        %1179 = vmatpush1.msra.mxu0 0.0
        %1180 = vmatprep.subr.mxu0 0.0
        %1181 = vmatpush1.msra.mxu0 0.0
        %1182 = vmatprep.subr.mxu0 0.0
        %1183 = vmatpush1.msra.mxu0 0.0
        %1184 = vmatprep.subr.mxu0 0.0
        %1185 = vmatpush1.msra.mxu0 0.0
        %1186 = vmatprep.subr.mxu0 0.0
        %1187 = vmatpush1.msra.mxu0 0.0
        %1188 = vmatprep.subr.mxu0 0.0
        %1189 = vmatpush1.msra.mxu0 0.0
        %1190 = vmatprep.subr.mxu0 0.0
        %1191 = vmatpush1.msra.mxu0 0.0
        %1192 = vmatprep.subr.mxu0 0.0
        %1193 = vmatpush1.msra.mxu0 0.0
        %1194 = vmatprep.subr.mxu0 0.0
        %1195 = vmatpush1.msra.mxu0 0.0
        %1196 = vmatprep.subr.mxu0 0.0
        %1197 = vmatpush1.msra.mxu0 0.0
        %1198 = vmatprep.subr.mxu0 0.0
        %1199 = vmatpush1.msra.mxu0 0.0
        %1200 = vmatprep.subr.mxu0 0.0
        %1201 = vmatpush1.msra.mxu0 0.0
        %1202 = vmatprep.subr.mxu0 0.0
        %1203 = vmatpush1.msra.mxu0 0.0
        %1204 = vmatprep.subr.mxu0 0.0
        %1205 = vmatpush1.msra.mxu0 0.0
        %1206 = vmatprep.subr.mxu0 0.0
        %1207 = vmatpush1.msra.mxu0 0.0
        %1208 = vmatprep.subr.mxu0 0.0
        %1209 = vmatpush1.msra.mxu0 0.0
        %1210 = vmatprep.subr.mxu0 0.0
        %1211 = vmatpush1.msra.mxu0 0.0
        %1212 = vmatprep.subr.mxu0 0.0
        %1213 = vmatpush1.msra.mxu0 0.0
        %1214 = vmatprep.subr.mxu0 0.0
        %1215 = vmatpush1.msra.mxu0 0.0
        %1216 = vmatprep.subr.mxu0 0.0
        %1217 = vmatpush1.msra.mxu0 0.0
        %1218 = vmatprep.subr.mxu0 0.0
        %1219 = vmatpush1.msra.mxu0 0.0
        %1220 = vmatprep.subr.mxu0 0.0
        %1221 = vmatpush1.msra.mxu0 0.0
        %1222 = vmatprep.subr.mxu0 0.0
        %1223 = vmatpush1.msra.mxu0 0.0
        %1224 = vmatprep.subr.mxu0 0.0
        %1225 = vmatpush1.msra.mxu0 0.0
        %1226 = vmatprep.subr.mxu0 0.0
        %1227 = vmatpush1.msra.mxu0 0.0
        %1228 = vmatprep.subr.mxu0 0.0
        %1229 = vmatpush1.msra.mxu0 0.0
        %1230 = vmatprep.subr.mxu0 0.0
        %1231 = vmatpush1.msra.mxu0 0.0
        %1232 = vmatprep.subr.mxu0 0.0
        %1233 = vmatpush1.msra.mxu0 0.0
        %1234 = vmatprep.subr.mxu0 0.0
        %1235 = vmatpush1.msra.mxu0 0.0
        %1236 = vmatprep.subr.mxu0 0.0
        %1237 = vmatpush1.msra.mxu0 0.0
        %1238 = vmatprep.subr.mxu0 0.0
        %1239 = vmatpush1.msra.mxu0 0.0
        %1240 = vmatprep.mubr.f32.mxu0 0.0
        %v1241 = vand.u32 %v361, 4294901760
        %1242 = vmatmul.mubr.f32.gmra.mrb[0].mxu0 %v1241
        %v1243 = vpop.f32.mrb[0].mxu0
        %v1244 = vadd.f32 %v1050, %v1243
        %v1245 = vpop.f32.mrb[0].mxu0
        %1246 = vmatprep.mubr.f32.mxu0 0.0
        %v1247 = vand.u32 %v364, 4294901760
        %1248 = vmatmul.mubr.f32.gmra.mrb[0].mxu0 %v1247
        %v1249 = vpop.f32.mrb[0].mxu0
        %v1250 = vadd.f32 %v1058, %v1249
        %v1251 = vpop.f32.mrb[0].mxu0
        %1252 = vmatprep.mubr.f32.mxu0 0.0
        %v1253 = vand.u32 %v367, 4294901760
        %1254 = vmatmul.mubr.f32.gmra.mrb[0].mxu0 %v1253
        %v1255 = vpop.f32.mrb[0].mxu0
        %v1256 = vadd.f32 %v1066, %v1255
        %v1257 = vpop.f32.mrb[0].mxu0
        %1258 = vmatprep.mubr.f32.mxu0 0.0
        %v1259 = vand.u32 %v370, 4294901760
        %1260 = vmatmul.mubr.f32.gmra.mrb[0].mxu0 %v1259
        %v1261 = vpop.f32.mrb[0].mxu0
        %v1262 = vadd.f32 %v1074, %v1261
        %v1263 = vpop.f32.mrb[0].mxu0
        %1264 = vmatprep.mubr.f32.mxu0 0.0
        %v1265 = vand.u32 %v373, 4294901760
        %1266 = vmatmul.mubr.f32.gmra.mrb[0].mxu0 %v1265
        %v1267 = vpop.f32.mrb[0].mxu0
        %v1268 = vadd.f32 %v1082, %v1267
        %v1269 = vpop.f32.mrb[0].mxu0
        %1270 = vmatprep.mubr.f32.mxu0 0.0
        %v1271 = vand.u32 %v376, 4294901760
        %1272 = vmatmul.mubr.f32.gmra.mrb[0].mxu0 %v1271
        %v1273 = vpop.f32.mrb[0].mxu0
        %v1274 = vadd.f32 %v1090, %v1273
        %v1275 = vpop.f32.mrb[0].mxu0
        %1276 = vmatprep.mubr.f32.mxu0 0.0
        %v1277 = vand.u32 %v379, 4294901760
        %1278 = vmatmul.mubr.f32.gmra.mrb[0].mxu0 %v1277
        %v1279 = vpop.f32.mrb[0].mxu0
        %v1280 = vadd.f32 %v1098, %v1279
        %v1281 = vpop.f32.mrb[0].mxu0
        %1282 = vmatprep.mubr.f32.mxu0 0.0
        %v1283 = vand.u32 %v382, 4294901760
        %1284 = vmatmul.mubr.f32.gmra.mrb[0].mxu0 %v1283
        %v1285 = vpop.f32.mrb[0].mxu0
        %v1286 = vadd.f32 %v1106, %v1285
        %v1287 = vpop.f32.mrb[0].mxu0
        %1288 = vmatprep.mubr.f32.mxu0 0.0
        %v1289 = vand.u32 %v385, 4294901760
        %1290 = vmatmul.mubr.f32.gmra.mrb[0].mxu0 %v1289
        %v1291 = vpop.f32.mrb[0].mxu0
        %v1292 = vadd.f32 %v1114, %v1291
        %v1293 = vpop.f32.mrb[0].mxu0
        %1294 = vmatprep.mubr.f32.mxu0 0.0
        %v1295 = vand.u32 %v388, 4294901760
        %1296 = vmatmul.mubr.f32.gmra.mrb[0].mxu0 %v1295
        %v1297 = vpop.f32.mrb[0].mxu0
        %v1298 = vadd.f32 %v1122, %v1297
        %v1299 = vpop.f32.mrb[0].mxu0
        %1300 = vmatprep.mubr.f32.mxu0 0.0
        %v1301 = vand.u32 %v391, 4294901760
        %1302 = vmatmul.mubr.f32.gmra.mrb[0].mxu0 %v1301
        %v1303 = vpop.f32.mrb[0].mxu0
        %v1304 = vadd.f32 %v1130, %v1303
        %v1305 = vpop.f32.mrb[0].mxu0
        %1306 = vmatprep.mubr.f32.mxu0 0.0
        %v1307 = vand.u32 %v394, 4294901760
        %1308 = vmatmul.mubr.f32.gmra.mrb[0].mxu0 %v1307
        %v1309 = vpop.f32.mrb[0].mxu0
        %v1310 = vadd.f32 %v1138, %v1309
        %v1311 = vpop.f32.mrb[0].mxu0
        %1312 = vmatprep.mubr.f32.mxu0 0.0
        %v1313 = vand.u32 %v397, 4294901760
        %1314 = vmatmul.mubr.f32.gmra.mrb[0].mxu0 %v1313
        %v1315 = vpop.f32.mrb[0].mxu0
        %v1316 = vadd.f32 %v1146, %v1315
        %v1317 = vpop.f32.mrb[0].mxu0
        %1318 = vmatprep.mubr.f32.mxu0 0.0
        %v1319 = vand.u32 %v400, 4294901760
        %1320 = vmatmul.mubr.f32.gmra.mrb[0].mxu0 %v1319
        %v1321 = vpop.f32.mrb[0].mxu0
        %v1322 = vadd.f32 %v1154, %v1321
        %v1323 = vpop.f32.mrb[0].mxu0
        %1324 = vmatprep.mubr.f32.mxu0 0.0
        %v1325 = vand.u32 %v403, 4294901760
        %1326 = vmatmul.mubr.f32.gmra.mrb[0].mxu0 %v1325
        %v1327 = vpop.f32.mrb[0].mxu0
        %v1328 = vadd.f32 %v1162, %v1327
        %v1329 = vpop.f32.mrb[0].mxu0
        %1330 = vmatprep.mubr.f32.mxu0 0.0
        %v1331 = vand.u32 %v406, 4294901760
        %1332 = vmatmul.mubr.f32.gmra.mrb[0].mxu0 %v1331
        %v1333 = vpop.f32.mrb[0].mxu0
        %v1334 = vadd.f32 %v1170, %v1333
        %v1335 = vpop.f32.mrb[0].mxu0
        %1336 = vdwg.mxu0
        %1337 = vmatprep.subr.mxu0 0.0
        %v1338 = vand.u32 %v321, 4294901760
        %1339 = vmatpush1.msra.mxu0 %v1338
        %1340 = vmatprep.subr.mxu0 0.0
        %1341 = vmatpush1.msra.mxu0 0.0
        %1342 = vmatprep.subr.mxu0 0.0
        %1343 = vmatpush1.msra.mxu0 0.0
        %1344 = vmatprep.subr.mxu0 0.0
        %1345 = vmatpush1.msra.mxu0 0.0
        %1346 = vmatprep.subr.mxu0 0.0
        %1347 = vmatpush1.msra.mxu0 0.0
        %1348 = vmatprep.subr.mxu0 0.0
        %1349 = vmatpush1.msra.mxu0 0.0
        %1350 = vmatprep.subr.mxu0 0.0
        %1351 = vmatpush1.msra.mxu0 0.0
        %1352 = vmatprep.subr.mxu0 0.0
        %1353 = vmatpush1.msra.mxu0 0.0
        %1354 = vmatprep.subr.mxu0 0.0
        %1355 = vmatpush1.msra.mxu0 0.0
        %1356 = vmatprep.subr.mxu0 0.0
        %1357 = vmatpush1.msra.mxu0 0.0
        %1358 = vmatprep.subr.mxu0 0.0
        %1359 = vmatpush1.msra.mxu0 0.0
        %1360 = vmatprep.subr.mxu0 0.0
        %1361 = vmatpush1.msra.mxu0 0.0
        %1362 = vmatprep.subr.mxu0 0.0
        %1363 = vmatpush1.msra.mxu0 0.0
        %1364 = vmatprep.subr.mxu0 0.0
        %1365 = vmatpush1.msra.mxu0 0.0
        %1366 = vmatprep.subr.mxu0 0.0
        %1367 = vmatpush1.msra.mxu0 0.0
        %1368 = vmatprep.subr.mxu0 0.0
        %1369 = vmatpush1.msra.mxu0 0.0
        %1370 = vmatprep.subr.mxu0 0.0
        %1371 = vmatpush1.msra.mxu0 0.0
        %1372 = vmatprep.subr.mxu0 0.0
        %1373 = vmatpush1.msra.mxu0 0.0
        %1374 = vmatprep.subr.mxu0 0.0
        %1375 = vmatpush1.msra.mxu0 0.0
        %1376 = vmatprep.subr.mxu0 0.0
        %1377 = vmatpush1.msra.mxu0 0.0
        %1378 = vmatprep.subr.mxu0 0.0
        %1379 = vmatpush1.msra.mxu0 0.0
        %1380 = vmatprep.subr.mxu0 0.0
        %1381 = vmatpush1.msra.mxu0 0.0
        %1382 = vmatprep.subr.mxu0 0.0
        %1383 = vmatpush1.msra.mxu0 0.0
        %1384 = vmatprep.subr.mxu0 0.0
        %1385 = vmatpush1.msra.mxu0 0.0
        %1386 = vmatprep.subr.mxu0 0.0
        %1387 = vmatpush1.msra.mxu0 0.0
        %1388 = vmatprep.subr.mxu0 0.0
        %1389 = vmatpush1.msra.mxu0 0.0
        %1390 = vmatprep.subr.mxu0 0.0
        %1391 = vmatpush1.msra.mxu0 0.0
        %1392 = vmatprep.subr.mxu0 0.0
        %1393 = vmatpush1.msra.mxu0 0.0
        %1394 = vmatprep.subr.mxu0 0.0
        %1395 = vmatpush1.msra.mxu0 0.0
        %1396 = vmatprep.subr.mxu0 0.0
        %1397 = vmatpush1.msra.mxu0 0.0
        %1398 = vmatprep.subr.mxu0 0.0
        %1399 = vmatpush1.msra.mxu0 0.0
        %1400 = vmatprep.subr.mxu0 0.0
        %1401 = vmatpush1.msra.mxu0 0.0
        %1402 = vmatprep.mubr.f32.mxu0 0.0
        %v1403 = vand.u32 %v361, 4294901760
        %1404 = vmatmul.mubr.f32.gmra.mrb[0].mxu0 %v1403
        %v1405 = vpop.f32.mrb[0].mxu0
        %v1406 = vadd.f32 %v1244, %v1405
        %v1407 = vpop.f32.mrb[0].mxu0
        %1408 = vmatprep.mubr.f32.mxu0 0.0
        %v1409 = vand.u32 %v364, 4294901760
        %1410 = vmatmul.mubr.f32.gmra.mrb[0].mxu0 %v1409
        %v1411 = vpop.f32.mrb[0].mxu0
        %v1412 = vadd.f32 %v1250, %v1411
        %v1413 = vpop.f32.mrb[0].mxu0
        %1414 = vmatprep.mubr.f32.mxu0 0.0
        %v1415 = vand.u32 %v367, 4294901760
        %1416 = vmatmul.mubr.f32.gmra.mrb[0].mxu0 %v1415
        %v1417 = vpop.f32.mrb[0].mxu0
        %v1418 = vadd.f32 %v1256, %v1417
        %v1419 = vpop.f32.mrb[0].mxu0
        %1420 = vmatprep.mubr.f32.mxu0 0.0
        %v1421 = vand.u32 %v370, 4294901760
        %1422 = vmatmul.mubr.f32.gmra.mrb[0].mxu0 %v1421
        %v1423 = vpop.f32.mrb[0].mxu0
        %v1424 = vadd.f32 %v1262, %v1423
        %v1425 = vpop.f32.mrb[0].mxu0
        %1426 = vmatprep.mubr.f32.mxu0 0.0
        %v1427 = vand.u32 %v373, 4294901760
        %1428 = vmatmul.mubr.f32.gmra.mrb[0].mxu0 %v1427
        %v1429 = vpop.f32.mrb[0].mxu0
        %v1430 = vadd.f32 %v1268, %v1429
        %v1431 = vpop.f32.mrb[0].mxu0
        %1432 = vmatprep.mubr.f32.mxu0 0.0
        %v1433 = vand.u32 %v376, 4294901760
        %1434 = vmatmul.mubr.f32.gmra.mrb[0].mxu0 %v1433
        %v1435 = vpop.f32.mrb[0].mxu0
        %v1436 = vadd.f32 %v1274, %v1435
        %v1437 = vpop.f32.mrb[0].mxu0
        %1438 = vmatprep.mubr.f32.mxu0 0.0
        %v1439 = vand.u32 %v379, 4294901760
        %1440 = vmatmul.mubr.f32.gmra.mrb[0].mxu0 %v1439
        %v1441 = vpop.f32.mrb[0].mxu0
        %v1442 = vadd.f32 %v1280, %v1441
        %v1443 = vpop.f32.mrb[0].mxu0
        %1444 = vmatprep.mubr.f32.mxu0 0.0
        %v1445 = vand.u32 %v382, 4294901760
        %1446 = vmatmul.mubr.f32.gmra.mrb[0].mxu0 %v1445
        %v1447 = vpop.f32.mrb[0].mxu0
        %v1448 = vadd.f32 %v1286, %v1447
        %v1449 = vpop.f32.mrb[0].mxu0
        %1450 = vmatprep.mubr.f32.mxu0 0.0
        %v1451 = vand.u32 %v385, 4294901760
        %1452 = vmatmul.mubr.f32.gmra.mrb[0].mxu0 %v1451
        %v1453 = vpop.f32.mrb[0].mxu0
        %v1454 = vadd.f32 %v1292, %v1453
        %v1455 = vpop.f32.mrb[0].mxu0
        %1456 = vmatprep.mubr.f32.mxu0 0.0
        %v1457 = vand.u32 %v388, 4294901760
        %1458 = vmatmul.mubr.f32.gmra.mrb[0].mxu0 %v1457
        %v1459 = vpop.f32.mrb[0].mxu0
        %v1460 = vadd.f32 %v1298, %v1459
        %v1461 = vpop.f32.mrb[0].mxu0
        %1462 = vmatprep.mubr.f32.mxu0 0.0
        %v1463 = vand.u32 %v391, 4294901760
        %1464 = vmatmul.mubr.f32.gmra.mrb[0].mxu0 %v1463
        %v1465 = vpop.f32.mrb[0].mxu0
        %v1466 = vadd.f32 %v1304, %v1465
        %v1467 = vpop.f32.mrb[0].mxu0
        %1468 = vmatprep.mubr.f32.mxu0 0.0
        %v1469 = vand.u32 %v394, 4294901760
        %1470 = vmatmul.mubr.f32.gmra.mrb[0].mxu0 %v1469
        %v1471 = vpop.f32.mrb[0].mxu0
        %v1472 = vadd.f32 %v1310, %v1471
        %v1473 = vpop.f32.mrb[0].mxu0
        %1474 = vmatprep.mubr.f32.mxu0 0.0
        %v1475 = vand.u32 %v397, 4294901760
        %1476 = vmatmul.mubr.f32.gmra.mrb[0].mxu0 %v1475
        %v1477 = vpop.f32.mrb[0].mxu0
        %v1478 = vadd.f32 %v1316, %v1477
        %v1479 = vpop.f32.mrb[0].mxu0
        %1480 = vmatprep.mubr.f32.mxu0 0.0
        %v1481 = vand.u32 %v400, 4294901760
        %1482 = vmatmul.mubr.f32.gmra.mrb[0].mxu0 %v1481
        %v1483 = vpop.f32.mrb[0].mxu0
        %v1484 = vadd.f32 %v1322, %v1483
        %v1485 = vpop.f32.mrb[0].mxu0
        %1486 = vmatprep.mubr.f32.mxu0 0.0
        %v1487 = vand.u32 %v403, 4294901760
        %1488 = vmatmul.mubr.f32.gmra.mrb[0].mxu0 %v1487
        %v1489 = vpop.f32.mrb[0].mxu0
        %v1490 = vadd.f32 %v1328, %v1489
        %v1491 = vpop.f32.mrb[0].mxu0
        %1492 = vmatprep.mubr.f32.mxu0 0.0
        %v1493 = vand.u32 %v406, 4294901760
        %1494 = vmatmul.mubr.f32.gmra.mrb[0].mxu0 %v1493
        %v1495 = vpop.f32.mrb[0].mxu0
        %v1496 = vadd.f32 %v1334, %v1495
        %v1497 = vpop.f32.mrb[0].mxu0
        %1498 = vdwg.mxu0
        %1499 = vxpose.xlu0.b32.start [1/16] %v324, 128
        %1500 = vxpose.xlu0.b32.cont [2/16] 0.0, 128
        %1501 = vxpose.xlu0.b32.cont [3/16] 0.0, 128
        %1502 = vxpose.xlu0.b32.cont [4/16] 0.0, 128
        %1503 = vxpose.xlu0.b32.cont [5/16] 0.0, 128
        %1504 = vxpose.xlu0.b32.cont [6/16] 0.0, 128
        %1505 = vxpose.xlu0.b32.cont [7/16] 0.0, 128
        %1506 = vxpose.xlu0.b32.cont [8/16] 0.0, 128
        %1507 = vxpose.xlu0.b32.cont [9/16] 0.0, 128
        %1508 = vxpose.xlu0.b32.cont [10/16] 0.0, 128
        %1509 = vxpose.xlu0.b32.cont [11/16] 0.0, 128
        %1510 = vxpose.xlu0.b32.cont [12/16] 0.0, 128
        %1511 = vxpose.xlu0.b32.cont [13/16] 0.0, 128
        %1512 = vxpose.xlu0.b32.cont [14/16] 0.0, 128
        %1513 = vxpose.xlu0.b32.cont [15/16] 0.0, 128
        %1514 = vxpose.xlu0.b32.end [16/16] 0.0, 128
        %v1515 = vpop.trf.xlu0
        %v1516 = vpop.trf.xlu0
        %v1517 = vpop.trf.xlu0
        %v1518 = vpop.trf.xlu0
        %v1519 = vpop.trf.xlu0
        %v1520 = vpop.trf.xlu0
        %v1521 = vpop.trf.xlu0
        %v1522 = vpop.trf.xlu0
        %v1523 = vpop.trf.xlu0
        %v1524 = vpop.trf.xlu0
        %v1525 = vpop.trf.xlu0
        %v1526 = vpop.trf.xlu0
        %v1527 = vpop.trf.xlu0
        %v1528 = vpop.trf.xlu0
        %v1529 = vpop.trf.xlu0
        %v1530 = vpop.trf.xlu0
        %v1532 = vsel %vm359, %v1515, 0
        %v1535 = vsel %vm359, %v1516, 0
        %v1538 = vsel %vm359, %v1517, 0
        %v1541 = vsel %vm359, %v1518, 0
        %v1544 = vsel %vm359, %v1519, 0
        %v1547 = vsel %vm359, %v1520, 0
        %v1550 = vsel %vm359, %v1521, 0
        %v1553 = vsel %vm359, %v1522, 0
        %v1556 = vsel %vm359, %v1523, 0
        %v1559 = vsel %vm359, %v1524, 0
        %v1562 = vsel %vm359, %v1525, 0
        %v1565 = vsel %vm359, %v1526, 0
        %v1568 = vsel %vm359, %v1527, 0
        %v1571 = vsel %vm359, %v1528, 0
        %v1574 = vsel %vm359, %v1529, 0
        %v1577 = vsel %vm359, %v1530, 0
        %1579 = vmatprep.subr.mxu0 0.0
        %v1580 = vand.u32 %v322, 4294901760
        %1581 = vmatpush1.msra.mxu0 %v1580
        %1582 = vmatprep.subr.mxu0 0.0
        %1583 = vmatpush1.msra.mxu0 0.0
        %1584 = vmatprep.subr.mxu0 0.0
        %1585 = vmatpush1.msra.mxu0 0.0
        %1586 = vmatprep.subr.mxu0 0.0
        %1587 = vmatpush1.msra.mxu0 0.0
        %1588 = vmatprep.subr.mxu0 0.0
        %1589 = vmatpush1.msra.mxu0 0.0
        %1590 = vmatprep.subr.mxu0 0.0
        %1591 = vmatpush1.msra.mxu0 0.0
        %1592 = vmatprep.subr.mxu0 0.0
        %1593 = vmatpush1.msra.mxu0 0.0
        %1594 = vmatprep.subr.mxu0 0.0
        %1595 = vmatpush1.msra.mxu0 0.0
        %1596 = vmatprep.subr.mxu0 0.0
        %1597 = vmatpush1.msra.mxu0 0.0
        %1598 = vmatprep.subr.mxu0 0.0
        %1599 = vmatpush1.msra.mxu0 0.0
        %1600 = vmatprep.subr.mxu0 0.0
        %1601 = vmatpush1.msra.mxu0 0.0
        %1602 = vmatprep.subr.mxu0 0.0
        %1603 = vmatpush1.msra.mxu0 0.0
        %1604 = vmatprep.subr.mxu0 0.0
        %1605 = vmatpush1.msra.mxu0 0.0
        %1606 = vmatprep.subr.mxu0 0.0
        %1607 = vmatpush1.msra.mxu0 0.0
        %1608 = vmatprep.subr.mxu0 0.0
        %1609 = vmatpush1.msra.mxu0 0.0
        %1610 = vmatprep.subr.mxu0 0.0
        %1611 = vmatpush1.msra.mxu0 0.0
        %1612 = vmatprep.subr.mxu0 0.0
        %1613 = vmatpush1.msra.mxu0 0.0
        %1614 = vmatprep.subr.mxu0 0.0
        %1615 = vmatpush1.msra.mxu0 0.0
        %1616 = vmatprep.subr.mxu0 0.0
        %1617 = vmatpush1.msra.mxu0 0.0
        %1618 = vmatprep.subr.mxu0 0.0
        %1619 = vmatpush1.msra.mxu0 0.0
        %1620 = vmatprep.subr.mxu0 0.0
        %1621 = vmatpush1.msra.mxu0 0.0
        %1622 = vmatprep.subr.mxu0 0.0
        %1623 = vmatpush1.msra.mxu0 0.0
        %1624 = vmatprep.subr.mxu0 0.0
        %1625 = vmatpush1.msra.mxu0 0.0
        %1626 = vmatprep.subr.mxu0 0.0
        %1627 = vmatpush1.msra.mxu0 0.0
        %1628 = vmatprep.subr.mxu0 0.0
        %1629 = vmatpush1.msra.mxu0 0.0
        %1630 = vmatprep.subr.mxu0 0.0
        %1631 = vmatpush1.msra.mxu0 0.0
        %1632 = vmatprep.subr.mxu0 0.0
        %1633 = vmatpush1.msra.mxu0 0.0
        %1634 = vmatprep.subr.mxu0 0.0
        %1635 = vmatpush1.msra.mxu0 0.0
        %1636 = vmatprep.subr.mxu0 0.0
        %1637 = vmatpush1.msra.mxu0 0.0
        %1638 = vmatprep.subr.mxu0 0.0
        %1639 = vmatpush1.msra.mxu0 0.0
        %1640 = vmatprep.subr.mxu0 0.0
        %1641 = vmatpush1.msra.mxu0 0.0
        %1642 = vmatprep.subr.mxu0 0.0
        %1643 = vmatpush1.msra.mxu0 0.0
        %1644 = vmatprep.mubr.f32.mxu0 0.0
        %v1645 = vand.u32 %v1532, 4294901760
        %v1646 = vsub.f32 %v1532, %v1645
        %v1647 = vand.u32 %v1646, 4294901760
        %v1648 = vsub.f32 %v1646, %v1647
        %v1649 = vand.u32 %v1648, 4294901760
        %1650 = vmatmul.mubr.f32.gmra.mrb[0].mxu0 %v1649
        %v1651 = vpop.f32.mrb[0].mxu0
        %v1652 = vadd.f32 0.0, %v1651
        %v1653 = vpop.f32.mrb[0].mxu0
        %1654 = vmatprep.mubr.f32.mxu0 0.0
        %v1655 = vand.u32 %v1535, 4294901760
        %v1656 = vsub.f32 %v1535, %v1655
        %v1657 = vand.u32 %v1656, 4294901760
        %v1658 = vsub.f32 %v1656, %v1657
        %v1659 = vand.u32 %v1658, 4294901760
        %1660 = vmatmul.mubr.f32.gmra.mrb[0].mxu0 %v1659
        %v1661 = vpop.f32.mrb[0].mxu0
        %v1662 = vadd.f32 0.0, %v1661
        %v1663 = vpop.f32.mrb[0].mxu0
        %1664 = vmatprep.mubr.f32.mxu0 0.0
        %v1665 = vand.u32 %v1538, 4294901760
        %v1666 = vsub.f32 %v1538, %v1665
        %v1667 = vand.u32 %v1666, 4294901760
        %v1668 = vsub.f32 %v1666, %v1667
        %v1669 = vand.u32 %v1668, 4294901760
        %1670 = vmatmul.mubr.f32.gmra.mrb[0].mxu0 %v1669
        %v1671 = vpop.f32.mrb[0].mxu0
        %v1672 = vadd.f32 0.0, %v1671
        %v1673 = vpop.f32.mrb[0].mxu0
        %1674 = vmatprep.mubr.f32.mxu0 0.0
        %v1675 = vand.u32 %v1541, 4294901760
        %v1676 = vsub.f32 %v1541, %v1675
        %v1677 = vand.u32 %v1676, 4294901760
        %v1678 = vsub.f32 %v1676, %v1677
        %v1679 = vand.u32 %v1678, 4294901760
        %1680 = vmatmul.mubr.f32.gmra.mrb[0].mxu0 %v1679
        %v1681 = vpop.f32.mrb[0].mxu0
        %v1682 = vadd.f32 0.0, %v1681
        %v1683 = vpop.f32.mrb[0].mxu0
        %1684 = vmatprep.mubr.f32.mxu0 0.0
        %v1685 = vand.u32 %v1544, 4294901760
        %v1686 = vsub.f32 %v1544, %v1685
        %v1687 = vand.u32 %v1686, 4294901760
        %v1688 = vsub.f32 %v1686, %v1687
        %v1689 = vand.u32 %v1688, 4294901760
        %1690 = vmatmul.mubr.f32.gmra.mrb[0].mxu0 %v1689
        %v1691 = vpop.f32.mrb[0].mxu0
        %v1692 = vadd.f32 0.0, %v1691
        %v1693 = vpop.f32.mrb[0].mxu0
        %1694 = vmatprep.mubr.f32.mxu0 0.0
        %v1695 = vand.u32 %v1547, 4294901760
        %v1696 = vsub.f32 %v1547, %v1695
        %v1697 = vand.u32 %v1696, 4294901760
        %v1698 = vsub.f32 %v1696, %v1697
        %v1699 = vand.u32 %v1698, 4294901760
        %1700 = vmatmul.mubr.f32.gmra.mrb[0].mxu0 %v1699
        %v1701 = vpop.f32.mrb[0].mxu0
        %v1702 = vadd.f32 0.0, %v1701
        %v1703 = vpop.f32.mrb[0].mxu0
        %1704 = vmatprep.mubr.f32.mxu0 0.0
        %v1705 = vand.u32 %v1550, 4294901760
        %v1706 = vsub.f32 %v1550, %v1705
        %v1707 = vand.u32 %v1706, 4294901760
        %v1708 = vsub.f32 %v1706, %v1707
        %v1709 = vand.u32 %v1708, 4294901760
        %1710 = vmatmul.mubr.f32.gmra.mrb[0].mxu0 %v1709
        %v1711 = vpop.f32.mrb[0].mxu0
        %v1712 = vadd.f32 0.0, %v1711
        %v1713 = vpop.f32.mrb[0].mxu0
        %1714 = vmatprep.mubr.f32.mxu0 0.0
        %v1715 = vand.u32 %v1553, 4294901760
        %v1716 = vsub.f32 %v1553, %v1715
        %v1717 = vand.u32 %v1716, 4294901760
        %v1718 = vsub.f32 %v1716, %v1717
        %v1719 = vand.u32 %v1718, 4294901760
        %1720 = vmatmul.mubr.f32.gmra.mrb[0].mxu0 %v1719
        %v1721 = vpop.f32.mrb[0].mxu0
        %v1722 = vadd.f32 0.0, %v1721
        %v1723 = vpop.f32.mrb[0].mxu0
        %1724 = vmatprep.mubr.f32.mxu0 0.0
        %v1725 = vand.u32 %v1556, 4294901760
        %v1726 = vsub.f32 %v1556, %v1725
        %v1727 = vand.u32 %v1726, 4294901760
        %v1728 = vsub.f32 %v1726, %v1727
        %v1729 = vand.u32 %v1728, 4294901760
        %1730 = vmatmul.mubr.f32.gmra.mrb[0].mxu0 %v1729
        %v1731 = vpop.f32.mrb[0].mxu0
        %v1732 = vadd.f32 0.0, %v1731
        %v1733 = vpop.f32.mrb[0].mxu0
        %1734 = vmatprep.mubr.f32.mxu0 0.0
        %v1735 = vand.u32 %v1559, 4294901760
        %v1736 = vsub.f32 %v1559, %v1735
        %v1737 = vand.u32 %v1736, 4294901760
        %v1738 = vsub.f32 %v1736, %v1737
        %v1739 = vand.u32 %v1738, 4294901760
        %1740 = vmatmul.mubr.f32.gmra.mrb[0].mxu0 %v1739
        %v1741 = vpop.f32.mrb[0].mxu0
        %v1742 = vadd.f32 0.0, %v1741
        %v1743 = vpop.f32.mrb[0].mxu0
        %1744 = vmatprep.mubr.f32.mxu0 0.0
        %v1745 = vand.u32 %v1562, 4294901760
        %v1746 = vsub.f32 %v1562, %v1745
        %v1747 = vand.u32 %v1746, 4294901760
        %v1748 = vsub.f32 %v1746, %v1747
        %v1749 = vand.u32 %v1748, 4294901760
        %1750 = vmatmul.mubr.f32.gmra.mrb[0].mxu0 %v1749
        %v1751 = vpop.f32.mrb[0].mxu0
        %v1752 = vadd.f32 0.0, %v1751
        %v1753 = vpop.f32.mrb[0].mxu0
        %1754 = vmatprep.mubr.f32.mxu0 0.0
        %v1755 = vand.u32 %v1565, 4294901760
        %v1756 = vsub.f32 %v1565, %v1755
        %v1757 = vand.u32 %v1756, 4294901760
        %v1758 = vsub.f32 %v1756, %v1757
        %v1759 = vand.u32 %v1758, 4294901760
        %1760 = vmatmul.mubr.f32.gmra.mrb[0].mxu0 %v1759
        %v1761 = vpop.f32.mrb[0].mxu0
        %v1762 = vadd.f32 0.0, %v1761
        %v1763 = vpop.f32.mrb[0].mxu0
        %1764 = vmatprep.mubr.f32.mxu0 0.0
        %v1765 = vand.u32 %v1568, 4294901760
        %v1766 = vsub.f32 %v1568, %v1765
        %v1767 = vand.u32 %v1766, 4294901760
        %v1768 = vsub.f32 %v1766, %v1767
        %v1769 = vand.u32 %v1768, 4294901760
        %1770 = vmatmul.mubr.f32.gmra.mrb[0].mxu0 %v1769
        %v1771 = vpop.f32.mrb[0].mxu0
        %v1772 = vadd.f32 0.0, %v1771
        %v1773 = vpop.f32.mrb[0].mxu0
        %1774 = vmatprep.mubr.f32.mxu0 0.0
        %v1775 = vand.u32 %v1571, 4294901760
        %v1776 = vsub.f32 %v1571, %v1775
        %v1777 = vand.u32 %v1776, 4294901760
        %v1778 = vsub.f32 %v1776, %v1777
        %v1779 = vand.u32 %v1778, 4294901760
        %1780 = vmatmul.mubr.f32.gmra.mrb[0].mxu0 %v1779
        %v1781 = vpop.f32.mrb[0].mxu0
        %v1782 = vadd.f32 0.0, %v1781
        %v1783 = vpop.f32.mrb[0].mxu0
        %1784 = vmatprep.mubr.f32.mxu0 0.0
        %v1785 = vand.u32 %v1574, 4294901760
        %v1786 = vsub.f32 %v1574, %v1785
        %v1787 = vand.u32 %v1786, 4294901760
        %v1788 = vsub.f32 %v1786, %v1787
        %v1789 = vand.u32 %v1788, 4294901760
        %1790 = vmatmul.mubr.f32.gmra.mrb[0].mxu0 %v1789
        %v1791 = vpop.f32.mrb[0].mxu0
        %v1792 = vadd.f32 0.0, %v1791
        %v1793 = vpop.f32.mrb[0].mxu0
        %1794 = vmatprep.mubr.f32.mxu0 0.0
        %v1795 = vand.u32 %v1577, 4294901760
        %v1796 = vsub.f32 %v1577, %v1795
        %v1797 = vand.u32 %v1796, 4294901760
        %v1798 = vsub.f32 %v1796, %v1797
        %v1799 = vand.u32 %v1798, 4294901760
        %1800 = vmatmul.mubr.f32.gmra.mrb[0].mxu0 %v1799
        %v1801 = vpop.f32.mrb[0].mxu0
        %v1802 = vadd.f32 0.0, %v1801
        %v1803 = vpop.f32.mrb[0].mxu0
        %1804 = vdwg.mxu0
        %1805 = vmatprep.subr.mxu0 0.0
        %v1806 = vand.u32 %v322, 4294901760
        %v1807 = vsub.f32 %v322, %v1806
        %v1808 = vand.u32 %v1807, 4294901760
        %v1809 = vsub.f32 %v1807, %v1808
        %v1810 = vand.u32 %v1809, 4294901760
        %1811 = vmatpush1.msra.mxu0 %v1810
        %1812 = vmatprep.subr.mxu0 0.0
        %1813 = vmatpush1.msra.mxu0 0.0
        %1814 = vmatprep.subr.mxu0 0.0
        %1815 = vmatpush1.msra.mxu0 0.0
        %1816 = vmatprep.subr.mxu0 0.0
        %1817 = vmatpush1.msra.mxu0 0.0
        %1818 = vmatprep.subr.mxu0 0.0
        %1819 = vmatpush1.msra.mxu0 0.0
        %1820 = vmatprep.subr.mxu0 0.0
        %1821 = vmatpush1.msra.mxu0 0.0
        %1822 = vmatprep.subr.mxu0 0.0
        %1823 = vmatpush1.msra.mxu0 0.0
        %1824 = vmatprep.subr.mxu0 0.0
        %1825 = vmatpush1.msra.mxu0 0.0
        %1826 = vmatprep.subr.mxu0 0.0
        %1827 = vmatpush1.msra.mxu0 0.0
        %1828 = vmatprep.subr.mxu0 0.0
        %1829 = vmatpush1.msra.mxu0 0.0
        %1830 = vmatprep.subr.mxu0 0.0
        %1831 = vmatpush1.msra.mxu0 0.0
        %1832 = vmatprep.subr.mxu0 0.0
        %1833 = vmatpush1.msra.mxu0 0.0
        %1834 = vmatprep.subr.mxu0 0.0
        %1835 = vmatpush1.msra.mxu0 0.0
        %1836 = vmatprep.subr.mxu0 0.0
        %1837 = vmatpush1.msra.mxu0 0.0
        %1838 = vmatprep.subr.mxu0 0.0
        %1839 = vmatpush1.msra.mxu0 0.0
        %1840 = vmatprep.subr.mxu0 0.0
        %1841 = vmatpush1.msra.mxu0 0.0
        %1842 = vmatprep.subr.mxu0 0.0
        %1843 = vmatpush1.msra.mxu0 0.0
        %1844 = vmatprep.subr.mxu0 0.0
        %1845 = vmatpush1.msra.mxu0 0.0
        %1846 = vmatprep.subr.mxu0 0.0
        %1847 = vmatpush1.msra.mxu0 0.0
        %1848 = vmatprep.subr.mxu0 0.0
        %1849 = vmatpush1.msra.mxu0 0.0
        %1850 = vmatprep.subr.mxu0 0.0
        %1851 = vmatpush1.msra.mxu0 0.0
        %1852 = vmatprep.subr.mxu0 0.0
        %1853 = vmatpush1.msra.mxu0 0.0
        %1854 = vmatprep.subr.mxu0 0.0
        %1855 = vmatpush1.msra.mxu0 0.0
        %1856 = vmatprep.subr.mxu0 0.0
        %1857 = vmatpush1.msra.mxu0 0.0
        %1858 = vmatprep.subr.mxu0 0.0
        %1859 = vmatpush1.msra.mxu0 0.0
        %1860 = vmatprep.subr.mxu0 0.0
        %1861 = vmatpush1.msra.mxu0 0.0
        %1862 = vmatprep.subr.mxu0 0.0
        %1863 = vmatpush1.msra.mxu0 0.0
        %1864 = vmatprep.subr.mxu0 0.0
        %1865 = vmatpush1.msra.mxu0 0.0
        %1866 = vmatprep.subr.mxu0 0.0
        %1867 = vmatpush1.msra.mxu0 0.0
        %1868 = vmatprep.subr.mxu0 0.0
        %1869 = vmatpush1.msra.mxu0 0.0
        %1870 = vmatprep.subr.mxu0 0.0
        %1871 = vmatpush1.msra.mxu0 0.0
        %1872 = vmatprep.subr.mxu0 0.0
        %1873 = vmatpush1.msra.mxu0 0.0
        %1874 = vmatprep.mubr.f32.mxu0 0.0
        %v1875 = vand.u32 %v1532, 4294901760
        %1876 = vmatmul.mubr.f32.gmra.mrb[0].mxu0 %v1875
        %v1877 = vpop.f32.mrb[0].mxu0
        %v1878 = vadd.f32 %v1652, %v1877
        %v1879 = vpop.f32.mrb[0].mxu0
        %1880 = vmatprep.mubr.f32.mxu0 0.0
        %v1881 = vand.u32 %v1535, 4294901760
        %1882 = vmatmul.mubr.f32.gmra.mrb[0].mxu0 %v1881
        %v1883 = vpop.f32.mrb[0].mxu0
        %v1884 = vadd.f32 %v1662, %v1883
        %v1885 = vpop.f32.mrb[0].mxu0
        %1886 = vmatprep.mubr.f32.mxu0 0.0
        %v1887 = vand.u32 %v1538, 4294901760
        %1888 = vmatmul.mubr.f32.gmra.mrb[0].mxu0 %v1887
        %v1889 = vpop.f32.mrb[0].mxu0
        %v1890 = vadd.f32 %v1672, %v1889
        %v1891 = vpop.f32.mrb[0].mxu0
        %1892 = vmatprep.mubr.f32.mxu0 0.0
        %v1893 = vand.u32 %v1541, 4294901760
        %1894 = vmatmul.mubr.f32.gmra.mrb[0].mxu0 %v1893
        %v1895 = vpop.f32.mrb[0].mxu0
        %v1896 = vadd.f32 %v1682, %v1895
        %v1897 = vpop.f32.mrb[0].mxu0
        %1898 = vmatprep.mubr.f32.mxu0 0.0
        %v1899 = vand.u32 %v1544, 4294901760
        %1900 = vmatmul.mubr.f32.gmra.mrb[0].mxu0 %v1899
        %v1901 = vpop.f32.mrb[0].mxu0
        %v1902 = vadd.f32 %v1692, %v1901
        %v1903 = vpop.f32.mrb[0].mxu0
        %1904 = vmatprep.mubr.f32.mxu0 0.0
        %v1905 = vand.u32 %v1547, 4294901760
        %1906 = vmatmul.mubr.f32.gmra.mrb[0].mxu0 %v1905
        %v1907 = vpop.f32.mrb[0].mxu0
        %v1908 = vadd.f32 %v1702, %v1907
        %v1909 = vpop.f32.mrb[0].mxu0
        %1910 = vmatprep.mubr.f32.mxu0 0.0
        %v1911 = vand.u32 %v1550, 4294901760
        %1912 = vmatmul.mubr.f32.gmra.mrb[0].mxu0 %v1911
        %v1913 = vpop.f32.mrb[0].mxu0
        %v1914 = vadd.f32 %v1712, %v1913
        %v1915 = vpop.f32.mrb[0].mxu0
        %1916 = vmatprep.mubr.f32.mxu0 0.0
        %v1917 = vand.u32 %v1553, 4294901760
        %1918 = vmatmul.mubr.f32.gmra.mrb[0].mxu0 %v1917
        %v1919 = vpop.f32.mrb[0].mxu0
        %v1920 = vadd.f32 %v1722, %v1919
        %v1921 = vpop.f32.mrb[0].mxu0
        %1922 = vmatprep.mubr.f32.mxu0 0.0
        %v1923 = vand.u32 %v1556, 4294901760
        %1924 = vmatmul.mubr.f32.gmra.mrb[0].mxu0 %v1923
        %v1925 = vpop.f32.mrb[0].mxu0
        %v1926 = vadd.f32 %v1732, %v1925
        %v1927 = vpop.f32.mrb[0].mxu0
        %1928 = vmatprep.mubr.f32.mxu0 0.0
        %v1929 = vand.u32 %v1559, 4294901760
        %1930 = vmatmul.mubr.f32.gmra.mrb[0].mxu0 %v1929
        %v1931 = vpop.f32.mrb[0].mxu0
        %v1932 = vadd.f32 %v1742, %v1931
        %v1933 = vpop.f32.mrb[0].mxu0
        %1934 = vmatprep.mubr.f32.mxu0 0.0
        %v1935 = vand.u32 %v1562, 4294901760
        %1936 = vmatmul.mubr.f32.gmra.mrb[0].mxu0 %v1935
        %v1937 = vpop.f32.mrb[0].mxu0
        %v1938 = vadd.f32 %v1752, %v1937
        %v1939 = vpop.f32.mrb[0].mxu0
        %1940 = vmatprep.mubr.f32.mxu0 0.0
        %v1941 = vand.u32 %v1565, 4294901760
        %1942 = vmatmul.mubr.f32.gmra.mrb[0].mxu0 %v1941
        %v1943 = vpop.f32.mrb[0].mxu0
        %v1944 = vadd.f32 %v1762, %v1943
        %v1945 = vpop.f32.mrb[0].mxu0
        %1946 = vmatprep.mubr.f32.mxu0 0.0
        %v1947 = vand.u32 %v1568, 4294901760
        %1948 = vmatmul.mubr.f32.gmra.mrb[0].mxu0 %v1947
        %v1949 = vpop.f32.mrb[0].mxu0
        %v1950 = vadd.f32 %v1772, %v1949
        %v1951 = vpop.f32.mrb[0].mxu0
        %1952 = vmatprep.mubr.f32.mxu0 0.0
        %v1953 = vand.u32 %v1571, 4294901760
        %1954 = vmatmul.mubr.f32.gmra.mrb[0].mxu0 %v1953
        %v1955 = vpop.f32.mrb[0].mxu0
        %v1956 = vadd.f32 %v1782, %v1955
        %v1957 = vpop.f32.mrb[0].mxu0
        %1958 = vmatprep.mubr.f32.mxu0 0.0
        %v1959 = vand.u32 %v1574, 4294901760
        %1960 = vmatmul.mubr.f32.gmra.mrb[0].mxu0 %v1959
        %v1961 = vpop.f32.mrb[0].mxu0
        %v1962 = vadd.f32 %v1792, %v1961
        %v1963 = vpop.f32.mrb[0].mxu0
        %1964 = vmatprep.mubr.f32.mxu0 0.0
        %v1965 = vand.u32 %v1577, 4294901760
        %1966 = vmatmul.mubr.f32.gmra.mrb[0].mxu0 %v1965
        %v1967 = vpop.f32.mrb[0].mxu0
        %v1968 = vadd.f32 %v1802, %v1967
        %v1969 = vpop.f32.mrb[0].mxu0
        %1970 = vdwg.mxu0
        %1971 = vmatprep.subr.mxu0 0.0
        %v1972 = vand.u32 %v322, 4294901760
        %v1973 = vsub.f32 %v322, %v1972
        %1974 = vmatpush1.msra.mxu0 %v1973
        %1975 = vmatprep.subr.mxu0 0.0
        %1976 = vmatpush1.msra.mxu0 0.0
        %1977 = vmatprep.subr.mxu0 0.0
        %1978 = vmatpush1.msra.mxu0 0.0
        %1979 = vmatprep.subr.mxu0 0.0
        %1980 = vmatpush1.msra.mxu0 0.0
        %1981 = vmatprep.subr.mxu0 0.0
        %1982 = vmatpush1.msra.mxu0 0.0
        %1983 = vmatprep.subr.mxu0 0.0
        %1984 = vmatpush1.msra.mxu0 0.0
        %1985 = vmatprep.subr.mxu0 0.0
        %1986 = vmatpush1.msra.mxu0 0.0
        %1987 = vmatprep.subr.mxu0 0.0
        %1988 = vmatpush1.msra.mxu0 0.0
        %1989 = vmatprep.subr.mxu0 0.0
        %1990 = vmatpush1.msra.mxu0 0.0
        %1991 = vmatprep.subr.mxu0 0.0
        %1992 = vmatpush1.msra.mxu0 0.0
        %1993 = vmatprep.subr.mxu0 0.0
        %1994 = vmatpush1.msra.mxu0 0.0
        %1995 = vmatprep.subr.mxu0 0.0
        %1996 = vmatpush1.msra.mxu0 0.0
        %1997 = vmatprep.subr.mxu0 0.0
        %1998 = vmatpush1.msra.mxu0 0.0
        %1999 = vmatprep.subr.mxu0 0.0
        %2000 = vmatpush1.msra.mxu0 0.0
        %2001 = vmatprep.subr.mxu0 0.0
        %2002 = vmatpush1.msra.mxu0 0.0
        %2003 = vmatprep.subr.mxu0 0.0
        %2004 = vmatpush1.msra.mxu0 0.0
        %2005 = vmatprep.subr.mxu0 0.0
        %2006 = vmatpush1.msra.mxu0 0.0
        %2007 = vmatprep.subr.mxu0 0.0
        %2008 = vmatpush1.msra.mxu0 0.0
        %2009 = vmatprep.subr.mxu0 0.0
        %2010 = vmatpush1.msra.mxu0 0.0
        %2011 = vmatprep.subr.mxu0 0.0
        %2012 = vmatpush1.msra.mxu0 0.0
        %2013 = vmatprep.subr.mxu0 0.0
        %2014 = vmatpush1.msra.mxu0 0.0
        %2015 = vmatprep.subr.mxu0 0.0
        %2016 = vmatpush1.msra.mxu0 0.0
        %2017 = vmatprep.subr.mxu0 0.0
        %2018 = vmatpush1.msra.mxu0 0.0
        %2019 = vmatprep.subr.mxu0 0.0
        %2020 = vmatpush1.msra.mxu0 0.0
        %2021 = vmatprep.subr.mxu0 0.0
        %2022 = vmatpush1.msra.mxu0 0.0
        %2023 = vmatprep.subr.mxu0 0.0
        %2024 = vmatpush1.msra.mxu0 0.0
        %2025 = vmatprep.subr.mxu0 0.0
        %2026 = vmatpush1.msra.mxu0 0.0
        %2027 = vmatprep.subr.mxu0 0.0
        %2028 = vmatpush1.msra.mxu0 0.0
        %2029 = vmatprep.subr.mxu0 0.0
        %2030 = vmatpush1.msra.mxu0 0.0
        %2031 = vmatprep.subr.mxu0 0.0
        %2032 = vmatpush1.msra.mxu0 0.0
        %2033 = vmatprep.subr.mxu0 0.0
        %2034 = vmatpush1.msra.mxu0 0.0
        %2035 = vmatprep.subr.mxu0 0.0
        %2036 = vmatpush1.msra.mxu0 0.0
        %2037 = vmatprep.mubr.f32.mxu0 0.0
        %v2038 = vand.u32 %v1532, 4294901760
        %v2039 = vsub.f32 %v1532, %v2038
        %2040 = vmatmul.mubr.f32.gmra.mrb[0].mxu0 %v2039
        %v2041 = vpop.f32.mrb[0].mxu0
        %v2042 = vadd.f32 %v1878, %v2041
        %v2043 = vpop.f32.mrb[0].mxu0
        %2044 = vmatprep.mubr.f32.mxu0 0.0
        %v2045 = vand.u32 %v1535, 4294901760
        %v2046 = vsub.f32 %v1535, %v2045
        %2047 = vmatmul.mubr.f32.gmra.mrb[0].mxu0 %v2046
        %v2048 = vpop.f32.mrb[0].mxu0
        %v2049 = vadd.f32 %v1884, %v2048
        %v2050 = vpop.f32.mrb[0].mxu0
        %2051 = vmatprep.mubr.f32.mxu0 0.0
        %v2052 = vand.u32 %v1538, 4294901760
        %v2053 = vsub.f32 %v1538, %v2052
        %2054 = vmatmul.mubr.f32.gmra.mrb[0].mxu0 %v2053
        %v2055 = vpop.f32.mrb[0].mxu0
        %v2056 = vadd.f32 %v1890, %v2055
        %v2057 = vpop.f32.mrb[0].mxu0
        %2058 = vmatprep.mubr.f32.mxu0 0.0
        %v2059 = vand.u32 %v1541, 4294901760
        %v2060 = vsub.f32 %v1541, %v2059
        %2061 = vmatmul.mubr.f32.gmra.mrb[0].mxu0 %v2060
        %v2062 = vpop.f32.mrb[0].mxu0
        %v2063 = vadd.f32 %v1896, %v2062
        %v2064 = vpop.f32.mrb[0].mxu0
        %2065 = vmatprep.mubr.f32.mxu0 0.0
        %v2066 = vand.u32 %v1544, 4294901760
        %v2067 = vsub.f32 %v1544, %v2066
        %2068 = vmatmul.mubr.f32.gmra.mrb[0].mxu0 %v2067
        %v2069 = vpop.f32.mrb[0].mxu0
        %v2070 = vadd.f32 %v1902, %v2069
        %v2071 = vpop.f32.mrb[0].mxu0
        %2072 = vmatprep.mubr.f32.mxu0 0.0
        %v2073 = vand.u32 %v1547, 4294901760
        %v2074 = vsub.f32 %v1547, %v2073
        %2075 = vmatmul.mubr.f32.gmra.mrb[0].mxu0 %v2074
        %v2076 = vpop.f32.mrb[0].mxu0
        %v2077 = vadd.f32 %v1908, %v2076
        %v2078 = vpop.f32.mrb[0].mxu0
        %2079 = vmatprep.mubr.f32.mxu0 0.0
        %v2080 = vand.u32 %v1550, 4294901760
        %v2081 = vsub.f32 %v1550, %v2080
        %2082 = vmatmul.mubr.f32.gmra.mrb[0].mxu0 %v2081
        %v2083 = vpop.f32.mrb[0].mxu0
        %v2084 = vadd.f32 %v1914, %v2083
        %v2085 = vpop.f32.mrb[0].mxu0
        %2086 = vmatprep.mubr.f32.mxu0 0.0
        %v2087 = vand.u32 %v1553, 4294901760
        %v2088 = vsub.f32 %v1553, %v2087
        %2089 = vmatmul.mubr.f32.gmra.mrb[0].mxu0 %v2088
        %v2090 = vpop.f32.mrb[0].mxu0
        %v2091 = vadd.f32 %v1920, %v2090
        %v2092 = vpop.f32.mrb[0].mxu0
        %2093 = vmatprep.mubr.f32.mxu0 0.0
        %v2094 = vand.u32 %v1556, 4294901760
        %v2095 = vsub.f32 %v1556, %v2094
        %2096 = vmatmul.mubr.f32.gmra.mrb[0].mxu0 %v2095
        %v2097 = vpop.f32.mrb[0].mxu0
        %v2098 = vadd.f32 %v1926, %v2097
        %v2099 = vpop.f32.mrb[0].mxu0
        %2100 = vmatprep.mubr.f32.mxu0 0.0
        %v2101 = vand.u32 %v1559, 4294901760
        %v2102 = vsub.f32 %v1559, %v2101
        %2103 = vmatmul.mubr.f32.gmra.mrb[0].mxu0 %v2102
        %v2104 = vpop.f32.mrb[0].mxu0
        %v2105 = vadd.f32 %v1932, %v2104
        %v2106 = vpop.f32.mrb[0].mxu0
        %2107 = vmatprep.mubr.f32.mxu0 0.0
        %v2108 = vand.u32 %v1562, 4294901760
        %v2109 = vsub.f32 %v1562, %v2108
        %2110 = vmatmul.mubr.f32.gmra.mrb[0].mxu0 %v2109
        %v2111 = vpop.f32.mrb[0].mxu0
        %v2112 = vadd.f32 %v1938, %v2111
        %v2113 = vpop.f32.mrb[0].mxu0
        %2114 = vmatprep.mubr.f32.mxu0 0.0
        %v2115 = vand.u32 %v1565, 4294901760
        %v2116 = vsub.f32 %v1565, %v2115
        %2117 = vmatmul.mubr.f32.gmra.mrb[0].mxu0 %v2116
        %v2118 = vpop.f32.mrb[0].mxu0
        %v2119 = vadd.f32 %v1944, %v2118
        %v2120 = vpop.f32.mrb[0].mxu0
        %2121 = vmatprep.mubr.f32.mxu0 0.0
        %v2122 = vand.u32 %v1568, 4294901760
        %v2123 = vsub.f32 %v1568, %v2122
        %2124 = vmatmul.mubr.f32.gmra.mrb[0].mxu0 %v2123
        %v2125 = vpop.f32.mrb[0].mxu0
        %v2126 = vadd.f32 %v1950, %v2125
        %v2127 = vpop.f32.mrb[0].mxu0
        %2128 = vmatprep.mubr.f32.mxu0 0.0
        %v2129 = vand.u32 %v1571, 4294901760
        %v2130 = vsub.f32 %v1571, %v2129
        %2131 = vmatmul.mubr.f32.gmra.mrb[0].mxu0 %v2130
        %v2132 = vpop.f32.mrb[0].mxu0
        %v2133 = vadd.f32 %v1956, %v2132
        %v2134 = vpop.f32.mrb[0].mxu0
        %2135 = vmatprep.mubr.f32.mxu0 0.0
        %v2136 = vand.u32 %v1574, 4294901760
        %v2137 = vsub.f32 %v1574, %v2136
        %2138 = vmatmul.mubr.f32.gmra.mrb[0].mxu0 %v2137
        %v2139 = vpop.f32.mrb[0].mxu0
        %v2140 = vadd.f32 %v1962, %v2139
        %v2141 = vpop.f32.mrb[0].mxu0
        %2142 = vmatprep.mubr.f32.mxu0 0.0
        %v2143 = vand.u32 %v1577, 4294901760
        %v2144 = vsub.f32 %v1577, %v2143
        %2145 = vmatmul.mubr.f32.gmra.mrb[0].mxu0 %v2144
        %v2146 = vpop.f32.mrb[0].mxu0
        %v2147 = vadd.f32 %v1968, %v2146
        %v2148 = vpop.f32.mrb[0].mxu0
        %2149 = vdwg.mxu0
        %2150 = vmatprep.subr.mxu0 0.0
        %v2151 = vand.u32 %v322, 4294901760
        %2152 = vmatpush1.msra.mxu0 %v2151
        %2153 = vmatprep.subr.mxu0 0.0
        %2154 = vmatpush1.msra.mxu0 0.0
        %2155 = vmatprep.subr.mxu0 0.0
        %2156 = vmatpush1.msra.mxu0 0.0
        %2157 = vmatprep.subr.mxu0 0.0
        %2158 = vmatpush1.msra.mxu0 0.0
        %2159 = vmatprep.subr.mxu0 0.0
        %2160 = vmatpush1.msra.mxu0 0.0
        %2161 = vmatprep.subr.mxu0 0.0
        %2162 = vmatpush1.msra.mxu0 0.0
        %2163 = vmatprep.subr.mxu0 0.0
        %2164 = vmatpush1.msra.mxu0 0.0
        %2165 = vmatprep.subr.mxu0 0.0
        %2166 = vmatpush1.msra.mxu0 0.0
        %2167 = vmatprep.subr.mxu0 0.0
        %2168 = vmatpush1.msra.mxu0 0.0
        %2169 = vmatprep.subr.mxu0 0.0
        %2170 = vmatpush1.msra.mxu0 0.0
        %2171 = vmatprep.subr.mxu0 0.0
        %2172 = vmatpush1.msra.mxu0 0.0
        %2173 = vmatprep.subr.mxu0 0.0
        %2174 = vmatpush1.msra.mxu0 0.0
        %2175 = vmatprep.subr.mxu0 0.0
        %2176 = vmatpush1.msra.mxu0 0.0
        %2177 = vmatprep.subr.mxu0 0.0
        %2178 = vmatpush1.msra.mxu0 0.0
        %2179 = vmatprep.subr.mxu0 0.0
        %2180 = vmatpush1.msra.mxu0 0.0
        %2181 = vmatprep.subr.mxu0 0.0
        %2182 = vmatpush1.msra.mxu0 0.0
        %2183 = vmatprep.subr.mxu0 0.0
        %2184 = vmatpush1.msra.mxu0 0.0
        %2185 = vmatprep.subr.mxu0 0.0
        %2186 = vmatpush1.msra.mxu0 0.0
        %2187 = vmatprep.subr.mxu0 0.0
        %2188 = vmatpush1.msra.mxu0 0.0
        %2189 = vmatprep.subr.mxu0 0.0
        %2190 = vmatpush1.msra.mxu0 0.0
        %2191 = vmatprep.subr.mxu0 0.0
        %2192 = vmatpush1.msra.mxu0 0.0
        %2193 = vmatprep.subr.mxu0 0.0
        %2194 = vmatpush1.msra.mxu0 0.0
        %2195 = vmatprep.subr.mxu0 0.0
        %2196 = vmatpush1.msra.mxu0 0.0
        %2197 = vmatprep.subr.mxu0 0.0
        %2198 = vmatpush1.msra.mxu0 0.0
        %2199 = vmatprep.subr.mxu0 0.0
        %2200 = vmatpush1.msra.mxu0 0.0
        %2201 = vmatprep.subr.mxu0 0.0
        %2202 = vmatpush1.msra.mxu0 0.0
        %2203 = vmatprep.subr.mxu0 0.0
        %2204 = vmatpush1.msra.mxu0 0.0
        %2205 = vmatprep.subr.mxu0 0.0
        %2206 = vmatpush1.msra.mxu0 0.0
        %2207 = vmatprep.subr.mxu0 0.0
        %2208 = vmatpush1.msra.mxu0 0.0
        %2209 = vmatprep.subr.mxu0 0.0
        %2210 = vmatpush1.msra.mxu0 0.0
        %2211 = vmatprep.subr.mxu0 0.0
        %2212 = vmatpush1.msra.mxu0 0.0
        %2213 = vmatprep.subr.mxu0 0.0
        %2214 = vmatpush1.msra.mxu0 0.0
        %2215 = vmatprep.mubr.f32.mxu0 0.0
        %v2216 = vand.u32 %v1532, 4294901760
        %v2217 = vsub.f32 %v1532, %v2216
        %v2218 = vand.u32 %v2217, 4294901760
        %2219 = vmatmul.mubr.f32.gmra.mrb[0].mxu0 %v2218
        %v2220 = vpop.f32.mrb[0].mxu0
        %v2221 = vadd.f32 %v2042, %v2220
        %v2222 = vpop.f32.mrb[0].mxu0
        %2223 = vmatprep.mubr.f32.mxu0 0.0
        %v2224 = vand.u32 %v1535, 4294901760
        %v2225 = vsub.f32 %v1535, %v2224
        %v2226 = vand.u32 %v2225, 4294901760
        %2227 = vmatmul.mubr.f32.gmra.mrb[0].mxu0 %v2226
        %v2228 = vpop.f32.mrb[0].mxu0
        %v2229 = vadd.f32 %v2049, %v2228
        %v2230 = vpop.f32.mrb[0].mxu0
        %2231 = vmatprep.mubr.f32.mxu0 0.0
        %v2232 = vand.u32 %v1538, 4294901760
        %v2233 = vsub.f32 %v1538, %v2232
        %v2234 = vand.u32 %v2233, 4294901760
        %2235 = vmatmul.mubr.f32.gmra.mrb[0].mxu0 %v2234
        %v2236 = vpop.f32.mrb[0].mxu0
        %v2237 = vadd.f32 %v2056, %v2236
        %v2238 = vpop.f32.mrb[0].mxu0
        %2239 = vmatprep.mubr.f32.mxu0 0.0
        %v2240 = vand.u32 %v1541, 4294901760
        %v2241 = vsub.f32 %v1541, %v2240
        %v2242 = vand.u32 %v2241, 4294901760
        %2243 = vmatmul.mubr.f32.gmra.mrb[0].mxu0 %v2242
        %v2244 = vpop.f32.mrb[0].mxu0
        %v2245 = vadd.f32 %v2063, %v2244
        %v2246 = vpop.f32.mrb[0].mxu0
        %2247 = vmatprep.mubr.f32.mxu0 0.0
        %v2248 = vand.u32 %v1544, 4294901760
        %v2249 = vsub.f32 %v1544, %v2248
        %v2250 = vand.u32 %v2249, 4294901760
        %2251 = vmatmul.mubr.f32.gmra.mrb[0].mxu0 %v2250
        %v2252 = vpop.f32.mrb[0].mxu0
        %v2253 = vadd.f32 %v2070, %v2252
        %v2254 = vpop.f32.mrb[0].mxu0
        %2255 = vmatprep.mubr.f32.mxu0 0.0
        %v2256 = vand.u32 %v1547, 4294901760
        %v2257 = vsub.f32 %v1547, %v2256
        %v2258 = vand.u32 %v2257, 4294901760
        %2259 = vmatmul.mubr.f32.gmra.mrb[0].mxu0 %v2258
        %v2260 = vpop.f32.mrb[0].mxu0
        %v2261 = vadd.f32 %v2077, %v2260
        %v2262 = vpop.f32.mrb[0].mxu0
        %2263 = vmatprep.mubr.f32.mxu0 0.0
        %v2264 = vand.u32 %v1550, 4294901760
        %v2265 = vsub.f32 %v1550, %v2264
        %v2266 = vand.u32 %v2265, 4294901760
        %2267 = vmatmul.mubr.f32.gmra.mrb[0].mxu0 %v2266
        %v2268 = vpop.f32.mrb[0].mxu0
        %v2269 = vadd.f32 %v2084, %v2268
        %v2270 = vpop.f32.mrb[0].mxu0
        %2271 = vmatprep.mubr.f32.mxu0 0.0
        %v2272 = vand.u32 %v1553, 4294901760
        %v2273 = vsub.f32 %v1553, %v2272
        %v2274 = vand.u32 %v2273, 4294901760
        %2275 = vmatmul.mubr.f32.gmra.mrb[0].mxu0 %v2274
        %v2276 = vpop.f32.mrb[0].mxu0
        %v2277 = vadd.f32 %v2091, %v2276
        %v2278 = vpop.f32.mrb[0].mxu0
        %2279 = vmatprep.mubr.f32.mxu0 0.0
        %v2280 = vand.u32 %v1556, 4294901760
        %v2281 = vsub.f32 %v1556, %v2280
        %v2282 = vand.u32 %v2281, 4294901760
        %2283 = vmatmul.mubr.f32.gmra.mrb[0].mxu0 %v2282
        %v2284 = vpop.f32.mrb[0].mxu0
        %v2285 = vadd.f32 %v2098, %v2284
        %v2286 = vpop.f32.mrb[0].mxu0
        %2287 = vmatprep.mubr.f32.mxu0 0.0
        %v2288 = vand.u32 %v1559, 4294901760
        %v2289 = vsub.f32 %v1559, %v2288
        %v2290 = vand.u32 %v2289, 4294901760
        %2291 = vmatmul.mubr.f32.gmra.mrb[0].mxu0 %v2290
        %v2292 = vpop.f32.mrb[0].mxu0
        %v2293 = vadd.f32 %v2105, %v2292
        %v2294 = vpop.f32.mrb[0].mxu0
        %2295 = vmatprep.mubr.f32.mxu0 0.0
        %v2296 = vand.u32 %v1562, 4294901760
        %v2297 = vsub.f32 %v1562, %v2296
        %v2298 = vand.u32 %v2297, 4294901760
        %2299 = vmatmul.mubr.f32.gmra.mrb[0].mxu0 %v2298
        %v2300 = vpop.f32.mrb[0].mxu0
        %v2301 = vadd.f32 %v2112, %v2300
        %v2302 = vpop.f32.mrb[0].mxu0
        %2303 = vmatprep.mubr.f32.mxu0 0.0
        %v2304 = vand.u32 %v1565, 4294901760
        %v2305 = vsub.f32 %v1565, %v2304
        %v2306 = vand.u32 %v2305, 4294901760
        %2307 = vmatmul.mubr.f32.gmra.mrb[0].mxu0 %v2306
        %v2308 = vpop.f32.mrb[0].mxu0
        %v2309 = vadd.f32 %v2119, %v2308
        %v2310 = vpop.f32.mrb[0].mxu0
        %2311 = vmatprep.mubr.f32.mxu0 0.0
        %v2312 = vand.u32 %v1568, 4294901760
        %v2313 = vsub.f32 %v1568, %v2312
        %v2314 = vand.u32 %v2313, 4294901760
        %2315 = vmatmul.mubr.f32.gmra.mrb[0].mxu0 %v2314
        %v2316 = vpop.f32.mrb[0].mxu0
        %v2317 = vadd.f32 %v2126, %v2316
        %v2318 = vpop.f32.mrb[0].mxu0
        %2319 = vmatprep.mubr.f32.mxu0 0.0
        %v2320 = vand.u32 %v1571, 4294901760
        %v2321 = vsub.f32 %v1571, %v2320
        %v2322 = vand.u32 %v2321, 4294901760
        %2323 = vmatmul.mubr.f32.gmra.mrb[0].mxu0 %v2322
        %v2324 = vpop.f32.mrb[0].mxu0
        %v2325 = vadd.f32 %v2133, %v2324
        %v2326 = vpop.f32.mrb[0].mxu0
        %2327 = vmatprep.mubr.f32.mxu0 0.0
        %v2328 = vand.u32 %v1574, 4294901760
        %v2329 = vsub.f32 %v1574, %v2328
        %v2330 = vand.u32 %v2329, 4294901760
        %2331 = vmatmul.mubr.f32.gmra.mrb[0].mxu0 %v2330
        %v2332 = vpop.f32.mrb[0].mxu0
        %v2333 = vadd.f32 %v2140, %v2332
        %v2334 = vpop.f32.mrb[0].mxu0
        %2335 = vmatprep.mubr.f32.mxu0 0.0
        %v2336 = vand.u32 %v1577, 4294901760
        %v2337 = vsub.f32 %v1577, %v2336
        %v2338 = vand.u32 %v2337, 4294901760
        %2339 = vmatmul.mubr.f32.gmra.mrb[0].mxu0 %v2338
        %v2340 = vpop.f32.mrb[0].mxu0
        %v2341 = vadd.f32 %v2147, %v2340
        %v2342 = vpop.f32.mrb[0].mxu0
        %2343 = vdwg.mxu0
        %2344 = vmatprep.subr.mxu0 0.0
        %v2345 = vand.u32 %v322, 4294901760
        %v2346 = vsub.f32 %v322, %v2345
        %v2347 = vand.u32 %v2346, 4294901760
        %2348 = vmatpush1.msra.mxu0 %v2347
        %2349 = vmatprep.subr.mxu0 0.0
        %2350 = vmatpush1.msra.mxu0 0.0
        %2351 = vmatprep.subr.mxu0 0.0
        %2352 = vmatpush1.msra.mxu0 0.0
        %2353 = vmatprep.subr.mxu0 0.0
        %2354 = vmatpush1.msra.mxu0 0.0
        %2355 = vmatprep.subr.mxu0 0.0
        %2356 = vmatpush1.msra.mxu0 0.0
        %2357 = vmatprep.subr.mxu0 0.0
        %2358 = vmatpush1.msra.mxu0 0.0
        %2359 = vmatprep.subr.mxu0 0.0
        %2360 = vmatpush1.msra.mxu0 0.0
        %2361 = vmatprep.subr.mxu0 0.0
        %2362 = vmatpush1.msra.mxu0 0.0
        %2363 = vmatprep.subr.mxu0 0.0
        %2364 = vmatpush1.msra.mxu0 0.0
        %2365 = vmatprep.subr.mxu0 0.0
        %2366 = vmatpush1.msra.mxu0 0.0
        %2367 = vmatprep.subr.mxu0 0.0
        %2368 = vmatpush1.msra.mxu0 0.0
        %2369 = vmatprep.subr.mxu0 0.0
        %2370 = vmatpush1.msra.mxu0 0.0
        %2371 = vmatprep.subr.mxu0 0.0
        %2372 = vmatpush1.msra.mxu0 0.0
        %2373 = vmatprep.subr.mxu0 0.0
        %2374 = vmatpush1.msra.mxu0 0.0
        %2375 = vmatprep.subr.mxu0 0.0
        %2376 = vmatpush1.msra.mxu0 0.0
        %2377 = vmatprep.subr.mxu0 0.0
        %2378 = vmatpush1.msra.mxu0 0.0
        %2379 = vmatprep.subr.mxu0 0.0
        %2380 = vmatpush1.msra.mxu0 0.0
        %2381 = vmatprep.subr.mxu0 0.0
        %2382 = vmatpush1.msra.mxu0 0.0
        %2383 = vmatprep.subr.mxu0 0.0
        %2384 = vmatpush1.msra.mxu0 0.0
        %2385 = vmatprep.subr.mxu0 0.0
        %2386 = vmatpush1.msra.mxu0 0.0
        %2387 = vmatprep.subr.mxu0 0.0
        %2388 = vmatpush1.msra.mxu0 0.0
        %2389 = vmatprep.subr.mxu0 0.0
        %2390 = vmatpush1.msra.mxu0 0.0
        %2391 = vmatprep.subr.mxu0 0.0
        %2392 = vmatpush1.msra.mxu0 0.0
        %2393 = vmatprep.subr.mxu0 0.0
        %2394 = vmatpush1.msra.mxu0 0.0
        %2395 = vmatprep.subr.mxu0 0.0
        %2396 = vmatpush1.msra.mxu0 0.0
        %2397 = vmatprep.subr.mxu0 0.0
        %2398 = vmatpush1.msra.mxu0 0.0
        %2399 = vmatprep.subr.mxu0 0.0
        %2400 = vmatpush1.msra.mxu0 0.0
        %2401 = vmatprep.subr.mxu0 0.0
        %2402 = vmatpush1.msra.mxu0 0.0
        %2403 = vmatprep.subr.mxu0 0.0
        %2404 = vmatpush1.msra.mxu0 0.0
        %2405 = vmatprep.subr.mxu0 0.0
        %2406 = vmatpush1.msra.mxu0 0.0
        %2407 = vmatprep.subr.mxu0 0.0
        %2408 = vmatpush1.msra.mxu0 0.0
        %2409 = vmatprep.subr.mxu0 0.0
        %2410 = vmatpush1.msra.mxu0 0.0
        %2411 = vmatprep.mubr.f32.mxu0 0.0
        %v2412 = vand.u32 %v1532, 4294901760
        %2413 = vmatmul.mubr.f32.gmra.mrb[0].mxu0 %v2412
        %v2414 = vpop.f32.mrb[0].mxu0
        %v2415 = vadd.f32 %v2221, %v2414
        %v2416 = vpop.f32.mrb[0].mxu0
        %2417 = vmatprep.mubr.f32.mxu0 0.0
        %v2418 = vand.u32 %v1535, 4294901760
        %2419 = vmatmul.mubr.f32.gmra.mrb[0].mxu0 %v2418
        %v2420 = vpop.f32.mrb[0].mxu0
        %v2421 = vadd.f32 %v2229, %v2420
        %v2422 = vpop.f32.mrb[0].mxu0
        %2423 = vmatprep.mubr.f32.mxu0 0.0
        %v2424 = vand.u32 %v1538, 4294901760
        %2425 = vmatmul.mubr.f32.gmra.mrb[0].mxu0 %v2424
        %v2426 = vpop.f32.mrb[0].mxu0
        %v2427 = vadd.f32 %v2237, %v2426
        %v2428 = vpop.f32.mrb[0].mxu0
        %2429 = vmatprep.mubr.f32.mxu0 0.0
        %v2430 = vand.u32 %v1541, 4294901760
        %2431 = vmatmul.mubr.f32.gmra.mrb[0].mxu0 %v2430
        %v2432 = vpop.f32.mrb[0].mxu0
        %v2433 = vadd.f32 %v2245, %v2432
        %v2434 = vpop.f32.mrb[0].mxu0
        %2435 = vmatprep.mubr.f32.mxu0 0.0
        %v2436 = vand.u32 %v1544, 4294901760
        %2437 = vmatmul.mubr.f32.gmra.mrb[0].mxu0 %v2436
        %v2438 = vpop.f32.mrb[0].mxu0
        %v2439 = vadd.f32 %v2253, %v2438
        %v2440 = vpop.f32.mrb[0].mxu0
        %2441 = vmatprep.mubr.f32.mxu0 0.0
        %v2442 = vand.u32 %v1547, 4294901760
        %2443 = vmatmul.mubr.f32.gmra.mrb[0].mxu0 %v2442
        %v2444 = vpop.f32.mrb[0].mxu0
        %v2445 = vadd.f32 %v2261, %v2444
        %v2446 = vpop.f32.mrb[0].mxu0
        %2447 = vmatprep.mubr.f32.mxu0 0.0
        %v2448 = vand.u32 %v1550, 4294901760
        %2449 = vmatmul.mubr.f32.gmra.mrb[0].mxu0 %v2448
        %v2450 = vpop.f32.mrb[0].mxu0
        %v2451 = vadd.f32 %v2269, %v2450
        %v2452 = vpop.f32.mrb[0].mxu0
        %2453 = vmatprep.mubr.f32.mxu0 0.0
        %v2454 = vand.u32 %v1553, 4294901760
        %2455 = vmatmul.mubr.f32.gmra.mrb[0].mxu0 %v2454
        %v2456 = vpop.f32.mrb[0].mxu0
        %v2457 = vadd.f32 %v2277, %v2456
        %v2458 = vpop.f32.mrb[0].mxu0
        %2459 = vmatprep.mubr.f32.mxu0 0.0
        %v2460 = vand.u32 %v1556, 4294901760
        %2461 = vmatmul.mubr.f32.gmra.mrb[0].mxu0 %v2460
        %v2462 = vpop.f32.mrb[0].mxu0
        %v2463 = vadd.f32 %v2285, %v2462
        %v2464 = vpop.f32.mrb[0].mxu0
        %2465 = vmatprep.mubr.f32.mxu0 0.0
        %v2466 = vand.u32 %v1559, 4294901760
        %2467 = vmatmul.mubr.f32.gmra.mrb[0].mxu0 %v2466
        %v2468 = vpop.f32.mrb[0].mxu0
        %v2469 = vadd.f32 %v2293, %v2468
        %v2470 = vpop.f32.mrb[0].mxu0
        %2471 = vmatprep.mubr.f32.mxu0 0.0
        %v2472 = vand.u32 %v1562, 4294901760
        %2473 = vmatmul.mubr.f32.gmra.mrb[0].mxu0 %v2472
        %v2474 = vpop.f32.mrb[0].mxu0
        %v2475 = vadd.f32 %v2301, %v2474
        %v2476 = vpop.f32.mrb[0].mxu0
        %2477 = vmatprep.mubr.f32.mxu0 0.0
        %v2478 = vand.u32 %v1565, 4294901760
        %2479 = vmatmul.mubr.f32.gmra.mrb[0].mxu0 %v2478
        %v2480 = vpop.f32.mrb[0].mxu0
        %v2481 = vadd.f32 %v2309, %v2480
        %v2482 = vpop.f32.mrb[0].mxu0
        %2483 = vmatprep.mubr.f32.mxu0 0.0
        %v2484 = vand.u32 %v1568, 4294901760
        %2485 = vmatmul.mubr.f32.gmra.mrb[0].mxu0 %v2484
        %v2486 = vpop.f32.mrb[0].mxu0
        %v2487 = vadd.f32 %v2317, %v2486
        %v2488 = vpop.f32.mrb[0].mxu0
        %2489 = vmatprep.mubr.f32.mxu0 0.0
        %v2490 = vand.u32 %v1571, 4294901760
        %2491 = vmatmul.mubr.f32.gmra.mrb[0].mxu0 %v2490
        %v2492 = vpop.f32.mrb[0].mxu0
        %v2493 = vadd.f32 %v2325, %v2492
        %v2494 = vpop.f32.mrb[0].mxu0
        %2495 = vmatprep.mubr.f32.mxu0 0.0
        %v2496 = vand.u32 %v1574, 4294901760
        %2497 = vmatmul.mubr.f32.gmra.mrb[0].mxu0 %v2496
        %v2498 = vpop.f32.mrb[0].mxu0
        %v2499 = vadd.f32 %v2333, %v2498
        %v2500 = vpop.f32.mrb[0].mxu0
        %2501 = vmatprep.mubr.f32.mxu0 0.0
        %v2502 = vand.u32 %v1577, 4294901760
        %2503 = vmatmul.mubr.f32.gmra.mrb[0].mxu0 %v2502
        %v2504 = vpop.f32.mrb[0].mxu0
        %v2505 = vadd.f32 %v2341, %v2504
        %v2506 = vpop.f32.mrb[0].mxu0
        %2507 = vdwg.mxu0
        %2508 = vmatprep.subr.mxu0 0.0
        %v2509 = vand.u32 %v322, 4294901760
        %2510 = vmatpush1.msra.mxu0 %v2509
        %2511 = vmatprep.subr.mxu0 0.0
        %2512 = vmatpush1.msra.mxu0 0.0
        %2513 = vmatprep.subr.mxu0 0.0
        %2514 = vmatpush1.msra.mxu0 0.0
        %2515 = vmatprep.subr.mxu0 0.0
        %2516 = vmatpush1.msra.mxu0 0.0
        %2517 = vmatprep.subr.mxu0 0.0
        %2518 = vmatpush1.msra.mxu0 0.0
        %2519 = vmatprep.subr.mxu0 0.0
        %2520 = vmatpush1.msra.mxu0 0.0
        %2521 = vmatprep.subr.mxu0 0.0
        %2522 = vmatpush1.msra.mxu0 0.0
        %2523 = vmatprep.subr.mxu0 0.0
        %2524 = vmatpush1.msra.mxu0 0.0
        %2525 = vmatprep.subr.mxu0 0.0
        %2526 = vmatpush1.msra.mxu0 0.0
        %2527 = vmatprep.subr.mxu0 0.0
        %2528 = vmatpush1.msra.mxu0 0.0
        %2529 = vmatprep.subr.mxu0 0.0
        %2530 = vmatpush1.msra.mxu0 0.0
        %2531 = vmatprep.subr.mxu0 0.0
        %2532 = vmatpush1.msra.mxu0 0.0
        %2533 = vmatprep.subr.mxu0 0.0
        %2534 = vmatpush1.msra.mxu0 0.0
        %2535 = vmatprep.subr.mxu0 0.0
        %2536 = vmatpush1.msra.mxu0 0.0
        %2537 = vmatprep.subr.mxu0 0.0
        %2538 = vmatpush1.msra.mxu0 0.0
        %2539 = vmatprep.subr.mxu0 0.0
        %2540 = vmatpush1.msra.mxu0 0.0
        %2541 = vmatprep.subr.mxu0 0.0
        %2542 = vmatpush1.msra.mxu0 0.0
        %2543 = vmatprep.subr.mxu0 0.0
        %2544 = vmatpush1.msra.mxu0 0.0
        %2545 = vmatprep.subr.mxu0 0.0
        %2546 = vmatpush1.msra.mxu0 0.0
        %2547 = vmatprep.subr.mxu0 0.0
        %2548 = vmatpush1.msra.mxu0 0.0
        %2549 = vmatprep.subr.mxu0 0.0
        %2550 = vmatpush1.msra.mxu0 0.0
        %2551 = vmatprep.subr.mxu0 0.0
        %2552 = vmatpush1.msra.mxu0 0.0
        %2553 = vmatprep.subr.mxu0 0.0
        %2554 = vmatpush1.msra.mxu0 0.0
        %2555 = vmatprep.subr.mxu0 0.0
        %2556 = vmatpush1.msra.mxu0 0.0
        %2557 = vmatprep.subr.mxu0 0.0
        %2558 = vmatpush1.msra.mxu0 0.0
        %2559 = vmatprep.subr.mxu0 0.0
        %2560 = vmatpush1.msra.mxu0 0.0
        %2561 = vmatprep.subr.mxu0 0.0
        %2562 = vmatpush1.msra.mxu0 0.0
        %2563 = vmatprep.subr.mxu0 0.0
        %2564 = vmatpush1.msra.mxu0 0.0
        %2565 = vmatprep.subr.mxu0 0.0
        %2566 = vmatpush1.msra.mxu0 0.0
        %2567 = vmatprep.subr.mxu0 0.0
        %2568 = vmatpush1.msra.mxu0 0.0
        %2569 = vmatprep.subr.mxu0 0.0
        %2570 = vmatpush1.msra.mxu0 0.0
        %2571 = vmatprep.subr.mxu0 0.0
        %2572 = vmatpush1.msra.mxu0 0.0
        %2573 = vmatprep.mubr.f32.mxu0 0.0
        %v2574 = vand.u32 %v1532, 4294901760
        %2575 = vmatmul.mubr.f32.gmra.mrb[0].mxu0 %v2574
        %v2576 = vpop.f32.mrb[0].mxu0
        %v2577 = vadd.f32 %v2415, %v2576
        %v2578 = vpop.f32.mrb[0].mxu0
        %2579 = vmatprep.mubr.f32.mxu0 0.0
        %v2580 = vand.u32 %v1535, 4294901760
        %2581 = vmatmul.mubr.f32.gmra.mrb[0].mxu0 %v2580
        %v2582 = vpop.f32.mrb[0].mxu0
        %v2583 = vadd.f32 %v2421, %v2582
        %v2584 = vpop.f32.mrb[0].mxu0
        %2585 = vmatprep.mubr.f32.mxu0 0.0
        %v2586 = vand.u32 %v1538, 4294901760
        %2587 = vmatmul.mubr.f32.gmra.mrb[0].mxu0 %v2586
        %v2588 = vpop.f32.mrb[0].mxu0
        %v2589 = vadd.f32 %v2427, %v2588
        %v2590 = vpop.f32.mrb[0].mxu0
        %2591 = vmatprep.mubr.f32.mxu0 0.0
        %v2592 = vand.u32 %v1541, 4294901760
        %2593 = vmatmul.mubr.f32.gmra.mrb[0].mxu0 %v2592
        %v2594 = vpop.f32.mrb[0].mxu0
        %v2595 = vadd.f32 %v2433, %v2594
        %v2596 = vpop.f32.mrb[0].mxu0
        %2597 = vmatprep.mubr.f32.mxu0 0.0
        %v2598 = vand.u32 %v1544, 4294901760
        %2599 = vmatmul.mubr.f32.gmra.mrb[0].mxu0 %v2598
        %v2600 = vpop.f32.mrb[0].mxu0
        %v2601 = vadd.f32 %v2439, %v2600
        %v2602 = vpop.f32.mrb[0].mxu0
        %2603 = vmatprep.mubr.f32.mxu0 0.0
        %v2604 = vand.u32 %v1547, 4294901760
        %2605 = vmatmul.mubr.f32.gmra.mrb[0].mxu0 %v2604
        %v2606 = vpop.f32.mrb[0].mxu0
        %v2607 = vadd.f32 %v2445, %v2606
        %v2608 = vpop.f32.mrb[0].mxu0
        %2609 = vmatprep.mubr.f32.mxu0 0.0
        %v2610 = vand.u32 %v1550, 4294901760
        %2611 = vmatmul.mubr.f32.gmra.mrb[0].mxu0 %v2610
        %v2612 = vpop.f32.mrb[0].mxu0
        %v2613 = vadd.f32 %v2451, %v2612
        %v2614 = vpop.f32.mrb[0].mxu0
        %2615 = vmatprep.mubr.f32.mxu0 0.0
        %v2616 = vand.u32 %v1553, 4294901760
        %2617 = vmatmul.mubr.f32.gmra.mrb[0].mxu0 %v2616
        %v2618 = vpop.f32.mrb[0].mxu0
        %v2619 = vadd.f32 %v2457, %v2618
        %v2620 = vpop.f32.mrb[0].mxu0
        %2621 = vmatprep.mubr.f32.mxu0 0.0
        %v2622 = vand.u32 %v1556, 4294901760
        %2623 = vmatmul.mubr.f32.gmra.mrb[0].mxu0 %v2622
        %v2624 = vpop.f32.mrb[0].mxu0
        %v2625 = vadd.f32 %v2463, %v2624
        %v2626 = vpop.f32.mrb[0].mxu0
        %2627 = vmatprep.mubr.f32.mxu0 0.0
        %v2628 = vand.u32 %v1559, 4294901760
        %2629 = vmatmul.mubr.f32.gmra.mrb[0].mxu0 %v2628
        %v2630 = vpop.f32.mrb[0].mxu0
        %v2631 = vadd.f32 %v2469, %v2630
        %v2632 = vpop.f32.mrb[0].mxu0
        %2633 = vmatprep.mubr.f32.mxu0 0.0
        %v2634 = vand.u32 %v1562, 4294901760
        %2635 = vmatmul.mubr.f32.gmra.mrb[0].mxu0 %v2634
        %v2636 = vpop.f32.mrb[0].mxu0
        %v2637 = vadd.f32 %v2475, %v2636
        %v2638 = vpop.f32.mrb[0].mxu0
        %2639 = vmatprep.mubr.f32.mxu0 0.0
        %v2640 = vand.u32 %v1565, 4294901760
        %2641 = vmatmul.mubr.f32.gmra.mrb[0].mxu0 %v2640
        %v2642 = vpop.f32.mrb[0].mxu0
        %v2643 = vadd.f32 %v2481, %v2642
        %v2644 = vpop.f32.mrb[0].mxu0
        %2645 = vmatprep.mubr.f32.mxu0 0.0
        %v2646 = vand.u32 %v1568, 4294901760
        %2647 = vmatmul.mubr.f32.gmra.mrb[0].mxu0 %v2646
        %v2648 = vpop.f32.mrb[0].mxu0
        %v2649 = vadd.f32 %v2487, %v2648
        %v2650 = vpop.f32.mrb[0].mxu0
        %2651 = vmatprep.mubr.f32.mxu0 0.0
        %v2652 = vand.u32 %v1571, 4294901760
        %2653 = vmatmul.mubr.f32.gmra.mrb[0].mxu0 %v2652
        %v2654 = vpop.f32.mrb[0].mxu0
        %v2655 = vadd.f32 %v2493, %v2654
        %v2656 = vpop.f32.mrb[0].mxu0
        %2657 = vmatprep.mubr.f32.mxu0 0.0
        %v2658 = vand.u32 %v1574, 4294901760
        %2659 = vmatmul.mubr.f32.gmra.mrb[0].mxu0 %v2658
        %v2660 = vpop.f32.mrb[0].mxu0
        %v2661 = vadd.f32 %v2499, %v2660
        %v2662 = vpop.f32.mrb[0].mxu0
        %2663 = vmatprep.mubr.f32.mxu0 0.0
        %v2664 = vand.u32 %v1577, 4294901760
        %2665 = vmatmul.mubr.f32.gmra.mrb[0].mxu0 %v2664
        %v2666 = vpop.f32.mrb[0].mxu0
        %v2667 = vadd.f32 %v2505, %v2666
        %v2668 = vpop.f32.mrb[0].mxu0
        %2669 = vdwg.mxu0
        %s2670 = smul.u32 %s30, 128
        %v2671 = vlaneseq
        %v2672 = vshrl.u32 %v2671, 7
        %v2673 = vadd.s32 %v2672, 8
        %v2674 = vadd.s32 %v2672, 16
        %v2675 = vadd.s32 %v2672, 24
        %v2676 = vadd.s32 %v2672, 32
        %v2677 = vadd.s32 %v2672, 40
        %v2678 = vadd.s32 %v2672, 48
        %v2679 = vadd.s32 %v2672, 56
        %v2680 = vadd.s32 %v2672, 64
        %v2681 = vadd.s32 %v2672, 72
        %v2682 = vadd.s32 %v2672, 80
        %v2683 = vadd.s32 %v2672, 88
        %v2684 = vadd.s32 %v2672, 96
        %v2685 = vadd.s32 %v2672, 104
        %v2686 = vadd.s32 %v2672, 112
        %v2687 = vadd.s32 %v2672, 120
        %v2688 = vstv %s2670
        %v2689 = vadd.s32 %v2688, %v2672
        %v2690 = vadd.s32 %v2688, %v2673
        %v2691 = vadd.s32 %v2688, %v2674
        %v2692 = vadd.s32 %v2688, %v2675
        %v2693 = vadd.s32 %v2688, %v2676
        %v2694 = vadd.s32 %v2688, %v2677
        %v2695 = vadd.s32 %v2688, %v2678
        %v2696 = vadd.s32 %v2688, %v2679
        %v2697 = vadd.s32 %v2688, %v2680
        %v2698 = vadd.s32 %v2688, %v2681
        %v2699 = vadd.s32 %v2688, %v2682
        %v2700 = vadd.s32 %v2688, %v2683
        %v2701 = vadd.s32 %v2688, %v2684
        %v2702 = vadd.s32 %v2688, %v2685
        %v2703 = vadd.s32 %v2688, %v2686
        %v2704 = vadd.s32 %v2688, %v2687
        %vm2705 = vcmp.lt.s32.totalorder %v2689, 16
        %vm2706 = vcmp.lt.s32.totalorder %v2690, 16
        %vm2707 = vcmp.lt.s32.totalorder %v2691, 16
        %vm2708 = vcmp.lt.s32.totalorder %v2692, 16
        %vm2709 = vcmp.lt.s32.totalorder %v2693, 16
        %vm2710 = vcmp.lt.s32.totalorder %v2694, 16
        %vm2711 = vcmp.lt.s32.totalorder %v2695, 16
        %vm2712 = vcmp.lt.s32.totalorder %v2696, 16
        %vm2713 = vcmp.lt.s32.totalorder %v2697, 16
        %vm2714 = vcmp.lt.s32.totalorder %v2698, 16
        %vm2715 = vcmp.lt.s32.totalorder %v2699, 16
        %vm2716 = vcmp.lt.s32.totalorder %v2700, 16
        %vm2717 = vcmp.lt.s32.totalorder %v2701, 16
        %vm2718 = vcmp.lt.s32.totalorder %v2702, 16
        %vm2719 = vcmp.lt.s32.totalorder %v2703, 16
        %vm2720 = vcmp.lt.s32.totalorder %v2704, 16
        %v2721 = vsel %vm2705, %v1406, -1e+30
        %v2722 = vsel %vm2706, %v1412, -1e+30
        %v2723 = vsel %vm2707, %v1418, -1e+30
        %v2724 = vsel %vm2708, %v1424, -1e+30
        %v2725 = vsel %vm2709, %v1430, -1e+30
        %v2726 = vsel %vm2710, %v1436, -1e+30
        %v2727 = vsel %vm2711, %v1442, -1e+30
        %v2728 = vsel %vm2712, %v1448, -1e+30
        %v2729 = vsel %vm2713, %v1454, -1e+30
        %v2730 = vsel %vm2714, %v1460, -1e+30
        %v2731 = vsel %vm2715, %v1466, -1e+30
        %v2732 = vsel %vm2716, %v1472, -1e+30
        %v2733 = vsel %vm2717, %v1478, -1e+30
        %v2734 = vsel %vm2718, %v1484, -1e+30
        %v2735 = vsel %vm2719, %v1490, -1e+30
        %v2736 = vsel %vm2720, %v1496, -1e+30
        %v2737 = vsel %vm2705, %v2577, -1e+30
        %v2738 = vsel %vm2706, %v2583, -1e+30
        %v2739 = vsel %vm2707, %v2589, -1e+30
        %v2740 = vsel %vm2708, %v2595, -1e+30
        %v2741 = vsel %vm2709, %v2601, -1e+30
        %v2742 = vsel %vm2710, %v2607, -1e+30
        %v2743 = vsel %vm2711, %v2613, -1e+30
        %v2744 = vsel %vm2712, %v2619, -1e+30
        %v2745 = vsel %vm2713, %v2625, -1e+30
        %v2746 = vsel %vm2714, %v2631, -1e+30
        %v2747 = vsel %vm2715, %v2637, -1e+30
        %v2748 = vsel %vm2716, %v2643, -1e+30
        %v2749 = vsel %vm2717, %v2649, -1e+30
        %v2750 = vsel %vm2718, %v2655, -1e+30
        %v2751 = vsel %vm2719, %v2661, -1e+30
        %v2752 = vsel %vm2720, %v2667, -1e+30
        %v2753 = vld [vmem:[#allocation3] sm:$0x1]
        %v2754 = vld [vmem:[#allocation3 + $0x1] sm:$0x1]
        %v2755 = vmax.f32 %v2721, %v2723
        %v2756 = vmax.f32 %v2722, %v2724
        %v2757 = vmax.f32 %v2755, %v2725
        %v2758 = vmax.f32 %v2756, %v2726
        %v2759 = vmax.f32 %v2757, %v2727
        %v2760 = vmax.f32 %v2758, %v2728
        %v2761 = vmax.f32 %v2759, %v2729
        %v2762 = vmax.f32 %v2760, %v2730
        %v2763 = vmax.f32 %v2761, %v2731
        %v2764 = vmax.f32 %v2762, %v2732
        %v2765 = vmax.f32 %v2763, %v2733
        %v2766 = vmax.f32 %v2764, %v2734
        %v2767 = vmax.f32 %v2765, %v2735
        %v2768 = vmax.f32 %v2766, %v2736
        %v2769 = vmax.f32 %v2767, %v2768
        %v2770 = vrot.slane %v2769, 4
        %v2771 = vmax.f32 %v2769, %v2770
        %v2772 = vrot.slane %v2771, 2
        %v2773 = vmax.f32 %v2771, %v2772
        %v2774 = vrot.slane %v2773, 1
        %v2775 = vmax.f32 %v2773, %v2774
        %v2776 = vmax.f32 %v2737, %v2739
        %v2777 = vmax.f32 %v2738, %v2740
        %v2778 = vmax.f32 %v2776, %v2741
        %v2779 = vmax.f32 %v2777, %v2742
        %v2780 = vmax.f32 %v2778, %v2743
        %v2781 = vmax.f32 %v2779, %v2744
        %v2782 = vmax.f32 %v2780, %v2745
        %v2783 = vmax.f32 %v2781, %v2746
        %v2784 = vmax.f32 %v2782, %v2747
        %v2785 = vmax.f32 %v2783, %v2748
        %v2786 = vmax.f32 %v2784, %v2749
        %v2787 = vmax.f32 %v2785, %v2750
        %v2788 = vmax.f32 %v2786, %v2751
        %v2789 = vmax.f32 %v2787, %v2752
        %v2790 = vmax.f32 %v2788, %v2789
        %v2791 = vrot.slane %v2790, 4
        %v2792 = vmax.f32 %v2790, %v2791
        %v2793 = vrot.slane %v2792, 2
        %v2794 = vmax.f32 %v2792, %v2793
        %v2795 = vrot.slane %v2794, 1
        %v2796 = vmax.f32 %v2794, %v2795
        %v2797 = vmax.f32 %v2753, %v2775
        %v2798 = vmax.f32 %v2754, %v2796
        %v2799 = vsub.f32 %v2753, %v2797
        %v2800 = vsub.f32 %v2754, %v2798
        %v2801 = vmul.f32 %v2799, 1.442695
        %v2802 = vpow.pop %v2801
        %v2803 = vmul.f32 %v2800, 1.442695
        %v2804 = vpow.pop %v2803
        %v2807 = vlaneseq
        %v2808 = vshrl.u32 %v2807, 7
        %v2809 = vsub.s32 0, %v2808
        %v2810 = vrot.slane %v2797, %v2809
        %v2811 = vlaneseq
        %v2812 = vshrl.u32 %v2811, 7
        %v2813 = vsub.s32 0, %v2812
        %v2814 = vrot.slane %v2798, %v2813
        %v2817 = vsub.f32 %v2721, %v2810
        %v2818 = vsub.f32 %v2722, %v2810
        %v2819 = vsub.f32 %v2723, %v2810
        %v2820 = vsub.f32 %v2724, %v2810
        %v2821 = vsub.f32 %v2725, %v2810
        %v2822 = vsub.f32 %v2726, %v2810
        %v2823 = vsub.f32 %v2727, %v2810
        %v2824 = vsub.f32 %v2728, %v2810
        %v2825 = vsub.f32 %v2729, %v2810
        %v2826 = vsub.f32 %v2730, %v2810
        %v2827 = vsub.f32 %v2731, %v2810
        %v2828 = vsub.f32 %v2732, %v2810
        %v2829 = vsub.f32 %v2733, %v2810
        %v2830 = vsub.f32 %v2734, %v2810
        %v2831 = vsub.f32 %v2735, %v2810
        %v2832 = vsub.f32 %v2736, %v2810
        %v2833 = vsub.f32 %v2737, %v2814
        %v2834 = vsub.f32 %v2738, %v2814
        %v2835 = vsub.f32 %v2739, %v2814
        %v2836 = vsub.f32 %v2740, %v2814
        %v2837 = vsub.f32 %v2741, %v2814
        %v2838 = vsub.f32 %v2742, %v2814
        %v2839 = vsub.f32 %v2743, %v2814
        %v2840 = vsub.f32 %v2744, %v2814
        %v2841 = vsub.f32 %v2745, %v2814
        %v2842 = vsub.f32 %v2746, %v2814
        %v2843 = vsub.f32 %v2747, %v2814
        %v2844 = vsub.f32 %v2748, %v2814
        %v2845 = vsub.f32 %v2749, %v2814
        %v2846 = vsub.f32 %v2750, %v2814
        %v2847 = vsub.f32 %v2751, %v2814
        %v2848 = vsub.f32 %v2752, %v2814
        %v2849 = vmul.f32 %v2817, 1.442695
        %v2850 = vpow.pop %v2849
        %v2851 = vmul.f32 %v2818, 1.442695
        %v2852 = vpow.pop %v2851
        %v2853 = vmul.f32 %v2819, 1.442695
        %v2854 = vpow.pop %v2853
        %v2855 = vmul.f32 %v2820, 1.442695
        %v2856 = vpow.pop %v2855
        %v2857 = vmul.f32 %v2821, 1.442695
        %v2858 = vpow.pop %v2857
        %v2859 = vmul.f32 %v2822, 1.442695
        %v2860 = vpow.pop %v2859
        %v2861 = vmul.f32 %v2823, 1.442695
        %v2862 = vpow.pop %v2861
        %v2863 = vmul.f32 %v2824, 1.442695
        %v2864 = vpow.pop %v2863
        %v2865 = vmul.f32 %v2825, 1.442695
        %v2866 = vpow.pop %v2865
        %v2867 = vmul.f32 %v2826, 1.442695
        %v2868 = vpow.pop %v2867
        %v2869 = vmul.f32 %v2827, 1.442695
        %v2870 = vpow.pop %v2869
        %v2871 = vmul.f32 %v2828, 1.442695
        %v2872 = vpow.pop %v2871
        %v2873 = vmul.f32 %v2829, 1.442695
        %v2874 = vpow.pop %v2873
        %v2875 = vmul.f32 %v2830, 1.442695
        %v2876 = vpow.pop %v2875
        %v2877 = vmul.f32 %v2831, 1.442695
        %v2878 = vpow.pop %v2877
        %v2879 = vmul.f32 %v2832, 1.442695
        %v2880 = vpow.pop %v2879
        %v2881 = vmul.f32 %v2833, 1.442695
        %v2882 = vpow.pop %v2881
        %v2883 = vmul.f32 %v2834, 1.442695
        %v2884 = vpow.pop %v2883
        %v2885 = vmul.f32 %v2835, 1.442695
        %v2886 = vpow.pop %v2885
        %v2887 = vmul.f32 %v2836, 1.442695
        %v2888 = vpow.pop %v2887
        %v2889 = vmul.f32 %v2837, 1.442695
        %v2890 = vpow.pop %v2889
        %v2891 = vmul.f32 %v2838, 1.442695
        %v2892 = vpow.pop %v2891
        %v2893 = vmul.f32 %v2839, 1.442695
        %v2894 = vpow.pop %v2893
        %v2895 = vmul.f32 %v2840, 1.442695
        %v2896 = vpow.pop %v2895
        %v2897 = vmul.f32 %v2841, 1.442695
        %v2898 = vpow.pop %v2897
        %v2899 = vmul.f32 %v2842, 1.442695
        %v2900 = vpow.pop %v2899
        %v2901 = vmul.f32 %v2843, 1.442695
        %v2902 = vpow.pop %v2901
        %v2903 = vmul.f32 %v2844, 1.442695
        %v2904 = vpow.pop %v2903
        %v2905 = vmul.f32 %v2845, 1.442695
        %v2906 = vpow.pop %v2905
        %v2907 = vmul.f32 %v2846, 1.442695
        %v2908 = vpow.pop %v2907
        %v2909 = vmul.f32 %v2847, 1.442695
        %v2910 = vpow.pop %v2909
        %v2911 = vmul.f32 %v2848, 1.442695
        %v2912 = vpow.pop %v2911
        %v2913 = vadd.f32 %v2850, %v2852
        %v2914 = vadd.f32 %v2913, %v2854
        %v2915 = vadd.f32 %v2914, %v2856
        %v2916 = vadd.f32 %v2915, %v2858
        %v2917 = vadd.f32 %v2916, %v2860
        %v2918 = vadd.f32 %v2917, %v2862
        %v2919 = vadd.f32 %v2918, %v2864
        %v2920 = vadd.f32 %v2919, %v2866
        %v2921 = vadd.f32 %v2920, %v2868
        %v2922 = vadd.f32 %v2921, %v2870
        %v2923 = vadd.f32 %v2922, %v2872
        %v2924 = vadd.f32 %v2923, %v2874
        %v2925 = vadd.f32 %v2924, %v2876
        %v2926 = vadd.f32 %v2925, %v2878
        %v2927 = vadd.f32 %v2926, %v2880
        %v2928 = vrot.slane %v2927, 4
        %v2929 = vadd.f32 %v2927, %v2928
        %v2930 = vrot.slane %v2929, 2
        %v2931 = vadd.f32 %v2929, %v2930
        %v2932 = vrot.slane %v2931, 1
        %v2933 = vadd.f32 %v2931, %v2932
        %v2934 = vadd.f32 %v2882, %v2884
        %v2935 = vadd.f32 %v2934, %v2886
        %v2936 = vadd.f32 %v2935, %v2888
        %v2937 = vadd.f32 %v2936, %v2890
        %v2938 = vadd.f32 %v2937, %v2892
        %v2939 = vadd.f32 %v2938, %v2894
        %v2940 = vadd.f32 %v2939, %v2896
        %v2941 = vadd.f32 %v2940, %v2898
        %v2942 = vadd.f32 %v2941, %v2900
        %v2943 = vadd.f32 %v2942, %v2902
        %v2944 = vadd.f32 %v2943, %v2904
        %v2945 = vadd.f32 %v2944, %v2906
        %v2946 = vadd.f32 %v2945, %v2908
        %v2947 = vadd.f32 %v2946, %v2910
        %v2948 = vadd.f32 %v2947, %v2912
        %v2949 = vrot.slane %v2948, 4
        %v2950 = vadd.f32 %v2948, %v2949
        %v2951 = vrot.slane %v2950, 2
        %v2952 = vadd.f32 %v2950, %v2951
        %v2953 = vrot.slane %v2952, 1
        %v2954 = vadd.f32 %v2952, %v2953
        %v2955 = vld [vmem:[#allocation4] sm:$0x1]
        %v2956 = vld [vmem:[#allocation4 + $0x1] sm:$0x1]
        %v2957 = vmul.f32 %v2802, %v2955
        %v2958 = vmul.f32 %v2804, %v2956
        %v2959 = vadd.f32 %v2957, %v2933
        %v2960 = vadd.f32 %v2958, %v2954
        %2961 = vst [vmem:[#allocation4] sm:$0x1] %v2959
        %2962 = vst [vmem:[#allocation4 + $0x1] sm:$0x1] %v2960
        %2963 = vst [vmem:[#allocation3] sm:$0x1] %v2797
        %2964 = vst [vmem:[#allocation3 + $0x1] sm:$0x1] %v2798
        %2965 = vmatprep.subr.mxu0 0.0
        %v2966 = vand.u32 %v2850, 4294901760
        %2967 = vmatpush1.msra.mxu0 %v2966
        %2968 = vmatprep.subr.mxu0 0.0
        %v2969 = vand.u32 %v2852, 4294901760
        %2970 = vmatpush1.msra.mxu0 %v2969
        %2971 = vmatprep.subr.mxu0 0.0
        %v2972 = vand.u32 %v2854, 4294901760
        %2973 = vmatpush1.msra.mxu0 %v2972
        %2974 = vmatprep.subr.mxu0 0.0
        %v2975 = vand.u32 %v2856, 4294901760
        %2976 = vmatpush1.msra.mxu0 %v2975
        %2977 = vmatprep.subr.mxu0 0.0
        %v2978 = vand.u32 %v2858, 4294901760
        %2979 = vmatpush1.msra.mxu0 %v2978
        %2980 = vmatprep.subr.mxu0 0.0
        %v2981 = vand.u32 %v2860, 4294901760
        %2982 = vmatpush1.msra.mxu0 %v2981
        %2983 = vmatprep.subr.mxu0 0.0
        %v2984 = vand.u32 %v2862, 4294901760
        %2985 = vmatpush1.msra.mxu0 %v2984
        %2986 = vmatprep.subr.mxu0 0.0
        %v2987 = vand.u32 %v2864, 4294901760
        %2988 = vmatpush1.msra.mxu0 %v2987
        %2989 = vmatprep.subr.mxu0 0.0
        %v2990 = vand.u32 %v2866, 4294901760
        %2991 = vmatpush1.msra.mxu0 %v2990
        %2992 = vmatprep.subr.mxu0 0.0
        %v2993 = vand.u32 %v2868, 4294901760
        %2994 = vmatpush1.msra.mxu0 %v2993
        %2995 = vmatprep.subr.mxu0 0.0
        %v2996 = vand.u32 %v2870, 4294901760
        %2997 = vmatpush1.msra.mxu0 %v2996
        %2998 = vmatprep.subr.mxu0 0.0
        %v2999 = vand.u32 %v2872, 4294901760
        %3000 = vmatpush1.msra.mxu0 %v2999
        %3001 = vmatprep.subr.mxu0 0.0
        %v3002 = vand.u32 %v2874, 4294901760
        %3003 = vmatpush1.msra.mxu0 %v3002
        %3004 = vmatprep.subr.mxu0 0.0
        %v3005 = vand.u32 %v2876, 4294901760
        %3006 = vmatpush1.msra.mxu0 %v3005
        %3007 = vmatprep.subr.mxu0 0.0
        %v3008 = vand.u32 %v2878, 4294901760
        %3009 = vmatpush1.msra.mxu0 %v3008
        %3010 = vmatprep.subr.mxu0 0.0
        %v3011 = vand.u32 %v2880, 4294901760
        %3012 = vmatpush1.msra.mxu0 %v3011
        %3013 = vmatprep.subr.mxu0 0.0
        %3014 = vmatpush1.msra.mxu0 0.0
        %3015 = vmatprep.subr.mxu0 0.0
        %3016 = vmatpush1.msra.mxu0 0.0
        %3017 = vmatprep.subr.mxu0 0.0
        %3018 = vmatpush1.msra.mxu0 0.0
        %3019 = vmatprep.subr.mxu0 0.0
        %3020 = vmatpush1.msra.mxu0 0.0
        %3021 = vmatprep.subr.mxu0 0.0
        %3022 = vmatpush1.msra.mxu0 0.0
        %3023 = vmatprep.subr.mxu0 0.0
        %3024 = vmatpush1.msra.mxu0 0.0
        %3025 = vmatprep.subr.mxu0 0.0
        %3026 = vmatpush1.msra.mxu0 0.0
        %3027 = vmatprep.subr.mxu0 0.0
        %3028 = vmatpush1.msra.mxu0 0.0
        %3029 = vmatprep.subr.mxu0 0.0
        %3030 = vmatpush1.msra.mxu0 0.0
        %3031 = vmatprep.subr.mxu0 0.0
        %3032 = vmatpush1.msra.mxu0 0.0
        %3033 = vmatprep.subr.mxu0 0.0
        %3034 = vmatpush1.msra.mxu0 0.0
        %3035 = vmatprep.subr.mxu0 0.0
        %3036 = vmatpush1.msra.mxu0 0.0
        %3037 = vmatprep.subr.mxu0 0.0
        %3038 = vmatpush1.msra.mxu0 0.0
        %3039 = vmatprep.subr.mxu0 0.0
        %3040 = vmatpush1.msra.mxu0 0.0
        %3041 = vmatprep.subr.mxu0 0.0
        %3042 = vmatpush1.msra.mxu0 0.0
        %3043 = vmatprep.subr.mxu0 0.0
        %3044 = vmatpush1.msra.mxu0 0.0
        %3045 = vmatprep.mubr.f32.mxu0 0.0
        %v3046 = vand.u32 %v325, 4294901760
        %v3047 = vsub.f32 %v325, %v3046
        %v3048 = vand.u32 %v3047, 4294901760
        %v3049 = vsub.f32 %v3047, %v3048
        %v3050 = vand.u32 %v3049, 4294901760
        %3051 = vmatmul.mubr.f32.gmra.mrb[0].mxu0 %v3050
        %v3052 = vpop.f32.mrb[0].mxu0
        %v3053 = vadd.f32 0.0, %v3052
        %v3054 = vpop.f32.mrb[0].mxu0
        %3055 = vdwg.mxu0
        %3056 = vmatprep.subr.mxu0 0.0
        %v3057 = vand.u32 %v2850, 4294901760
        %v3058 = vsub.f32 %v2850, %v3057
        %v3059 = vand.u32 %v3058, 4294901760
        %v3060 = vsub.f32 %v3058, %v3059
        %v3061 = vand.u32 %v3060, 4294901760
        %3062 = vmatpush1.msra.mxu0 %v3061
        %3063 = vmatprep.subr.mxu0 0.0
        %v3064 = vand.u32 %v2852, 4294901760
        %v3065 = vsub.f32 %v2852, %v3064
        %v3066 = vand.u32 %v3065, 4294901760
        %v3067 = vsub.f32 %v3065, %v3066
        %v3068 = vand.u32 %v3067, 4294901760
        %3069 = vmatpush1.msra.mxu0 %v3068
        %3070 = vmatprep.subr.mxu0 0.0
        %v3071 = vand.u32 %v2854, 4294901760
        %v3072 = vsub.f32 %v2854, %v3071
        %v3073 = vand.u32 %v3072, 4294901760
        %v3074 = vsub.f32 %v3072, %v3073
        %v3075 = vand.u32 %v3074, 4294901760
        %3076 = vmatpush1.msra.mxu0 %v3075
        %3077 = vmatprep.subr.mxu0 0.0
        %v3078 = vand.u32 %v2856, 4294901760
        %v3079 = vsub.f32 %v2856, %v3078
        %v3080 = vand.u32 %v3079, 4294901760
        %v3081 = vsub.f32 %v3079, %v3080
        %v3082 = vand.u32 %v3081, 4294901760
        %3083 = vmatpush1.msra.mxu0 %v3082
        %3084 = vmatprep.subr.mxu0 0.0
        %v3085 = vand.u32 %v2858, 4294901760
        %v3086 = vsub.f32 %v2858, %v3085
        %v3087 = vand.u32 %v3086, 4294901760
        %v3088 = vsub.f32 %v3086, %v3087
        %v3089 = vand.u32 %v3088, 4294901760
        %3090 = vmatpush1.msra.mxu0 %v3089
        %3091 = vmatprep.subr.mxu0 0.0
        %v3092 = vand.u32 %v2860, 4294901760
        %v3093 = vsub.f32 %v2860, %v3092
        %v3094 = vand.u32 %v3093, 4294901760
        %v3095 = vsub.f32 %v3093, %v3094
        %v3096 = vand.u32 %v3095, 4294901760
        %3097 = vmatpush1.msra.mxu0 %v3096
        %3098 = vmatprep.subr.mxu0 0.0
        %v3099 = vand.u32 %v2862, 4294901760
        %v3100 = vsub.f32 %v2862, %v3099
        %v3101 = vand.u32 %v3100, 4294901760
        %v3102 = vsub.f32 %v3100, %v3101
        %v3103 = vand.u32 %v3102, 4294901760
        %3104 = vmatpush1.msra.mxu0 %v3103
        %3105 = vmatprep.subr.mxu0 0.0
        %v3106 = vand.u32 %v2864, 4294901760
        %v3107 = vsub.f32 %v2864, %v3106
        %v3108 = vand.u32 %v3107, 4294901760
        %v3109 = vsub.f32 %v3107, %v3108
        %v3110 = vand.u32 %v3109, 4294901760
        %3111 = vmatpush1.msra.mxu0 %v3110
        %3112 = vmatprep.subr.mxu0 0.0
        %v3113 = vand.u32 %v2866, 4294901760
        %v3114 = vsub.f32 %v2866, %v3113
        %v3115 = vand.u32 %v3114, 4294901760
        %v3116 = vsub.f32 %v3114, %v3115
        %v3117 = vand.u32 %v3116, 4294901760
        %3118 = vmatpush1.msra.mxu0 %v3117
        %3119 = vmatprep.subr.mxu0 0.0
        %v3120 = vand.u32 %v2868, 4294901760
        %v3121 = vsub.f32 %v2868, %v3120
        %v3122 = vand.u32 %v3121, 4294901760
        %v3123 = vsub.f32 %v3121, %v3122
        %v3124 = vand.u32 %v3123, 4294901760
        %3125 = vmatpush1.msra.mxu0 %v3124
        %3126 = vmatprep.subr.mxu0 0.0
        %v3127 = vand.u32 %v2870, 4294901760
        %v3128 = vsub.f32 %v2870, %v3127
        %v3129 = vand.u32 %v3128, 4294901760
        %v3130 = vsub.f32 %v3128, %v3129
        %v3131 = vand.u32 %v3130, 4294901760
        %3132 = vmatpush1.msra.mxu0 %v3131
        %3133 = vmatprep.subr.mxu0 0.0
        %v3134 = vand.u32 %v2872, 4294901760
        %v3135 = vsub.f32 %v2872, %v3134
        %v3136 = vand.u32 %v3135, 4294901760
        %v3137 = vsub.f32 %v3135, %v3136
        %v3138 = vand.u32 %v3137, 4294901760
        %3139 = vmatpush1.msra.mxu0 %v3138
        %3140 = vmatprep.subr.mxu0 0.0
        %v3141 = vand.u32 %v2874, 4294901760
        %v3142 = vsub.f32 %v2874, %v3141
        %v3143 = vand.u32 %v3142, 4294901760
        %v3144 = vsub.f32 %v3142, %v3143
        %v3145 = vand.u32 %v3144, 4294901760
        %3146 = vmatpush1.msra.mxu0 %v3145
        %3147 = vmatprep.subr.mxu0 0.0
        %v3148 = vand.u32 %v2876, 4294901760
        %v3149 = vsub.f32 %v2876, %v3148
        %v3150 = vand.u32 %v3149, 4294901760
        %v3151 = vsub.f32 %v3149, %v3150
        %v3152 = vand.u32 %v3151, 4294901760
        %3153 = vmatpush1.msra.mxu0 %v3152
        %3154 = vmatprep.subr.mxu0 0.0
        %v3155 = vand.u32 %v2878, 4294901760
        %v3156 = vsub.f32 %v2878, %v3155
        %v3157 = vand.u32 %v3156, 4294901760
        %v3158 = vsub.f32 %v3156, %v3157
        %v3159 = vand.u32 %v3158, 4294901760
        %3160 = vmatpush1.msra.mxu0 %v3159
        %3161 = vmatprep.subr.mxu0 0.0
        %v3162 = vand.u32 %v2880, 4294901760
        %v3163 = vsub.f32 %v2880, %v3162
        %v3164 = vand.u32 %v3163, 4294901760
        %v3165 = vsub.f32 %v3163, %v3164
        %v3166 = vand.u32 %v3165, 4294901760
        %3167 = vmatpush1.msra.mxu0 %v3166
        %3168 = vmatprep.subr.mxu0 0.0
        %3169 = vmatpush1.msra.mxu0 0.0
        %3170 = vmatprep.subr.mxu0 0.0
        %3171 = vmatpush1.msra.mxu0 0.0
        %3172 = vmatprep.subr.mxu0 0.0
        %3173 = vmatpush1.msra.mxu0 0.0
        %3174 = vmatprep.subr.mxu0 0.0
        %3175 = vmatpush1.msra.mxu0 0.0
        %3176 = vmatprep.subr.mxu0 0.0
        %3177 = vmatpush1.msra.mxu0 0.0
        %3178 = vmatprep.subr.mxu0 0.0
        %3179 = vmatpush1.msra.mxu0 0.0
        %3180 = vmatprep.subr.mxu0 0.0
        %3181 = vmatpush1.msra.mxu0 0.0
        %3182 = vmatprep.subr.mxu0 0.0
        %3183 = vmatpush1.msra.mxu0 0.0
        %3184 = vmatprep.subr.mxu0 0.0
        %3185 = vmatpush1.msra.mxu0 0.0
        %3186 = vmatprep.subr.mxu0 0.0
        %3187 = vmatpush1.msra.mxu0 0.0
        %3188 = vmatprep.subr.mxu0 0.0
        %3189 = vmatpush1.msra.mxu0 0.0
        %3190 = vmatprep.subr.mxu0 0.0
        %3191 = vmatpush1.msra.mxu0 0.0
        %3192 = vmatprep.subr.mxu0 0.0
        %3193 = vmatpush1.msra.mxu0 0.0
        %3194 = vmatprep.subr.mxu0 0.0
        %3195 = vmatpush1.msra.mxu0 0.0
        %3196 = vmatprep.subr.mxu0 0.0
        %3197 = vmatpush1.msra.mxu0 0.0
        %3198 = vmatprep.subr.mxu0 0.0
        %3199 = vmatpush1.msra.mxu0 0.0
        %3200 = vmatprep.mubr.f32.mxu0 0.0
        %v3201 = vand.u32 %v325, 4294901760
        %3202 = vmatmul.mubr.f32.gmra.mrb[0].mxu0 %v3201
        %v3203 = vpop.f32.mrb[0].mxu0
        %v3204 = vadd.f32 %v3053, %v3203
        %v3205 = vpop.f32.mrb[0].mxu0
        %3206 = vdwg.mxu0
        %3207 = vmatprep.subr.mxu0 0.0
        %v3208 = vand.u32 %v2850, 4294901760
        %v3209 = vsub.f32 %v2850, %v3208
        %3210 = vmatpush1.msra.mxu0 %v3209
        %3211 = vmatprep.subr.mxu0 0.0
        %v3212 = vand.u32 %v2852, 4294901760
        %v3213 = vsub.f32 %v2852, %v3212
        %3214 = vmatpush1.msra.mxu0 %v3213
        %3215 = vmatprep.subr.mxu0 0.0
        %v3216 = vand.u32 %v2854, 4294901760
        %v3217 = vsub.f32 %v2854, %v3216
        %3218 = vmatpush1.msra.mxu0 %v3217
        %3219 = vmatprep.subr.mxu0 0.0
        %v3220 = vand.u32 %v2856, 4294901760
        %v3221 = vsub.f32 %v2856, %v3220
        %3222 = vmatpush1.msra.mxu0 %v3221
        %3223 = vmatprep.subr.mxu0 0.0
        %v3224 = vand.u32 %v2858, 4294901760
        %v3225 = vsub.f32 %v2858, %v3224
        %3226 = vmatpush1.msra.mxu0 %v3225
        %3227 = vmatprep.subr.mxu0 0.0
        %v3228 = vand.u32 %v2860, 4294901760
        %v3229 = vsub.f32 %v2860, %v3228
        %3230 = vmatpush1.msra.mxu0 %v3229
        %3231 = vmatprep.subr.mxu0 0.0
        %v3232 = vand.u32 %v2862, 4294901760
        %v3233 = vsub.f32 %v2862, %v3232
        %3234 = vmatpush1.msra.mxu0 %v3233
        %3235 = vmatprep.subr.mxu0 0.0
        %v3236 = vand.u32 %v2864, 4294901760
        %v3237 = vsub.f32 %v2864, %v3236
        %3238 = vmatpush1.msra.mxu0 %v3237
        %3239 = vmatprep.subr.mxu0 0.0
        %v3240 = vand.u32 %v2866, 4294901760
        %v3241 = vsub.f32 %v2866, %v3240
        %3242 = vmatpush1.msra.mxu0 %v3241
        %3243 = vmatprep.subr.mxu0 0.0
        %v3244 = vand.u32 %v2868, 4294901760
        %v3245 = vsub.f32 %v2868, %v3244
        %3246 = vmatpush1.msra.mxu0 %v3245
        %3247 = vmatprep.subr.mxu0 0.0
        %v3248 = vand.u32 %v2870, 4294901760
        %v3249 = vsub.f32 %v2870, %v3248
        %3250 = vmatpush1.msra.mxu0 %v3249
        %3251 = vmatprep.subr.mxu0 0.0
        %v3252 = vand.u32 %v2872, 4294901760
        %v3253 = vsub.f32 %v2872, %v3252
        %3254 = vmatpush1.msra.mxu0 %v3253
        %3255 = vmatprep.subr.mxu0 0.0
        %v3256 = vand.u32 %v2874, 4294901760
        %v3257 = vsub.f32 %v2874, %v3256
        %3258 = vmatpush1.msra.mxu0 %v3257
        %3259 = vmatprep.subr.mxu0 0.0
        %v3260 = vand.u32 %v2876, 4294901760
        %v3261 = vsub.f32 %v2876, %v3260
        %3262 = vmatpush1.msra.mxu0 %v3261
        %3263 = vmatprep.subr.mxu0 0.0
        %v3264 = vand.u32 %v2878, 4294901760
        %v3265 = vsub.f32 %v2878, %v3264
        %3266 = vmatpush1.msra.mxu0 %v3265
        %3267 = vmatprep.subr.mxu0 0.0
        %v3268 = vand.u32 %v2880, 4294901760
        %v3269 = vsub.f32 %v2880, %v3268
        %3270 = vmatpush1.msra.mxu0 %v3269
        %3271 = vmatprep.subr.mxu0 0.0
        %3272 = vmatpush1.msra.mxu0 0.0
        %3273 = vmatprep.subr.mxu0 0.0
        %3274 = vmatpush1.msra.mxu0 0.0
        %3275 = vmatprep.subr.mxu0 0.0
        %3276 = vmatpush1.msra.mxu0 0.0
        %3277 = vmatprep.subr.mxu0 0.0
        %3278 = vmatpush1.msra.mxu0 0.0
        %3279 = vmatprep.subr.mxu0 0.0
        %3280 = vmatpush1.msra.mxu0 0.0
        %3281 = vmatprep.subr.mxu0 0.0
        %3282 = vmatpush1.msra.mxu0 0.0
        %3283 = vmatprep.subr.mxu0 0.0
        %3284 = vmatpush1.msra.mxu0 0.0
        %3285 = vmatprep.subr.mxu0 0.0
        %3286 = vmatpush1.msra.mxu0 0.0
        %3287 = vmatprep.subr.mxu0 0.0
        %3288 = vmatpush1.msra.mxu0 0.0
        %3289 = vmatprep.subr.mxu0 0.0
        %3290 = vmatpush1.msra.mxu0 0.0
        %3291 = vmatprep.subr.mxu0 0.0
        %3292 = vmatpush1.msra.mxu0 0.0
        %3293 = vmatprep.subr.mxu0 0.0
        %3294 = vmatpush1.msra.mxu0 0.0
        %3295 = vmatprep.subr.mxu0 0.0
        %3296 = vmatpush1.msra.mxu0 0.0
        %3297 = vmatprep.subr.mxu0 0.0
        %3298 = vmatpush1.msra.mxu0 0.0
        %3299 = vmatprep.subr.mxu0 0.0
        %3300 = vmatpush1.msra.mxu0 0.0
        %3301 = vmatprep.subr.mxu0 0.0
        %3302 = vmatpush1.msra.mxu0 0.0
        %3303 = vmatprep.mubr.f32.mxu0 0.0
        %v3304 = vand.u32 %v325, 4294901760
        %v3305 = vsub.f32 %v325, %v3304
        %3306 = vmatmul.mubr.f32.gmra.mrb[0].mxu0 %v3305
        %v3307 = vpop.f32.mrb[0].mxu0
        %v3308 = vadd.f32 %v3204, %v3307
        %v3309 = vpop.f32.mrb[0].mxu0
        %3310 = vdwg.mxu0
        %3311 = vmatprep.subr.mxu0 0.0
        %v3312 = vand.u32 %v2850, 4294901760
        %3313 = vmatpush1.msra.mxu0 %v3312
        %3314 = vmatprep.subr.mxu0 0.0
        %v3315 = vand.u32 %v2852, 4294901760
        %3316 = vmatpush1.msra.mxu0 %v3315
        %3317 = vmatprep.subr.mxu0 0.0
        %v3318 = vand.u32 %v2854, 4294901760
        %3319 = vmatpush1.msra.mxu0 %v3318
        %3320 = vmatprep.subr.mxu0 0.0
        %v3321 = vand.u32 %v2856, 4294901760
        %3322 = vmatpush1.msra.mxu0 %v3321
        %3323 = vmatprep.subr.mxu0 0.0
        %v3324 = vand.u32 %v2858, 4294901760
        %3325 = vmatpush1.msra.mxu0 %v3324
        %3326 = vmatprep.subr.mxu0 0.0
        %v3327 = vand.u32 %v2860, 4294901760
        %3328 = vmatpush1.msra.mxu0 %v3327
        %3329 = vmatprep.subr.mxu0 0.0
        %v3330 = vand.u32 %v2862, 4294901760
        %3331 = vmatpush1.msra.mxu0 %v3330
        %3332 = vmatprep.subr.mxu0 0.0
        %v3333 = vand.u32 %v2864, 4294901760
        %3334 = vmatpush1.msra.mxu0 %v3333
        %3335 = vmatprep.subr.mxu0 0.0
        %v3336 = vand.u32 %v2866, 4294901760
        %3337 = vmatpush1.msra.mxu0 %v3336
        %3338 = vmatprep.subr.mxu0 0.0
        %v3339 = vand.u32 %v2868, 4294901760
        %3340 = vmatpush1.msra.mxu0 %v3339
        %3341 = vmatprep.subr.mxu0 0.0
        %v3342 = vand.u32 %v2870, 4294901760
        %3343 = vmatpush1.msra.mxu0 %v3342
        %3344 = vmatprep.subr.mxu0 0.0
        %v3345 = vand.u32 %v2872, 4294901760
        %3346 = vmatpush1.msra.mxu0 %v3345
        %3347 = vmatprep.subr.mxu0 0.0
        %v3348 = vand.u32 %v2874, 4294901760
        %3349 = vmatpush1.msra.mxu0 %v3348
        %3350 = vmatprep.subr.mxu0 0.0
        %v3351 = vand.u32 %v2876, 4294901760
        %3352 = vmatpush1.msra.mxu0 %v3351
        %3353 = vmatprep.subr.mxu0 0.0
        %v3354 = vand.u32 %v2878, 4294901760
        %3355 = vmatpush1.msra.mxu0 %v3354
        %3356 = vmatprep.subr.mxu0 0.0
        %v3357 = vand.u32 %v2880, 4294901760
        %3358 = vmatpush1.msra.mxu0 %v3357
        %3359 = vmatprep.subr.mxu0 0.0
        %3360 = vmatpush1.msra.mxu0 0.0
        %3361 = vmatprep.subr.mxu0 0.0
        %3362 = vmatpush1.msra.mxu0 0.0
        %3363 = vmatprep.subr.mxu0 0.0
        %3364 = vmatpush1.msra.mxu0 0.0
        %3365 = vmatprep.subr.mxu0 0.0
        %3366 = vmatpush1.msra.mxu0 0.0
        %3367 = vmatprep.subr.mxu0 0.0
        %3368 = vmatpush1.msra.mxu0 0.0
        %3369 = vmatprep.subr.mxu0 0.0
        %3370 = vmatpush1.msra.mxu0 0.0
        %3371 = vmatprep.subr.mxu0 0.0
        %3372 = vmatpush1.msra.mxu0 0.0
        %3373 = vmatprep.subr.mxu0 0.0
        %3374 = vmatpush1.msra.mxu0 0.0
        %3375 = vmatprep.subr.mxu0 0.0
        %3376 = vmatpush1.msra.mxu0 0.0
        %3377 = vmatprep.subr.mxu0 0.0
        %3378 = vmatpush1.msra.mxu0 0.0
        %3379 = vmatprep.subr.mxu0 0.0
        %3380 = vmatpush1.msra.mxu0 0.0
        %3381 = vmatprep.subr.mxu0 0.0
        %3382 = vmatpush1.msra.mxu0 0.0
        %3383 = vmatprep.subr.mxu0 0.0
        %3384 = vmatpush1.msra.mxu0 0.0
        %3385 = vmatprep.subr.mxu0 0.0
        %3386 = vmatpush1.msra.mxu0 0.0
        %3387 = vmatprep.subr.mxu0 0.0
        %3388 = vmatpush1.msra.mxu0 0.0
        %3389 = vmatprep.subr.mxu0 0.0
        %3390 = vmatpush1.msra.mxu0 0.0
        %3391 = vmatprep.mubr.f32.mxu0 0.0
        %v3392 = vand.u32 %v325, 4294901760
        %v3393 = vsub.f32 %v325, %v3392
        %v3394 = vand.u32 %v3393, 4294901760
        %3395 = vmatmul.mubr.f32.gmra.mrb[0].mxu0 %v3394
        %v3396 = vpop.f32.mrb[0].mxu0
        %v3397 = vadd.f32 %v3308, %v3396
        %v3398 = vpop.f32.mrb[0].mxu0
        %3399 = vdwg.mxu0
        %3400 = vmatprep.subr.mxu0 0.0
        %v3401 = vand.u32 %v2850, 4294901760
        %v3402 = vsub.f32 %v2850, %v3401
        %v3403 = vand.u32 %v3402, 4294901760
        %3404 = vmatpush1.msra.mxu0 %v3403
        %3405 = vmatprep.subr.mxu0 0.0
        %v3406 = vand.u32 %v2852, 4294901760
        %v3407 = vsub.f32 %v2852, %v3406
        %v3408 = vand.u32 %v3407, 4294901760
        %3409 = vmatpush1.msra.mxu0 %v3408
        %3410 = vmatprep.subr.mxu0 0.0
        %v3411 = vand.u32 %v2854, 4294901760
        %v3412 = vsub.f32 %v2854, %v3411
        %v3413 = vand.u32 %v3412, 4294901760
        %3414 = vmatpush1.msra.mxu0 %v3413
        %3415 = vmatprep.subr.mxu0 0.0
        %v3416 = vand.u32 %v2856, 4294901760
        %v3417 = vsub.f32 %v2856, %v3416
        %v3418 = vand.u32 %v3417, 4294901760
        %3419 = vmatpush1.msra.mxu0 %v3418
        %3420 = vmatprep.subr.mxu0 0.0
        %v3421 = vand.u32 %v2858, 4294901760
        %v3422 = vsub.f32 %v2858, %v3421
        %v3423 = vand.u32 %v3422, 4294901760
        %3424 = vmatpush1.msra.mxu0 %v3423
        %3425 = vmatprep.subr.mxu0 0.0
        %v3426 = vand.u32 %v2860, 4294901760
        %v3427 = vsub.f32 %v2860, %v3426
        %v3428 = vand.u32 %v3427, 4294901760
        %3429 = vmatpush1.msra.mxu0 %v3428
        %3430 = vmatprep.subr.mxu0 0.0
        %v3431 = vand.u32 %v2862, 4294901760
        %v3432 = vsub.f32 %v2862, %v3431
        %v3433 = vand.u32 %v3432, 4294901760
        %3434 = vmatpush1.msra.mxu0 %v3433
        %3435 = vmatprep.subr.mxu0 0.0
        %v3436 = vand.u32 %v2864, 4294901760
        %v3437 = vsub.f32 %v2864, %v3436
        %v3438 = vand.u32 %v3437, 4294901760
        %3439 = vmatpush1.msra.mxu0 %v3438
        %3440 = vmatprep.subr.mxu0 0.0
        %v3441 = vand.u32 %v2866, 4294901760
        %v3442 = vsub.f32 %v2866, %v3441
        %v3443 = vand.u32 %v3442, 4294901760
        %3444 = vmatpush1.msra.mxu0 %v3443
        %3445 = vmatprep.subr.mxu0 0.0
        %v3446 = vand.u32 %v2868, 4294901760
        %v3447 = vsub.f32 %v2868, %v3446
        %v3448 = vand.u32 %v3447, 4294901760
        %3449 = vmatpush1.msra.mxu0 %v3448
        %3450 = vmatprep.subr.mxu0 0.0
        %v3451 = vand.u32 %v2870, 4294901760
        %v3452 = vsub.f32 %v2870, %v3451
        %v3453 = vand.u32 %v3452, 4294901760
        %3454 = vmatpush1.msra.mxu0 %v3453
        %3455 = vmatprep.subr.mxu0 0.0
        %v3456 = vand.u32 %v2872, 4294901760
        %v3457 = vsub.f32 %v2872, %v3456
        %v3458 = vand.u32 %v3457, 4294901760
        %3459 = vmatpush1.msra.mxu0 %v3458
        %3460 = vmatprep.subr.mxu0 0.0
        %v3461 = vand.u32 %v2874, 4294901760
        %v3462 = vsub.f32 %v2874, %v3461
        %v3463 = vand.u32 %v3462, 4294901760
        %3464 = vmatpush1.msra.mxu0 %v3463
        %3465 = vmatprep.subr.mxu0 0.0
        %v3466 = vand.u32 %v2876, 4294901760
        %v3467 = vsub.f32 %v2876, %v3466
        %v3468 = vand.u32 %v3467, 4294901760
        %3469 = vmatpush1.msra.mxu0 %v3468
        %3470 = vmatprep.subr.mxu0 0.0
        %v3471 = vand.u32 %v2878, 4294901760
        %v3472 = vsub.f32 %v2878, %v3471
        %v3473 = vand.u32 %v3472, 4294901760
        %3474 = vmatpush1.msra.mxu0 %v3473
        %3475 = vmatprep.subr.mxu0 0.0
        %v3476 = vand.u32 %v2880, 4294901760
        %v3477 = vsub.f32 %v2880, %v3476
        %v3478 = vand.u32 %v3477, 4294901760
        %3479 = vmatpush1.msra.mxu0 %v3478
        %3480 = vmatprep.subr.mxu0 0.0
        %3481 = vmatpush1.msra.mxu0 0.0
        %3482 = vmatprep.subr.mxu0 0.0
        %3483 = vmatpush1.msra.mxu0 0.0
        %3484 = vmatprep.subr.mxu0 0.0
        %3485 = vmatpush1.msra.mxu0 0.0
        %3486 = vmatprep.subr.mxu0 0.0
        %3487 = vmatpush1.msra.mxu0 0.0
        %3488 = vmatprep.subr.mxu0 0.0
        %3489 = vmatpush1.msra.mxu0 0.0
        %3490 = vmatprep.subr.mxu0 0.0
        %3491 = vmatpush1.msra.mxu0 0.0
        %3492 = vmatprep.subr.mxu0 0.0
        %3493 = vmatpush1.msra.mxu0 0.0
        %3494 = vmatprep.subr.mxu0 0.0
        %3495 = vmatpush1.msra.mxu0 0.0
        %3496 = vmatprep.subr.mxu0 0.0
        %3497 = vmatpush1.msra.mxu0 0.0
        %3498 = vmatprep.subr.mxu0 0.0
        %3499 = vmatpush1.msra.mxu0 0.0
        %3500 = vmatprep.subr.mxu0 0.0
        %3501 = vmatpush1.msra.mxu0 0.0
        %3502 = vmatprep.subr.mxu0 0.0
        %3503 = vmatpush1.msra.mxu0 0.0
        %3504 = vmatprep.subr.mxu0 0.0
        %3505 = vmatpush1.msra.mxu0 0.0
        %3506 = vmatprep.subr.mxu0 0.0
        %3507 = vmatpush1.msra.mxu0 0.0
        %3508 = vmatprep.subr.mxu0 0.0
        %3509 = vmatpush1.msra.mxu0 0.0
        %3510 = vmatprep.subr.mxu0 0.0
        %3511 = vmatpush1.msra.mxu0 0.0
        %3512 = vmatprep.mubr.f32.mxu0 0.0
        %v3513 = vand.u32 %v325, 4294901760
        %3514 = vmatmul.mubr.f32.gmra.mrb[0].mxu0 %v3513
        %v3515 = vpop.f32.mrb[0].mxu0
        %v3516 = vadd.f32 %v3397, %v3515
        %v3517 = vpop.f32.mrb[0].mxu0
        %3518 = vdwg.mxu0
        %3519 = vmatprep.subr.mxu0 0.0
        %v3520 = vand.u32 %v2850, 4294901760
        %3521 = vmatpush1.msra.mxu0 %v3520
        %3522 = vmatprep.subr.mxu0 0.0
        %v3523 = vand.u32 %v2852, 4294901760
        %3524 = vmatpush1.msra.mxu0 %v3523
        %3525 = vmatprep.subr.mxu0 0.0
        %v3526 = vand.u32 %v2854, 4294901760
        %3527 = vmatpush1.msra.mxu0 %v3526
        %3528 = vmatprep.subr.mxu0 0.0
        %v3529 = vand.u32 %v2856, 4294901760
        %3530 = vmatpush1.msra.mxu0 %v3529
        %3531 = vmatprep.subr.mxu0 0.0
        %v3532 = vand.u32 %v2858, 4294901760
        %3533 = vmatpush1.msra.mxu0 %v3532
        %3534 = vmatprep.subr.mxu0 0.0
        %v3535 = vand.u32 %v2860, 4294901760
        %3536 = vmatpush1.msra.mxu0 %v3535
        %3537 = vmatprep.subr.mxu0 0.0
        %v3538 = vand.u32 %v2862, 4294901760
        %3539 = vmatpush1.msra.mxu0 %v3538
        %3540 = vmatprep.subr.mxu0 0.0
        %v3541 = vand.u32 %v2864, 4294901760
        %3542 = vmatpush1.msra.mxu0 %v3541
        %3543 = vmatprep.subr.mxu0 0.0
        %v3544 = vand.u32 %v2866, 4294901760
        %3545 = vmatpush1.msra.mxu0 %v3544
        %3546 = vmatprep.subr.mxu0 0.0
        %v3547 = vand.u32 %v2868, 4294901760
        %3548 = vmatpush1.msra.mxu0 %v3547
        %3549 = vmatprep.subr.mxu0 0.0
        %v3550 = vand.u32 %v2870, 4294901760
        %3551 = vmatpush1.msra.mxu0 %v3550
        %3552 = vmatprep.subr.mxu0 0.0
        %v3553 = vand.u32 %v2872, 4294901760
        %3554 = vmatpush1.msra.mxu0 %v3553
        %3555 = vmatprep.subr.mxu0 0.0
        %v3556 = vand.u32 %v2874, 4294901760
        %3557 = vmatpush1.msra.mxu0 %v3556
        %3558 = vmatprep.subr.mxu0 0.0
        %v3559 = vand.u32 %v2876, 4294901760
        %3560 = vmatpush1.msra.mxu0 %v3559
        %3561 = vmatprep.subr.mxu0 0.0
        %v3562 = vand.u32 %v2878, 4294901760
        %3563 = vmatpush1.msra.mxu0 %v3562
        %3564 = vmatprep.subr.mxu0 0.0
        %v3565 = vand.u32 %v2880, 4294901760
        %3566 = vmatpush1.msra.mxu0 %v3565
        %3567 = vmatprep.subr.mxu0 0.0
        %3568 = vmatpush1.msra.mxu0 0.0
        %3569 = vmatprep.subr.mxu0 0.0
        %3570 = vmatpush1.msra.mxu0 0.0
        %3571 = vmatprep.subr.mxu0 0.0
        %3572 = vmatpush1.msra.mxu0 0.0
        %3573 = vmatprep.subr.mxu0 0.0
        %3574 = vmatpush1.msra.mxu0 0.0
        %3575 = vmatprep.subr.mxu0 0.0
        %3576 = vmatpush1.msra.mxu0 0.0
        %3577 = vmatprep.subr.mxu0 0.0
        %3578 = vmatpush1.msra.mxu0 0.0
        %3579 = vmatprep.subr.mxu0 0.0
        %3580 = vmatpush1.msra.mxu0 0.0
        %3581 = vmatprep.subr.mxu0 0.0
        %3582 = vmatpush1.msra.mxu0 0.0
        %3583 = vmatprep.subr.mxu0 0.0
        %3584 = vmatpush1.msra.mxu0 0.0
        %3585 = vmatprep.subr.mxu0 0.0
        %3586 = vmatpush1.msra.mxu0 0.0
        %3587 = vmatprep.subr.mxu0 0.0
        %3588 = vmatpush1.msra.mxu0 0.0
        %3589 = vmatprep.subr.mxu0 0.0
        %3590 = vmatpush1.msra.mxu0 0.0
        %3591 = vmatprep.subr.mxu0 0.0
        %3592 = vmatpush1.msra.mxu0 0.0
        %3593 = vmatprep.subr.mxu0 0.0
        %3594 = vmatpush1.msra.mxu0 0.0
        %3595 = vmatprep.subr.mxu0 0.0
        %3596 = vmatpush1.msra.mxu0 0.0
        %3597 = vmatprep.subr.mxu0 0.0
        %3598 = vmatpush1.msra.mxu0 0.0
        %3599 = vmatprep.mubr.f32.mxu0 0.0
        %v3600 = vand.u32 %v325, 4294901760
        %3601 = vmatmul.mubr.f32.gmra.mrb[0].mxu0 %v3600
        %v3602 = vpop.f32.mrb[0].mxu0
        %v3603 = vadd.f32 %v3516, %v3602
        %v3604 = vpop.f32.mrb[0].mxu0
        %3605 = vdwg.mxu0
        %3606 = vmatprep.subr.mxu0 0.0
        %v3607 = vand.u32 %v2882, 4294901760
        %3608 = vmatpush1.msra.mxu0 %v3607
        %3609 = vmatprep.subr.mxu0 0.0
        %v3610 = vand.u32 %v2884, 4294901760
        %3611 = vmatpush1.msra.mxu0 %v3610
        %3612 = vmatprep.subr.mxu0 0.0
        %v3613 = vand.u32 %v2886, 4294901760
        %3614 = vmatpush1.msra.mxu0 %v3613
        %3615 = vmatprep.subr.mxu0 0.0
        %v3616 = vand.u32 %v2888, 4294901760
        %3617 = vmatpush1.msra.mxu0 %v3616
        %3618 = vmatprep.subr.mxu0 0.0
        %v3619 = vand.u32 %v2890, 4294901760
        %3620 = vmatpush1.msra.mxu0 %v3619
        %3621 = vmatprep.subr.mxu0 0.0
        %v3622 = vand.u32 %v2892, 4294901760
        %3623 = vmatpush1.msra.mxu0 %v3622
        %3624 = vmatprep.subr.mxu0 0.0
        %v3625 = vand.u32 %v2894, 4294901760
        %3626 = vmatpush1.msra.mxu0 %v3625
        %3627 = vmatprep.subr.mxu0 0.0
        %v3628 = vand.u32 %v2896, 4294901760
        %3629 = vmatpush1.msra.mxu0 %v3628
        %3630 = vmatprep.subr.mxu0 0.0
        %v3631 = vand.u32 %v2898, 4294901760
        %3632 = vmatpush1.msra.mxu0 %v3631
        %3633 = vmatprep.subr.mxu0 0.0
        %v3634 = vand.u32 %v2900, 4294901760
        %3635 = vmatpush1.msra.mxu0 %v3634
        %3636 = vmatprep.subr.mxu0 0.0
        %v3637 = vand.u32 %v2902, 4294901760
        %3638 = vmatpush1.msra.mxu0 %v3637
        %3639 = vmatprep.subr.mxu0 0.0
        %v3640 = vand.u32 %v2904, 4294901760
        %3641 = vmatpush1.msra.mxu0 %v3640
        %3642 = vmatprep.subr.mxu0 0.0
        %v3643 = vand.u32 %v2906, 4294901760
        %3644 = vmatpush1.msra.mxu0 %v3643
        %3645 = vmatprep.subr.mxu0 0.0
        %v3646 = vand.u32 %v2908, 4294901760
        %3647 = vmatpush1.msra.mxu0 %v3646
        %3648 = vmatprep.subr.mxu0 0.0
        %v3649 = vand.u32 %v2910, 4294901760
        %3650 = vmatpush1.msra.mxu0 %v3649
        %3651 = vmatprep.subr.mxu0 0.0
        %v3652 = vand.u32 %v2912, 4294901760
        %3653 = vmatpush1.msra.mxu0 %v3652
        %3654 = vmatprep.subr.mxu0 0.0
        %3655 = vmatpush1.msra.mxu0 0.0
        %3656 = vmatprep.subr.mxu0 0.0
        %3657 = vmatpush1.msra.mxu0 0.0
        %3658 = vmatprep.subr.mxu0 0.0
        %3659 = vmatpush1.msra.mxu0 0.0
        %3660 = vmatprep.subr.mxu0 0.0
        %3661 = vmatpush1.msra.mxu0 0.0
        %3662 = vmatprep.subr.mxu0 0.0
        %3663 = vmatpush1.msra.mxu0 0.0
        %3664 = vmatprep.subr.mxu0 0.0
        %3665 = vmatpush1.msra.mxu0 0.0
        %3666 = vmatprep.subr.mxu0 0.0
        %3667 = vmatpush1.msra.mxu0 0.0
        %3668 = vmatprep.subr.mxu0 0.0
        %3669 = vmatpush1.msra.mxu0 0.0
        %3670 = vmatprep.subr.mxu0 0.0
        %3671 = vmatpush1.msra.mxu0 0.0
        %3672 = vmatprep.subr.mxu0 0.0
        %3673 = vmatpush1.msra.mxu0 0.0
        %3674 = vmatprep.subr.mxu0 0.0
        %3675 = vmatpush1.msra.mxu0 0.0
        %3676 = vmatprep.subr.mxu0 0.0
        %3677 = vmatpush1.msra.mxu0 0.0
        %3678 = vmatprep.subr.mxu0 0.0
        %3679 = vmatpush1.msra.mxu0 0.0
        %3680 = vmatprep.subr.mxu0 0.0
        %3681 = vmatpush1.msra.mxu0 0.0
        %3682 = vmatprep.subr.mxu0 0.0
        %3683 = vmatpush1.msra.mxu0 0.0
        %3684 = vmatprep.subr.mxu0 0.0
        %3685 = vmatpush1.msra.mxu0 0.0
        %3686 = vmatprep.mubr.f32.mxu0 0.0
        %v3687 = vand.u32 %v326, 4294901760
        %v3688 = vsub.f32 %v326, %v3687
        %v3689 = vand.u32 %v3688, 4294901760
        %v3690 = vsub.f32 %v3688, %v3689
        %v3691 = vand.u32 %v3690, 4294901760
        %3692 = vmatmul.mubr.f32.gmra.mrb[0].mxu0 %v3691
        %v3693 = vpop.f32.mrb[0].mxu0
        %v3694 = vadd.f32 0.0, %v3693
        %v3695 = vpop.f32.mrb[0].mxu0
        %3696 = vdwg.mxu0
        %3697 = vmatprep.subr.mxu0 0.0
        %v3698 = vand.u32 %v2882, 4294901760
        %v3699 = vsub.f32 %v2882, %v3698
        %v3700 = vand.u32 %v3699, 4294901760
        %v3701 = vsub.f32 %v3699, %v3700
        %v3702 = vand.u32 %v3701, 4294901760
        %3703 = vmatpush1.msra.mxu0 %v3702
        %3704 = vmatprep.subr.mxu0 0.0
        %v3705 = vand.u32 %v2884, 4294901760
        %v3706 = vsub.f32 %v2884, %v3705
        %v3707 = vand.u32 %v3706, 4294901760
        %v3708 = vsub.f32 %v3706, %v3707
        %v3709 = vand.u32 %v3708, 4294901760
        %3710 = vmatpush1.msra.mxu0 %v3709
        %3711 = vmatprep.subr.mxu0 0.0
        %v3712 = vand.u32 %v2886, 4294901760
        %v3713 = vsub.f32 %v2886, %v3712
        %v3714 = vand.u32 %v3713, 4294901760
        %v3715 = vsub.f32 %v3713, %v3714
        %v3716 = vand.u32 %v3715, 4294901760
        %3717 = vmatpush1.msra.mxu0 %v3716
        %3718 = vmatprep.subr.mxu0 0.0
        %v3719 = vand.u32 %v2888, 4294901760
        %v3720 = vsub.f32 %v2888, %v3719
        %v3721 = vand.u32 %v3720, 4294901760
        %v3722 = vsub.f32 %v3720, %v3721
        %v3723 = vand.u32 %v3722, 4294901760
        %3724 = vmatpush1.msra.mxu0 %v3723
        %3725 = vmatprep.subr.mxu0 0.0
        %v3726 = vand.u32 %v2890, 4294901760
        %v3727 = vsub.f32 %v2890, %v3726
        %v3728 = vand.u32 %v3727, 4294901760
        %v3729 = vsub.f32 %v3727, %v3728
        %v3730 = vand.u32 %v3729, 4294901760
        %3731 = vmatpush1.msra.mxu0 %v3730
        %3732 = vmatprep.subr.mxu0 0.0
        %v3733 = vand.u32 %v2892, 4294901760
        %v3734 = vsub.f32 %v2892, %v3733
        %v3735 = vand.u32 %v3734, 4294901760
        %v3736 = vsub.f32 %v3734, %v3735
        %v3737 = vand.u32 %v3736, 4294901760
        %3738 = vmatpush1.msra.mxu0 %v3737
        %3739 = vmatprep.subr.mxu0 0.0
        %v3740 = vand.u32 %v2894, 4294901760
        %v3741 = vsub.f32 %v2894, %v3740
        %v3742 = vand.u32 %v3741, 4294901760
        %v3743 = vsub.f32 %v3741, %v3742
        %v3744 = vand.u32 %v3743, 4294901760
        %3745 = vmatpush1.msra.mxu0 %v3744
        %3746 = vmatprep.subr.mxu0 0.0
        %v3747 = vand.u32 %v2896, 4294901760
        %v3748 = vsub.f32 %v2896, %v3747
        %v3749 = vand.u32 %v3748, 4294901760
        %v3750 = vsub.f32 %v3748, %v3749
        %v3751 = vand.u32 %v3750, 4294901760
        %3752 = vmatpush1.msra.mxu0 %v3751
        %3753 = vmatprep.subr.mxu0 0.0
        %v3754 = vand.u32 %v2898, 4294901760
        %v3755 = vsub.f32 %v2898, %v3754
        %v3756 = vand.u32 %v3755, 4294901760
        %v3757 = vsub.f32 %v3755, %v3756
        %v3758 = vand.u32 %v3757, 4294901760
        %3759 = vmatpush1.msra.mxu0 %v3758
        %3760 = vmatprep.subr.mxu0 0.0
        %v3761 = vand.u32 %v2900, 4294901760
        %v3762 = vsub.f32 %v2900, %v3761
        %v3763 = vand.u32 %v3762, 4294901760
        %v3764 = vsub.f32 %v3762, %v3763
        %v3765 = vand.u32 %v3764, 4294901760
        %3766 = vmatpush1.msra.mxu0 %v3765
        %3767 = vmatprep.subr.mxu0 0.0
        %v3768 = vand.u32 %v2902, 4294901760
        %v3769 = vsub.f32 %v2902, %v3768
        %v3770 = vand.u32 %v3769, 4294901760
        %v3771 = vsub.f32 %v3769, %v3770
        %v3772 = vand.u32 %v3771, 4294901760
        %3773 = vmatpush1.msra.mxu0 %v3772
        %3774 = vmatprep.subr.mxu0 0.0
        %v3775 = vand.u32 %v2904, 4294901760
        %v3776 = vsub.f32 %v2904, %v3775
        %v3777 = vand.u32 %v3776, 4294901760
        %v3778 = vsub.f32 %v3776, %v3777
        %v3779 = vand.u32 %v3778, 4294901760
        %3780 = vmatpush1.msra.mxu0 %v3779
        %3781 = vmatprep.subr.mxu0 0.0
        %v3782 = vand.u32 %v2906, 4294901760
        %v3783 = vsub.f32 %v2906, %v3782
        %v3784 = vand.u32 %v3783, 4294901760
        %v3785 = vsub.f32 %v3783, %v3784
        %v3786 = vand.u32 %v3785, 4294901760
        %3787 = vmatpush1.msra.mxu0 %v3786
        %3788 = vmatprep.subr.mxu0 0.0
        %v3789 = vand.u32 %v2908, 4294901760
        %v3790 = vsub.f32 %v2908, %v3789
        %v3791 = vand.u32 %v3790, 4294901760
        %v3792 = vsub.f32 %v3790, %v3791
        %v3793 = vand.u32 %v3792, 4294901760
        %3794 = vmatpush1.msra.mxu0 %v3793
        %3795 = vmatprep.subr.mxu0 0.0
        %v3796 = vand.u32 %v2910, 4294901760
        %v3797 = vsub.f32 %v2910, %v3796
        %v3798 = vand.u32 %v3797, 4294901760
        %v3799 = vsub.f32 %v3797, %v3798
        %v3800 = vand.u32 %v3799, 4294901760
        %3801 = vmatpush1.msra.mxu0 %v3800
        %3802 = vmatprep.subr.mxu0 0.0
        %v3803 = vand.u32 %v2912, 4294901760
        %v3804 = vsub.f32 %v2912, %v3803
        %v3805 = vand.u32 %v3804, 4294901760
        %v3806 = vsub.f32 %v3804, %v3805
        %v3807 = vand.u32 %v3806, 4294901760
        %3808 = vmatpush1.msra.mxu0 %v3807
        %3809 = vmatprep.subr.mxu0 0.0
        %3810 = vmatpush1.msra.mxu0 0.0
        %3811 = vmatprep.subr.mxu0 0.0
        %3812 = vmatpush1.msra.mxu0 0.0
        %3813 = vmatprep.subr.mxu0 0.0
        %3814 = vmatpush1.msra.mxu0 0.0
        %3815 = vmatprep.subr.mxu0 0.0
        %3816 = vmatpush1.msra.mxu0 0.0
        %3817 = vmatprep.subr.mxu0 0.0
        %3818 = vmatpush1.msra.mxu0 0.0
        %3819 = vmatprep.subr.mxu0 0.0
        %3820 = vmatpush1.msra.mxu0 0.0
        %3821 = vmatprep.subr.mxu0 0.0
        %3822 = vmatpush1.msra.mxu0 0.0
        %3823 = vmatprep.subr.mxu0 0.0
        %3824 = vmatpush1.msra.mxu0 0.0
        %3825 = vmatprep.subr.mxu0 0.0
        %3826 = vmatpush1.msra.mxu0 0.0
        %3827 = vmatprep.subr.mxu0 0.0
        %3828 = vmatpush1.msra.mxu0 0.0
        %3829 = vmatprep.subr.mxu0 0.0
        %3830 = vmatpush1.msra.mxu0 0.0
        %3831 = vmatprep.subr.mxu0 0.0
        %3832 = vmatpush1.msra.mxu0 0.0
        %3833 = vmatprep.subr.mxu0 0.0
        %3834 = vmatpush1.msra.mxu0 0.0
        %3835 = vmatprep.subr.mxu0 0.0
        %3836 = vmatpush1.msra.mxu0 0.0
        %3837 = vmatprep.subr.mxu0 0.0
        %3838 = vmatpush1.msra.mxu0 0.0
        %3839 = vmatprep.subr.mxu0 0.0
        %3840 = vmatpush1.msra.mxu0 0.0
        %3841 = vmatprep.mubr.f32.mxu0 0.0
        %v3842 = vand.u32 %v326, 4294901760
        %3843 = vmatmul.mubr.f32.gmra.mrb[0].mxu0 %v3842
        %v3844 = vpop.f32.mrb[0].mxu0
        %v3845 = vadd.f32 %v3694, %v3844
        %v3846 = vpop.f32.mrb[0].mxu0
        %3847 = vdwg.mxu0
        %3848 = vmatprep.subr.mxu0 0.0
        %v3849 = vand.u32 %v2882, 4294901760
        %v3850 = vsub.f32 %v2882, %v3849
        %3851 = vmatpush1.msra.mxu0 %v3850
        %3852 = vmatprep.subr.mxu0 0.0
        %v3853 = vand.u32 %v2884, 4294901760
        %v3854 = vsub.f32 %v2884, %v3853
        %3855 = vmatpush1.msra.mxu0 %v3854
        %3856 = vmatprep.subr.mxu0 0.0
        %v3857 = vand.u32 %v2886, 4294901760
        %v3858 = vsub.f32 %v2886, %v3857
        %3859 = vmatpush1.msra.mxu0 %v3858
        %3860 = vmatprep.subr.mxu0 0.0
        %v3861 = vand.u32 %v2888, 4294901760
        %v3862 = vsub.f32 %v2888, %v3861
        %3863 = vmatpush1.msra.mxu0 %v3862
        %3864 = vmatprep.subr.mxu0 0.0
        %v3865 = vand.u32 %v2890, 4294901760
        %v3866 = vsub.f32 %v2890, %v3865
        %3867 = vmatpush1.msra.mxu0 %v3866
        %3868 = vmatprep.subr.mxu0 0.0
        %v3869 = vand.u32 %v2892, 4294901760
        %v3870 = vsub.f32 %v2892, %v3869
        %3871 = vmatpush1.msra.mxu0 %v3870
        %3872 = vmatprep.subr.mxu0 0.0
        %v3873 = vand.u32 %v2894, 4294901760
        %v3874 = vsub.f32 %v2894, %v3873
        %3875 = vmatpush1.msra.mxu0 %v3874
        %3876 = vmatprep.subr.mxu0 0.0
        %v3877 = vand.u32 %v2896, 4294901760
        %v3878 = vsub.f32 %v2896, %v3877
        %3879 = vmatpush1.msra.mxu0 %v3878
        %3880 = vmatprep.subr.mxu0 0.0
        %v3881 = vand.u32 %v2898, 4294901760
        %v3882 = vsub.f32 %v2898, %v3881
        %3883 = vmatpush1.msra.mxu0 %v3882
        %3884 = vmatprep.subr.mxu0 0.0
        %v3885 = vand.u32 %v2900, 4294901760
        %v3886 = vsub.f32 %v2900, %v3885
        %3887 = vmatpush1.msra.mxu0 %v3886
        %3888 = vmatprep.subr.mxu0 0.0
        %v3889 = vand.u32 %v2902, 4294901760
        %v3890 = vsub.f32 %v2902, %v3889
        %3891 = vmatpush1.msra.mxu0 %v3890
        %3892 = vmatprep.subr.mxu0 0.0
        %v3893 = vand.u32 %v2904, 4294901760
        %v3894 = vsub.f32 %v2904, %v3893
        %3895 = vmatpush1.msra.mxu0 %v3894
        %3896 = vmatprep.subr.mxu0 0.0
        %v3897 = vand.u32 %v2906, 4294901760
        %v3898 = vsub.f32 %v2906, %v3897
        %3899 = vmatpush1.msra.mxu0 %v3898
        %3900 = vmatprep.subr.mxu0 0.0
        %v3901 = vand.u32 %v2908, 4294901760
        %v3902 = vsub.f32 %v2908, %v3901
        %3903 = vmatpush1.msra.mxu0 %v3902
        %3904 = vmatprep.subr.mxu0 0.0
        %v3905 = vand.u32 %v2910, 4294901760
        %v3906 = vsub.f32 %v2910, %v3905
        %3907 = vmatpush1.msra.mxu0 %v3906
        %3908 = vmatprep.subr.mxu0 0.0
        %v3909 = vand.u32 %v2912, 4294901760
        %v3910 = vsub.f32 %v2912, %v3909
        %3911 = vmatpush1.msra.mxu0 %v3910
        %3912 = vmatprep.subr.mxu0 0.0
        %3913 = vmatpush1.msra.mxu0 0.0
        %3914 = vmatprep.subr.mxu0 0.0
        %3915 = vmatpush1.msra.mxu0 0.0
        %3916 = vmatprep.subr.mxu0 0.0
        %3917 = vmatpush1.msra.mxu0 0.0
        %3918 = vmatprep.subr.mxu0 0.0
        %3919 = vmatpush1.msra.mxu0 0.0
        %3920 = vmatprep.subr.mxu0 0.0
        %3921 = vmatpush1.msra.mxu0 0.0
        %3922 = vmatprep.subr.mxu0 0.0
        %3923 = vmatpush1.msra.mxu0 0.0
        %3924 = vmatprep.subr.mxu0 0.0
        %3925 = vmatpush1.msra.mxu0 0.0
        %3926 = vmatprep.subr.mxu0 0.0
        %3927 = vmatpush1.msra.mxu0 0.0
        %3928 = vmatprep.subr.mxu0 0.0
        %3929 = vmatpush1.msra.mxu0 0.0
        %3930 = vmatprep.subr.mxu0 0.0
        %3931 = vmatpush1.msra.mxu0 0.0
        %3932 = vmatprep.subr.mxu0 0.0
        %3933 = vmatpush1.msra.mxu0 0.0
        %3934 = vmatprep.subr.mxu0 0.0
        %3935 = vmatpush1.msra.mxu0 0.0
        %3936 = vmatprep.subr.mxu0 0.0
        %3937 = vmatpush1.msra.mxu0 0.0
        %3938 = vmatprep.subr.mxu0 0.0
        %3939 = vmatpush1.msra.mxu0 0.0
        %3940 = vmatprep.subr.mxu0 0.0
        %3941 = vmatpush1.msra.mxu0 0.0
        %3942 = vmatprep.subr.mxu0 0.0
        %3943 = vmatpush1.msra.mxu0 0.0
        %3944 = vmatprep.mubr.f32.mxu0 0.0
        %v3945 = vand.u32 %v326, 4294901760
        %v3946 = vsub.f32 %v326, %v3945
        %3947 = vmatmul.mubr.f32.gmra.mrb[0].mxu0 %v3946
        %v3948 = vpop.f32.mrb[0].mxu0
        %v3949 = vadd.f32 %v3845, %v3948
        %v3950 = vpop.f32.mrb[0].mxu0
        %3951 = vdwg.mxu0
        %3952 = vmatprep.subr.mxu0 0.0
        %v3953 = vand.u32 %v2882, 4294901760
        %3954 = vmatpush1.msra.mxu0 %v3953
        %3955 = vmatprep.subr.mxu0 0.0
        %v3956 = vand.u32 %v2884, 4294901760
        %3957 = vmatpush1.msra.mxu0 %v3956
        %3958 = vmatprep.subr.mxu0 0.0
        %v3959 = vand.u32 %v2886, 4294901760
        %3960 = vmatpush1.msra.mxu0 %v3959
        %3961 = vmatprep.subr.mxu0 0.0
        %v3962 = vand.u32 %v2888, 4294901760
        %3963 = vmatpush1.msra.mxu0 %v3962
        %3964 = vmatprep.subr.mxu0 0.0
        %v3965 = vand.u32 %v2890, 4294901760
        %3966 = vmatpush1.msra.mxu0 %v3965
        %3967 = vmatprep.subr.mxu0 0.0
        %v3968 = vand.u32 %v2892, 4294901760
        %3969 = vmatpush1.msra.mxu0 %v3968
        %3970 = vmatprep.subr.mxu0 0.0
        %v3971 = vand.u32 %v2894, 4294901760
        %3972 = vmatpush1.msra.mxu0 %v3971
        %3973 = vmatprep.subr.mxu0 0.0
        %v3974 = vand.u32 %v2896, 4294901760
        %3975 = vmatpush1.msra.mxu0 %v3974
        %3976 = vmatprep.subr.mxu0 0.0
        %v3977 = vand.u32 %v2898, 4294901760
        %3978 = vmatpush1.msra.mxu0 %v3977
        %3979 = vmatprep.subr.mxu0 0.0
        %v3980 = vand.u32 %v2900, 4294901760
        %3981 = vmatpush1.msra.mxu0 %v3980
        %3982 = vmatprep.subr.mxu0 0.0
        %v3983 = vand.u32 %v2902, 4294901760
        %3984 = vmatpush1.msra.mxu0 %v3983
        %3985 = vmatprep.subr.mxu0 0.0
        %v3986 = vand.u32 %v2904, 4294901760
        %3987 = vmatpush1.msra.mxu0 %v3986
        %3988 = vmatprep.subr.mxu0 0.0
        %v3989 = vand.u32 %v2906, 4294901760
        %3990 = vmatpush1.msra.mxu0 %v3989
        %3991 = vmatprep.subr.mxu0 0.0
        %v3992 = vand.u32 %v2908, 4294901760
        %3993 = vmatpush1.msra.mxu0 %v3992
        %3994 = vmatprep.subr.mxu0 0.0
        %v3995 = vand.u32 %v2910, 4294901760
        %3996 = vmatpush1.msra.mxu0 %v3995
        %3997 = vmatprep.subr.mxu0 0.0
        %v3998 = vand.u32 %v2912, 4294901760
        %3999 = vmatpush1.msra.mxu0 %v3998
        %4000 = vmatprep.subr.mxu0 0.0
        %4001 = vmatpush1.msra.mxu0 0.0
        %4002 = vmatprep.subr.mxu0 0.0
        %4003 = vmatpush1.msra.mxu0 0.0
        %4004 = vmatprep.subr.mxu0 0.0
        %4005 = vmatpush1.msra.mxu0 0.0
        %4006 = vmatprep.subr.mxu0 0.0
        %4007 = vmatpush1.msra.mxu0 0.0
        %4008 = vmatprep.subr.mxu0 0.0
        %4009 = vmatpush1.msra.mxu0 0.0
        %4010 = vmatprep.subr.mxu0 0.0
        %4011 = vmatpush1.msra.mxu0 0.0
        %4012 = vmatprep.subr.mxu0 0.0
        %4013 = vmatpush1.msra.mxu0 0.0
        %4014 = vmatprep.subr.mxu0 0.0
        %4015 = vmatpush1.msra.mxu0 0.0
        %4016 = vmatprep.subr.mxu0 0.0
        %4017 = vmatpush1.msra.mxu0 0.0
        %4018 = vmatprep.subr.mxu0 0.0
        %4019 = vmatpush1.msra.mxu0 0.0
        %4020 = vmatprep.subr.mxu0 0.0
        %4021 = vmatpush1.msra.mxu0 0.0
        %4022 = vmatprep.subr.mxu0 0.0
        %4023 = vmatpush1.msra.mxu0 0.0
        %4024 = vmatprep.subr.mxu0 0.0
        %4025 = vmatpush1.msra.mxu0 0.0
        %4026 = vmatprep.subr.mxu0 0.0
        %4027 = vmatpush1.msra.mxu0 0.0
        %4028 = vmatprep.subr.mxu0 0.0
        %4029 = vmatpush1.msra.mxu0 0.0
        %4030 = vmatprep.subr.mxu0 0.0
        %4031 = vmatpush1.msra.mxu0 0.0
        %4032 = vmatprep.mubr.f32.mxu0 0.0
        %v4033 = vand.u32 %v326, 4294901760
        %v4034 = vsub.f32 %v326, %v4033
        %v4035 = vand.u32 %v4034, 4294901760
        %4036 = vmatmul.mubr.f32.gmra.mrb[0].mxu0 %v4035
        %v4037 = vpop.f32.mrb[0].mxu0
        %v4038 = vadd.f32 %v3949, %v4037
        %v4039 = vpop.f32.mrb[0].mxu0
        %4040 = vdwg.mxu0
        %4041 = vmatprep.subr.mxu0 0.0
        %v4042 = vand.u32 %v2882, 4294901760
        %v4043 = vsub.f32 %v2882, %v4042
        %v4044 = vand.u32 %v4043, 4294901760
        %4045 = vmatpush1.msra.mxu0 %v4044
        %4046 = vmatprep.subr.mxu0 0.0
        %v4047 = vand.u32 %v2884, 4294901760
        %v4048 = vsub.f32 %v2884, %v4047
        %v4049 = vand.u32 %v4048, 4294901760
        %4050 = vmatpush1.msra.mxu0 %v4049
        %4051 = vmatprep.subr.mxu0 0.0
        %v4052 = vand.u32 %v2886, 4294901760
        %v4053 = vsub.f32 %v2886, %v4052
        %v4054 = vand.u32 %v4053, 4294901760
        %4055 = vmatpush1.msra.mxu0 %v4054
        %4056 = vmatprep.subr.mxu0 0.0
        %v4057 = vand.u32 %v2888, 4294901760
        %v4058 = vsub.f32 %v2888, %v4057
        %v4059 = vand.u32 %v4058, 4294901760
        %4060 = vmatpush1.msra.mxu0 %v4059
        %4061 = vmatprep.subr.mxu0 0.0
        %v4062 = vand.u32 %v2890, 4294901760
        %v4063 = vsub.f32 %v2890, %v4062
        %v4064 = vand.u32 %v4063, 4294901760
        %4065 = vmatpush1.msra.mxu0 %v4064
        %4066 = vmatprep.subr.mxu0 0.0
        %v4067 = vand.u32 %v2892, 4294901760
        %v4068 = vsub.f32 %v2892, %v4067
        %v4069 = vand.u32 %v4068, 4294901760
        %4070 = vmatpush1.msra.mxu0 %v4069
        %4071 = vmatprep.subr.mxu0 0.0
        %v4072 = vand.u32 %v2894, 4294901760
        %v4073 = vsub.f32 %v2894, %v4072
        %v4074 = vand.u32 %v4073, 4294901760
        %4075 = vmatpush1.msra.mxu0 %v4074
        %4076 = vmatprep.subr.mxu0 0.0
        %v4077 = vand.u32 %v2896, 4294901760
        %v4078 = vsub.f32 %v2896, %v4077
        %v4079 = vand.u32 %v4078, 4294901760
        %4080 = vmatpush1.msra.mxu0 %v4079
        %4081 = vmatprep.subr.mxu0 0.0
        %v4082 = vand.u32 %v2898, 4294901760
        %v4083 = vsub.f32 %v2898, %v4082
        %v4084 = vand.u32 %v4083, 4294901760
        %4085 = vmatpush1.msra.mxu0 %v4084
        %4086 = vmatprep.subr.mxu0 0.0
        %v4087 = vand.u32 %v2900, 4294901760
        %v4088 = vsub.f32 %v2900, %v4087
        %v4089 = vand.u32 %v4088, 4294901760
        %4090 = vmatpush1.msra.mxu0 %v4089
        %4091 = vmatprep.subr.mxu0 0.0
        %v4092 = vand.u32 %v2902, 4294901760
        %v4093 = vsub.f32 %v2902, %v4092
        %v4094 = vand.u32 %v4093, 4294901760
        %4095 = vmatpush1.msra.mxu0 %v4094
        %4096 = vmatprep.subr.mxu0 0.0
        %v4097 = vand.u32 %v2904, 4294901760
        %v4098 = vsub.f32 %v2904, %v4097
        %v4099 = vand.u32 %v4098, 4294901760
        %4100 = vmatpush1.msra.mxu0 %v4099
        %4101 = vmatprep.subr.mxu0 0.0
        %v4102 = vand.u32 %v2906, 4294901760
        %v4103 = vsub.f32 %v2906, %v4102
        %v4104 = vand.u32 %v4103, 4294901760
        %4105 = vmatpush1.msra.mxu0 %v4104
        %4106 = vmatprep.subr.mxu0 0.0
        %v4107 = vand.u32 %v2908, 4294901760
        %v4108 = vsub.f32 %v2908, %v4107
        %v4109 = vand.u32 %v4108, 4294901760
        %4110 = vmatpush1.msra.mxu0 %v4109
        %4111 = vmatprep.subr.mxu0 0.0
        %v4112 = vand.u32 %v2910, 4294901760
        %v4113 = vsub.f32 %v2910, %v4112
        %v4114 = vand.u32 %v4113, 4294901760
        %4115 = vmatpush1.msra.mxu0 %v4114
        %4116 = vmatprep.subr.mxu0 0.0
        %v4117 = vand.u32 %v2912, 4294901760
        %v4118 = vsub.f32 %v2912, %v4117
        %v4119 = vand.u32 %v4118, 4294901760
        %4120 = vmatpush1.msra.mxu0 %v4119
        %4121 = vmatprep.subr.mxu0 0.0
        %4122 = vmatpush1.msra.mxu0 0.0
        %4123 = vmatprep.subr.mxu0 0.0
        %4124 = vmatpush1.msra.mxu0 0.0
        %4125 = vmatprep.subr.mxu0 0.0
        %4126 = vmatpush1.msra.mxu0 0.0
        %4127 = vmatprep.subr.mxu0 0.0
        %4128 = vmatpush1.msra.mxu0 0.0
        %4129 = vmatprep.subr.mxu0 0.0
        %4130 = vmatpush1.msra.mxu0 0.0
        %4131 = vmatprep.subr.mxu0 0.0
        %4132 = vmatpush1.msra.mxu0 0.0
        %4133 = vmatprep.subr.mxu0 0.0
        %4134 = vmatpush1.msra.mxu0 0.0
        %4135 = vmatprep.subr.mxu0 0.0
        %4136 = vmatpush1.msra.mxu0 0.0
        %4137 = vmatprep.subr.mxu0 0.0
        %4138 = vmatpush1.msra.mxu0 0.0
        %4139 = vmatprep.subr.mxu0 0.0
        %4140 = vmatpush1.msra.mxu0 0.0
        %4141 = vmatprep.subr.mxu0 0.0
        %4142 = vmatpush1.msra.mxu0 0.0
        %4143 = vmatprep.subr.mxu0 0.0
        %4144 = vmatpush1.msra.mxu0 0.0
        %4145 = vmatprep.subr.mxu0 0.0
        %4146 = vmatpush1.msra.mxu0 0.0
        %4147 = vmatprep.subr.mxu0 0.0
        %4148 = vmatpush1.msra.mxu0 0.0
        %4149 = vmatprep.subr.mxu0 0.0
        %4150 = vmatpush1.msra.mxu0 0.0
        %4151 = vmatprep.subr.mxu0 0.0
        %4152 = vmatpush1.msra.mxu0 0.0
        %4153 = vmatprep.mubr.f32.mxu0 0.0
        %v4154 = vand.u32 %v326, 4294901760
        %4155 = vmatmul.mubr.f32.gmra.mrb[0].mxu0 %v4154
        %v4156 = vpop.f32.mrb[0].mxu0
        %v4157 = vadd.f32 %v4038, %v4156
        %v4158 = vpop.f32.mrb[0].mxu0
        %4159 = vdwg.mxu0
        %4160 = vmatprep.subr.mxu0 0.0
        %v4161 = vand.u32 %v2882, 4294901760
        %4162 = vmatpush1.msra.mxu0 %v4161
        %4163 = vmatprep.subr.mxu0 0.0
        %v4164 = vand.u32 %v2884, 4294901760
        %4165 = vmatpush1.msra.mxu0 %v4164
        %4166 = vmatprep.subr.mxu0 0.0
        %v4167 = vand.u32 %v2886, 4294901760
        %4168 = vmatpush1.msra.mxu0 %v4167
        %4169 = vmatprep.subr.mxu0 0.0
        %v4170 = vand.u32 %v2888, 4294901760
        %4171 = vmatpush1.msra.mxu0 %v4170
        %4172 = vmatprep.subr.mxu0 0.0
        %v4173 = vand.u32 %v2890, 4294901760
        %4174 = vmatpush1.msra.mxu0 %v4173
        %4175 = vmatprep.subr.mxu0 0.0
        %v4176 = vand.u32 %v2892, 4294901760
        %4177 = vmatpush1.msra.mxu0 %v4176
        %4178 = vmatprep.subr.mxu0 0.0
        %v4179 = vand.u32 %v2894, 4294901760
        %4180 = vmatpush1.msra.mxu0 %v4179
        %4181 = vmatprep.subr.mxu0 0.0
        %v4182 = vand.u32 %v2896, 4294901760
        %4183 = vmatpush1.msra.mxu0 %v4182
        %4184 = vmatprep.subr.mxu0 0.0
        %v4185 = vand.u32 %v2898, 4294901760
        %4186 = vmatpush1.msra.mxu0 %v4185
        %4187 = vmatprep.subr.mxu0 0.0
        %v4188 = vand.u32 %v2900, 4294901760
        %4189 = vmatpush1.msra.mxu0 %v4188
        %4190 = vmatprep.subr.mxu0 0.0
        %v4191 = vand.u32 %v2902, 4294901760
        %4192 = vmatpush1.msra.mxu0 %v4191
        %4193 = vmatprep.subr.mxu0 0.0
        %v4194 = vand.u32 %v2904, 4294901760
        %4195 = vmatpush1.msra.mxu0 %v4194
        %4196 = vmatprep.subr.mxu0 0.0
        %v4197 = vand.u32 %v2906, 4294901760
        %4198 = vmatpush1.msra.mxu0 %v4197
        %4199 = vmatprep.subr.mxu0 0.0
        %v4200 = vand.u32 %v2908, 4294901760
        %4201 = vmatpush1.msra.mxu0 %v4200
        %4202 = vmatprep.subr.mxu0 0.0
        %v4203 = vand.u32 %v2910, 4294901760
        %4204 = vmatpush1.msra.mxu0 %v4203
        %4205 = vmatprep.subr.mxu0 0.0
        %v4206 = vand.u32 %v2912, 4294901760
        %4207 = vmatpush1.msra.mxu0 %v4206
        %4208 = vmatprep.subr.mxu0 0.0
        %4209 = vmatpush1.msra.mxu0 0.0
        %4210 = vmatprep.subr.mxu0 0.0
        %4211 = vmatpush1.msra.mxu0 0.0
        %4212 = vmatprep.subr.mxu0 0.0
        %4213 = vmatpush1.msra.mxu0 0.0
        %4214 = vmatprep.subr.mxu0 0.0
        %4215 = vmatpush1.msra.mxu0 0.0
        %4216 = vmatprep.subr.mxu0 0.0
        %4217 = vmatpush1.msra.mxu0 0.0
        %4218 = vmatprep.subr.mxu0 0.0
        %4219 = vmatpush1.msra.mxu0 0.0
        %4220 = vmatprep.subr.mxu0 0.0
        %4221 = vmatpush1.msra.mxu0 0.0
        %4222 = vmatprep.subr.mxu0 0.0
        %4223 = vmatpush1.msra.mxu0 0.0
        %4224 = vmatprep.subr.mxu0 0.0
        %4225 = vmatpush1.msra.mxu0 0.0
        %4226 = vmatprep.subr.mxu0 0.0
        %4227 = vmatpush1.msra.mxu0 0.0
        %4228 = vmatprep.subr.mxu0 0.0
        %4229 = vmatpush1.msra.mxu0 0.0
        %4230 = vmatprep.subr.mxu0 0.0
        %4231 = vmatpush1.msra.mxu0 0.0
        %4232 = vmatprep.subr.mxu0 0.0
        %4233 = vmatpush1.msra.mxu0 0.0
        %4234 = vmatprep.subr.mxu0 0.0
        %4235 = vmatpush1.msra.mxu0 0.0
        %4236 = vmatprep.subr.mxu0 0.0
        %4237 = vmatpush1.msra.mxu0 0.0
        %4238 = vmatprep.subr.mxu0 0.0
        %4239 = vmatpush1.msra.mxu0 0.0
        %4240 = vmatprep.mubr.f32.mxu0 0.0
        %v4241 = vand.u32 %v326, 4294901760
        %4242 = vmatmul.mubr.f32.gmra.mrb[0].mxu0 %v4241
        %v4243 = vpop.f32.mrb[0].mxu0
        %v4244 = vadd.f32 %v4157, %v4243
        %v4245 = vpop.f32.mrb[0].mxu0
        %4246 = vdwg.mxu0
        %v4247 = vld [vmem:[#allocation5] sm:$0xff]
        %v4248 = vld [vmem:[#allocation5 + $0x8] sm:$0xff]
        %v4251 = vlaneseq
        %v4252 = vshrl.u32 %v4251, 7
        %v4253 = vsub.s32 0, %v4252
        %v4254 = vrot.slane %v2802, %v4253
        %v4255 = vlaneseq
        %v4256 = vshrl.u32 %v4255, 7
        %v4257 = vsub.s32 0, %v4256
        %v4258 = vrot.slane %v2804, %v4257
        %v4261 = vmul.f32 %v4254, %v4247
        %v4262 = vmul.f32 %v4258, %v4248
        %v4263 = vadd.f32 %v4261, %v3603
        %v4264 = vadd.f32 %v4262, %v4244
        %4265 = vst [vmem:[#allocation5] sm:$0xff] %v4263
        %4266 = vst [vmem:[#allocation5 + $0x8] sm:$0xff] %v4264
        // Predicated region
        $region49: #{tpu_custom_call.1} parent=31 // pred_check
          %p4267 = pneg %p305
        $region50: #{tpu_custom_call.1} parent=31 // pred_check_branch
          %4269 = sbr.rel (%p4267) target = $region52
        $region51: #{tpu_custom_call.1} parent=31 // pred_region
          %v4270 = vld [vmem:[#allocation5] sm:$0xff]
          %v4271 = vld [vmem:[#allocation5 + $0x8] sm:$0xff]
          %v4272 = vld [vmem:[#allocation4] sm:$0x1]
          %v4273 = vld [vmem:[#allocation4 + $0x1] sm:$0x1]
          %v4276 = vlaneseq
          %v4277 = vshrl.u32 %v4276, 7
          %v4278 = vsub.s32 0, %v4277
          %v4279 = vrot.slane %v4272, %v4278
          %v4280 = vlaneseq
          %v4281 = vshrl.u32 %v4280, 7
          %v4282 = vsub.s32 0, %v4281
          %v4283 = vrot.slane %v4273, %v4282
          %v4286 = vrcp.pop %v4279
          %v4287 = vmul.f32 %v4270, %v4286
          %v4288 = vrcp.pop %v4283
          %v4289 = vmul.f32 %v4271, %v4288
          %4290 = vst [vmem:[%s300] sm:$0xff] %v4287
          %4291 = vst [vmem:[%s300 + $0x8] sm:$0xff] %v4289
        $region52: #{tpu_custom_call.1} parent=31 // pred_fallthru
          _
        %s4292 = sand.u32 %s136, 1
        %s4293 = scalar_lea.sflag [#allocation8], %s4292
        %s4294 = sand.u32 %s136, 1
        %s4295 = smul.addr %s4294, 16
        %s4296 = scalar_lea.vmem [#allocation12], %s4295
        // Predicated region
        $region53: #{tpu_custom_call.1} parent=31 // pred_check
          %p4297 = pneg %p146
        $region54: #{tpu_custom_call.1} parent=31 // pred_check_branch
          %4299 = sbr.rel (%p4297) target = $region56
        $region55: #{tpu_custom_call.1} parent=31 // pred_region
          %s4300 = smul.u32 2, %s28
          %s4302 = ssub.s32 256, 256
          %4303 = vsyncadd %s4293, %s4302
          %s4304 = sadd.s32 %s29, %s4300
          %s4305 = smul.addr %s4304, 128
          %s4306 = scalar_lea.hbm %s3, %s4305
          %s4307 = sshll.u32 %s4296, 4
          %s4308 = int_to_ptr.vmem [resolvable:$true] %s4307
          %4313 = dma.vmem_to_hbm [thread:$0]  %s4308, 256, %s4306, %s4293, 128, 128, 8
        $region56: #{tpu_custom_call.1} parent=31 // pred_fallthru
          _
      $region32: #{tpu_custom_call.1} parent=5 // pred_fallthru
        _
      %p4314 = scmp.le.s32.totalorder 2, %s18
      // Predicated region
      $region57: #{tpu_custom_call.1} parent=5 // pred_check
        %p4315 = pneg %p4314
      $region58: #{tpu_custom_call.1} parent=5 // pred_check_branch
        %4317 = sbr.rel (%p4315) target = $region60
      $region59: #{tpu_custom_call.1} parent=5 // pred_region
        %s4318 = ssub.s32 %s18, 2
        // Predicated region
        $region61: #{tpu_custom_call.1} parent=59 // pred_check
          %p4319 = pneg %p152
        $region62: #{tpu_custom_call.1} parent=59 // pred_check_branch
          %4321 = sbr.rel (%p4319) target = $region64
        $region63: #{tpu_custom_call.1} parent=59 // pred_region
          %s4322 = sand.u32 %s137, 1
          %s4323 = scalar_lea.sflag [#allocation8], %s4322
          %s4324 = sand.u32 %s137, 1
          %s4325 = smul.addr %s4324, 16
          %s4326 = scalar_lea.vmem [#allocation12], %s4325
          %4327 = dma.done %s4323, 256
        $region64: #{tpu_custom_call.1} parent=59 // pred_fallthru
          _
      $region60: #{tpu_custom_call.1} parent=5 // pred_fallthru
        _
    $region6: #{tpu_custom_call.1} parent=1 // loop_footer
      %s22 = sadd.s32 1, %s18
    $region7: #{tpu_custom_call.1} parent=1 // loop_footer_branch
      %17 = sbr.rel target = $region3
    $region8: #{tpu_custom_call.1} parent=1 // loop_exit
      _
    %4328 = vsyncpa [#allocation7], 1
    %s4329 = scalar_lea.sflag [#allocation7], 1
    %4330 = vsyncpa %s4329, 1
    %4331 = vsyncpa [#allocation10], 1
    %s4332 = scalar_lea.sflag [#allocation10], 1
    %4333 = vsyncpa %s4332, 1
    %4334 = vsyncpa [#allocation8], 1
    %s4335 = scalar_lea.sflag [#allocation8], 1
    %4336 = vsyncpa %s4335, 1

</llo_original>
